<compile_context>
chip_gen: v5e
topology: v5e:2x2
jax: 0.10.0
libtpu: 0.0.40
codegen_flags: <defaults>
</compile_context>

<pallas_src>
import math
import jax
import jax.numpy as jnp
from jax.experimental import pallas as pl
from jax.experimental.pallas import tpu as pltpu

# ----- scaled-down config (real bert-base-chinese: H=768, NH=12, L=12, V=21128) -----
B = 2              # batch
S = 16             # sequence length (>=16 so position 15 exists)
T = B * S          # folded batch*seq rows
H = 128            # hidden size
NH = 4             # attention heads
DH = H // NH       # head dim
F = 4 * H          # FFN intermediate
L = 2              # encoder layers
V = 1024           # vocab size
MAX_POS = 64
TYPE_VOCAB = 2
LN_EPS = 1e-12
WDTYPE = jnp.bfloat16    # weight / matmul-input dtype
ADTYPE = jnp.float32     # activation / statistics dtype


# ----------------------------- in-kernel helpers ------------------------------
def _layernorm(x, gamma, beta):
    # Fused-stats LN: E[x] and E[x*x] are independent reductions (no serialized
    # broadcast-subtract between them); var = E[x^2] - mu^2.
    mu = jnp.mean(x, axis=-1, keepdims=True)
    ex2 = jnp.mean(x * x, axis=-1, keepdims=True)
    var = jnp.maximum(ex2 - mu * mu, 0.0)
    return (x - mu) * jax.lax.rsqrt(var + LN_EPS) * gamma + beta


def _gelu(x):
    # TODO(synk): BERT uses erf-GELU; tanh approximation used here (EUP-friendly).
    c = math.sqrt(2.0 / math.pi)
    return 0.5 * x * (1.0 + jnp.tanh(c * (x + 0.044715 * x * x * x)))


# --------------------------- fused encoder + MLM head --------------------------
def fused_bert_kernel(emb_ref, mask_ref, eg_ref, eb_ref,
                      wqkv_ref, bqkv_ref, wo_ref, bo_ref,
                      ln1g_ref, ln1b_ref,
                      w1_ref, b1_ref, w2_ref, b2_ref,
                      ln2g_ref, ln2b_ref,
                      decw_ref, decb_ref,
                      logits_ref,
                      x_ref):
    l = pl.program_id(0)

    # ---- layer-0 prologue: embedding LayerNorm into the resident activation ----
    @pl.when(l == 0)
    def _():
        x_ref[...] = _layernorm(emb_ref[...], eg_ref[...], eb_ref[...])

    x = x_ref[...]                                  # (T, H) f32, resident
    x_bf = x.astype(WDTYPE)

    # ---- fused QKV projection: one (T,H) @ (H,3H) MXU pass ----
    qkv = jnp.dot(x_bf, wqkv_ref[0],
                  preferred_element_type=jnp.float32) + bqkv_ref[0]     # (T, 3H) f32

    # ---- single head-leading relayout: (T, 3*NH, DH) -> (3*NH, T, DH) ----
    qkv_h = qkv.reshape(T, 3 * NH, DH).swapaxes(0, 1)
    scale = 1.0 / math.sqrt(DH)
    q = (qkv_h[:NH] * scale).astype(WDTYPE)          # (NH, T, DH)
    k = qkv_h[NH:2 * NH].astype(WDTYPE)              # (NH, T, DH)
    v = qkv_h[2 * NH:].astype(WDTYPE)                # (NH, T, DH)

    # ---- batched attention: one score einsum + ONE softmax over all heads ----
    sc = jnp.einsum('ntd,nsd->nts', q, k,
                    preferred_element_type=jnp.float32)                 # (NH, T, T)
    sc = sc + mask_ref[...][None, :, :]              # additive mask, bcast over heads
    sc = sc - jnp.max(sc, axis=-1, keepdims=True)
    p = jnp.exp(sc)
    p = p * pl.reciprocal(jnp.sum(p, axis=-1, keepdims=True), approx=True)
    ctx = jnp.einsum('nts,nsd->ntd', p.astype(WDTYPE), v,
                     preferred_element_type=jnp.float32)                # (NH, T, DH)

    # ---- per-head context fused with W_o (no ctx slab, no masked narrow stores) ----
    wo = wo_ref[0]                                                      # (H, H)
    attn = jnp.dot(ctx[0].astype(WDTYPE), wo[:DH, :],
                   preferred_element_type=jnp.float32)
    for h in range(1, NH):
        attn = attn + jnp.dot(ctx[h].astype(WDTYPE),
                              wo[h * DH:(h + 1) * DH, :],
                              preferred_element_type=jnp.float32)
    attn = attn + bo_ref[0]

    h1 = _layernorm(x + attn, ln1g_ref[0], ln1b_ref[0])

    # ---- FFN ----
    ff = jnp.dot(h1.astype(WDTYPE), w1_ref[0],
                 preferred_element_type=jnp.float32) + b1_ref[0]
    ff = _gelu(ff)
    ff = jnp.dot(ff.astype(WDTYPE), w2_ref[0],
                 preferred_element_type=jnp.float32) + b2_ref[0]
    x_new = _layernorm(h1 + ff, ln2g_ref[0], ln2b_ref[0])
    x_ref[...] = x_new

    # ---- last-layer epilogue: masked-LM head at position 15 (fused decoder) ----
    @pl.when(l == L - 1)
    def _():
        # single strided sublane read: rows 15, 15+S, ... (position 15 per batch item)
        h15 = x_ref[pl.ds(15, B, stride=S), :]                          # (B, H)
        logits_ref[...] = (jnp.dot(h15.astype(WDTYPE), decw_ref[...],
                                   preferred_element_type=jnp.float32)
                           + decb_ref[...])


# ----------------------------- wrapper / glue ----------------------------------
def _const_spec(shape):
    """Resident input: constant block index -> DMA'd once, stays in VMEM."""
    return pl.BlockSpec(shape, lambda l, n=len(shape): (0,) * n)


def _layer_spec(shape):
    """Layer-stacked weight: streamed (double-buffered) along the layer grid axis."""
    nd = len(shape)
    return pl.BlockSpec((1,) + tuple(shape[1:]),
                        lambda l, n=nd: (l,) + (0,) * (n - 1))


def model_forward(params, input_ids, attention_mask, token_type_ids):
    # --- embeddings (table gathers; plain-JAX glue outside the kernel) ---
    emb = (params["tok_emb"][input_ids]
           + params["pos_emb"][:S][None, :, :]
           + params["type_emb"][token_type_ids]).astype(ADTYPE)
    emb = emb.reshape(T, H)

    # --- additive attention mask, precomputed lane-dense in the wrapper ---
    # allowed[bq*S+sq, bk*S+sk] = (bq == bk) * attention_mask[bk, sk]
    key_ok = attention_mask.astype(ADTYPE)                        # (B, S)
    eye_b = jnp.eye(B, dtype=ADTYPE)
    allowed = eye_b[:, None, :, None] * key_ok[None, None, :, :]  # (B,1,B,S)
    allowed = jnp.broadcast_to(allowed, (B, S, B, S)).reshape(T, T)
    mask_add = (1.0 - allowed) * (-1e9)

    logits = pl.pallas_call(
        fused_bert_kernel,
        out_shape=jax.ShapeDtypeStruct((B, V), ADTYPE),
        grid=(L,),
        in_specs=[
            _const_spec((T, H)),                 # summed embeddings
            _const_spec((T, T)),                 # additive attention mask
            _const_spec((1, H)), _const_spec((1, H)),            # emb LN gamma/beta
            _layer_spec((L, H, 3 * H)), _layer_spec((L, 1, 3 * H)),  # W_qkv, b_qkv
            _layer_spec((L, H, H)),     _layer_spec((L, 1, H)),      # W_o, b_o
            _layer_spec((L, 1, H)),     _layer_spec((L, 1, H)),      # LN1 gamma/beta
            _layer_spec((L, H, F)),     _layer_spec((L, 1, F)),      # W_1, b_1
            _layer_spec((L, F, H)),     _layer_spec((L, 1, H)),      # W_2, b_2
            _layer_spec((L, 1, H)),     _layer_spec((L, 1, H)),      # LN2 gamma/beta
            _const_spec((H, V)),        _const_spec((1, V)),         # W_dec^T, bias
        ],
        out_specs=pl.BlockSpec((B, V), lambda l: (0, 0)),
        scratch_shapes=[pltpu.VMEM((T, H), ADTYPE)],  # resident activation
        compiler_params=pltpu.CompilerParams(
            dimension_semantics=("arbitrary",),       # activation carries across layers
            vmem_limit_bytes=32 * 1024 * 1024),       # toy size; re-derive at real dims
    )(emb, mask_add, params["emb_ln_g"], params["emb_ln_b"],
      params["wqkv"], params["bqkv"], params["wo"], params["bo"],
      params["ln1_g"], params["ln1_b"],
      params["w1"], params["b1"], params["w2"], params["b2"],
      params["ln2_g"], params["ln2_b"],
      params["dec_w_t"], params["dec_bias"])
    return logits


# ------------------------------ parameter init ---------------------------------
def init_params(key):
    def nrm(k, shape, scale=0.02, dtype=WDTYPE):
        return (scale * jax.random.normal(k, shape, dtype=jnp.float32)).astype(dtype)

    keys = iter(jax.random.split(key, 16))
    params = {
        "tok_emb": nrm(next(keys), (V, H), dtype=ADTYPE),
        "pos_emb": nrm(next(keys), (MAX_POS, H), dtype=ADTYPE),
        "type_emb": nrm(next(keys), (TYPE_VOCAB, H), dtype=ADTYPE),
        "emb_ln_g": jnp.ones((1, H), ADTYPE),
        "emb_ln_b": jnp.zeros((1, H), ADTYPE),
        # fused, layer-stacked weights (bf16 for MXU / half DMA bytes)
        "wqkv": nrm(next(keys), (L, H, 3 * H)),
        "bqkv": jnp.zeros((L, 1, 3 * H), ADTYPE),
        "wo": nrm(next(keys), (L, H, H)),
        "bo": jnp.zeros((L, 1, H), ADTYPE),
        "ln1_g": jnp.ones((L, 1, H), ADTYPE),
        "ln1_b": jnp.zeros((L, 1, H), ADTYPE),
        "w1": nrm(next(keys), (L, H, F)),
        "b1": jnp.zeros((L, 1, F), ADTYPE),
        "w2": nrm(next(keys), (L, F, H)),
        "b2": jnp.zeros((L, 1, H), ADTYPE),
        "ln2_g": jnp.ones((L, 1, H), ADTYPE),
        "ln2_b": jnp.zeros((L, 1, H), ADTYPE),
        # decoder: nn.Linear(H, V, bias=False).weight is (V, H); store transpose.
        "dec_w_t": nrm(next(keys), (V, H), dtype=ADTYPE).T.astype(WDTYPE),
        # self.bias = nn.Parameter(torch.zeros(vocab_size))
        "dec_bias": jnp.zeros((1, V), ADTYPE),
    }
    return params


# ----------------------------------- main ---------------------------------------
if __name__ == "__main__":
    key = jax.random.PRNGKey(0)
    k_params, k_ids = jax.random.split(key)
    params = init_params(k_params)

    input_ids = jax.random.randint(k_ids, (B, S), 0, V, dtype=jnp.int32)
    attention_mask = jnp.ones((B, S), jnp.int32).at[1, 12:14].set(0)
    token_type_ids = jnp.concatenate(
        [jnp.zeros((B, S // 2), jnp.int32), jnp.ones((B, S // 2), jnp.int32)], axis=1)

    logits = model_forward(params, input_ids, attention_mask, token_type_ids)
    jax.block_until_ready(logits)
    assert logits.shape == (B, V) and logits.dtype == ADTYPE
    assert bool(jnp.all(jnp.isfinite(logits)))
    print("KERNEL_OK")
</pallas_src>

<mosaic_0001>
module attributes {stable_mosaic.version = 11 : i64} {
  func.func @fused_bert_kernel(%arg0: i32, %arg1: memref<32x128xf32, #tpu.memory_space<vmem>>, %arg2: memref<32x32xf32, #tpu.memory_space<vmem>>, %arg3: memref<1x128xf32, #tpu.memory_space<vmem>>, %arg4: memref<1x128xf32, #tpu.memory_space<vmem>>, %arg5: memref<1x128x384xbf16, #tpu.memory_space<vmem>>, %arg6: memref<1x1x384xf32, #tpu.memory_space<vmem>>, %arg7: memref<1x128x128xbf16, #tpu.memory_space<vmem>>, %arg8: memref<1x1x128xf32, #tpu.memory_space<vmem>>, %arg9: memref<1x1x128xf32, #tpu.memory_space<vmem>>, %arg10: memref<1x1x128xf32, #tpu.memory_space<vmem>>, %arg11: memref<1x128x512xbf16, #tpu.memory_space<vmem>>, %arg12: memref<1x1x512xf32, #tpu.memory_space<vmem>>, %arg13: memref<1x512x128xbf16, #tpu.memory_space<vmem>>, %arg14: memref<1x1x128xf32, #tpu.memory_space<vmem>>, %arg15: memref<1x1x128xf32, #tpu.memory_space<vmem>>, %arg16: memref<1x1x128xf32, #tpu.memory_space<vmem>>, %arg17: memref<128x1024xbf16, #tpu.memory_space<vmem>>, %arg18: memref<1x1024xf32, #tpu.memory_space<vmem>>, %arg19: memref<2x1024xf32, #tpu.memory_space<vmem>>, %arg20: memref<32x128xf32, #tpu.memory_space<vmem>>) attributes {dimension_semantics = [#tpu.dimension_semantics<arbitrary>], iteration_bounds = array<i64: 2>, scalar_prefetch = 0 : i64, scratch_operands = 1 : i64, tpu.core_type = #tpu.core_type<tc>, window_params = [{pipeline_mode = #tpu.pipeline_mode<synchronous>, transform_indices = @transform_0, window_bounds = array<i64: 32, 128>}, {pipeline_mode = #tpu.pipeline_mode<synchronous>, transform_indices = @transform_1, window_bounds = array<i64: 32, 32>}, {pipeline_mode = #tpu.pipeline_mode<synchronous>, transform_indices = @transform_2, window_bounds = array<i64: 1, 128>}, {pipeline_mode = #tpu.pipeline_mode<synchronous>, transform_indices = @transform_3, window_bounds = array<i64: 1, 128>}, {transform_indices = @transform_4, window_bounds = array<i64: 1, 128, 384>}, {transform_indices = @transform_5, window_bounds = array<i64: 1, 1, 384>}, {transform_indices = @transform_6, window_bounds = array<i64: 1, 128, 128>}, {transform_indices = @transform_7, window_bounds = array<i64: 1, 1, 128>}, {transform_indices = @transform_8, window_bounds = array<i64: 1, 1, 128>}, {transform_indices = @transform_9, window_bounds = array<i64: 1, 1, 128>}, {transform_indices = @transform_10, window_bounds = array<i64: 1, 128, 512>}, {transform_indices = @transform_11, window_bounds = array<i64: 1, 1, 512>}, {transform_indices = @transform_12, window_bounds = array<i64: 1, 512, 128>}, {transform_indices = @transform_13, window_bounds = array<i64: 1, 1, 128>}, {transform_indices = @transform_14, window_bounds = array<i64: 1, 1, 128>}, {transform_indices = @transform_15, window_bounds = array<i64: 1, 1, 128>}, {pipeline_mode = #tpu.pipeline_mode<synchronous>, transform_indices = @transform_16, window_bounds = array<i64: 128, 1024>}, {pipeline_mode = #tpu.pipeline_mode<synchronous>, transform_indices = @transform_17, window_bounds = array<i64: 1, 1024>}, {pipeline_mode = #tpu.pipeline_mode<synchronous>, transform_indices = @transform_18, window_bounds = array<i64: 2, 1024>}]} {
    %c0_i32 = arith.constant 0 : i32
    %0 = arith.cmpi eq, %arg0, %c0_i32 : i32
    %1 = arith.extui %0 : i1 to i32
    %c0_i32_0 = arith.constant 0 : i32
    %2 = arith.cmpi ne, %1, %c0_i32_0 : i32
    scf.if %2 {
      %c0_70 = arith.constant 0 : index
      %c0_71 = arith.constant 0 : index
      %159 = vector.load %arg1[%c0_70, %c0_71] : memref<32x128xf32, #tpu.memory_space<vmem>>, vector<32x128xf32>
      %c0_72 = arith.constant 0 : index
      %c0_73 = arith.constant 0 : index
      %160 = vector.load %arg3[%c0_72, %c0_73] : memref<1x128xf32, #tpu.memory_space<vmem>>, vector<1x128xf32>
      %c0_74 = arith.constant 0 : index
      %c0_75 = arith.constant 0 : index
      %161 = vector.load %arg4[%c0_74, %c0_75] : memref<1x128xf32, #tpu.memory_space<vmem>>, vector<1x128xf32>
      %cst_76 = arith.constant dense<0.000000e+00> : vector<32xf32>
      %162 = vector.multi_reduction <add>, %159, %cst_76 [1] : vector<32x128xf32> to vector<32xf32>
      %163 = vector.shape_cast %162 : vector<32xf32> to vector<32x1xf32>
      %cst_77 = arith.constant 1.280000e+02 : f32
      %164 = vector.broadcast %cst_77 : f32 to vector<32x1xf32>
      %165 = arith.divf %163, %164 : vector<32x1xf32>
      %166 = arith.mulf %159, %159 : vector<32x128xf32>
      %cst_78 = arith.constant dense<0.000000e+00> : vector<32xf32>
      %167 = vector.multi_reduction <add>, %166, %cst_78 [1] : vector<32x128xf32> to vector<32xf32>
      %168 = vector.shape_cast %167 : vector<32xf32> to vector<32x1xf32>
      %cst_79 = arith.constant 1.280000e+02 : f32
      %169 = vector.broadcast %cst_79 : f32 to vector<32x1xf32>
      %170 = arith.divf %168, %169 : vector<32x1xf32>
      %171 = arith.mulf %165, %165 : vector<32x1xf32>
      %172 = arith.subf %170, %171 : vector<32x1xf32>
      %cst_80 = arith.constant 0.000000e+00 : f32
      %173 = vector.broadcast %cst_80 : f32 to vector<32x1xf32>
      %174 = arith.maximumf %172, %173 : vector<32x1xf32>
      %175 = vector.broadcast %165 : vector<32x1xf32> to vector<32x128xf32>
      %176 = arith.subf %159, %175 : vector<32x128xf32>
      %cst_81 = arith.constant 9.99999996E-13 : f32
      %177 = vector.broadcast %cst_81 : f32 to vector<32x1xf32>
      %178 = arith.addf %174, %177 : vector<32x1xf32>
      %179 = math.rsqrt %178 : vector<32x1xf32>
      %180 = vector.broadcast %179 : vector<32x1xf32> to vector<32x128xf32>
      %181 = arith.mulf %176, %180 : vector<32x128xf32>
      %182 = vector.broadcast %160 : vector<1x128xf32> to vector<32x128xf32>
      %183 = arith.mulf %181, %182 : vector<32x128xf32>
      %184 = vector.broadcast %161 : vector<1x128xf32> to vector<32x128xf32>
      %185 = arith.addf %183, %184 : vector<32x128xf32>
      %c0_82 = arith.constant 0 : index
      %c0_83 = arith.constant 0 : index
      %186 = vector.load %arg20[%c0_82, %c0_83] : memref<32x128xf32, #tpu.memory_space<vmem>>, vector<32x128xf32>
      tpu.vector_store %arg20[%c0_82, %c0_83], %185 {strides = array<i32>} : memref<32x128xf32, #tpu.memory_space<vmem>>, vector<32x128xf32>,
    } else {
    }
    %c0 = arith.constant 0 : index
    %c0_1 = arith.constant 0 : index
    %3 = vector.load %arg20[%c0, %c0_1] : memref<32x128xf32, #tpu.memory_space<vmem>>, vector<32x128xf32>
    %4 = arith.truncf %3 : vector<32x128xf32> to vector<32x128xbf16>
    %c0_2 = arith.constant 0 : index
    %c0_3 = arith.constant 0 : index
    %c0_4 = arith.constant 0 : index
    %5 = vector.load %arg5[%c0_2, %c0_3, %c0_4] : memref<1x128x384xbf16, #tpu.memory_space<vmem>>, vector<1x128x384xbf16>
    %6 = vector.shape_cast %5 : vector<1x128x384xbf16> to vector<128x384xbf16>
    %cst = arith.constant dense<0.000000e+00> : vector<32x384xf32>
    %7 = tpu.matmul %4, %6, %cst {dimension_numbers = #tpu.dot_dimension_numbers<[1], [0], [0], [1], [0, 0, 1, 1], [], []>} : vector<32x128xbf16>, vector<128x384xbf16>, vector<32x384xf32> -> vector<32x384xf32>
    %c0_5 = arith.constant 0 : index
    %c0_6 = arith.constant 0 : index
    %c0_7 = arith.constant 0 : index
    %8 = vector.load %arg6[%c0_5, %c0_6, %c0_7] : memref<1x1x384xf32, #tpu.memory_space<vmem>>, vector<1x1x384xf32>
    %9 = vector.shape_cast %8 : vector<1x1x384xf32> to vector<1x384xf32>
    %10 = vector.broadcast %9 : vector<1x384xf32> to vector<32x384xf32>
    %11 = arith.addf %7, %10 : vector<32x384xf32>
    %12 = vector.shape_cast %11 : vector<32x384xf32> to vector<32x12x32xf32>
    %13 = tpu.transpose %12, [1, 0, 2] : vector<32x12x32xf32> -> vector<12x32x32xf32>
    %14 = vector.extract_strided_slice %13 {offsets = [0, 0, 0], sizes = [4, 32, 32], strides = [1, 1, 1]} : vector<12x32x32xf32> to vector<4x32x32xf32>
    %cst_8 = arith.constant 0.176776692 : f32
    %15 = vector.broadcast %cst_8 : f32 to vector<4x32x32xf32>
    %16 = arith.mulf %14, %15 : vector<4x32x32xf32>
    %17 = arith.truncf %16 : vector<4x32x32xf32> to vector<4x32x32xbf16>
    %18 = vector.extract_strided_slice %13 {offsets = [4, 0, 0], sizes = [4, 32, 32], strides = [1, 1, 1]} : vector<12x32x32xf32> to vector<4x32x32xf32>
    %19 = arith.truncf %18 : vector<4x32x32xf32> to vector<4x32x32xbf16>
    %20 = vector.extract_strided_slice %13 {offsets = [8, 0, 0], sizes = [4, 32, 32], strides = [1, 1, 1]} : vector<12x32x32xf32> to vector<4x32x32xf32>
    %21 = arith.truncf %20 : vector<4x32x32xf32> to vector<4x32x32xbf16>
    "tpu.trace_start"() <{level = 10 : i32, message = "ntd,nsd->nts"}> : () -> ()
    %cst_9 = arith.constant dense<0.000000e+00> : vector<4x32x32xf32>
    %22 = tpu.matmul %17, %19, %cst_9 {dimension_numbers = #tpu.dot_dimension_numbers<[2], [2], [1], [1], [0, 0, 0, 1, 1, 1], [0], [0]>} : vector<4x32x32xbf16>, vector<4x32x32xbf16>, vector<4x32x32xf32> -> vector<4x32x32xf32>
    "tpu.trace_stop"() : () -> ()
    %c0_10 = arith.constant 0 : index
    %c0_11 = arith.constant 0 : index
    %23 = vector.load %arg2[%c0_10, %c0_11] : memref<32x32xf32, #tpu.memory_space<vmem>>, vector<32x32xf32>
    %24 = vector.shape_cast %23 : vector<32x32xf32> to vector<1x32x32xf32>
    %25 = vector.broadcast %24 : vector<1x32x32xf32> to vector<4x32x32xf32>
    %26 = arith.addf %22, %25 : vector<4x32x32xf32>
    %cst_12 = arith.constant dense<0xFF800000> : vector<4x32xf32>
    %27 = vector.multi_reduction <maximumf>, %26, %cst_12 [2] : vector<4x32x32xf32> to vector<4x32xf32>
    %28 = vector.shape_cast %27 : vector<4x32xf32> to vector<4x32x1xf32>
    %29 = vector.broadcast %28 : vector<4x32x1xf32> to vector<4x32x32xf32>
    %30 = arith.subf %26, %29 : vector<4x32x32xf32>
    %31 = math.exp %30 : vector<4x32x32xf32>
    %cst_13 = arith.constant dense<0.000000e+00> : vector<4x32xf32>
    %32 = vector.multi_reduction <add>, %31, %cst_13 [2] : vector<4x32x32xf32> to vector<4x32xf32>
    %33 = vector.shape_cast %32 : vector<4x32xf32> to vector<4x32x1xf32>
    %34 = tpu.reciprocal %33 {approx = true} : vector<4x32x1xf32> -> vector<4x32x1xf32>
    %35 = vector.broadcast %34 : vector<4x32x1xf32> to vector<4x32x32xf32>
    %36 = arith.mulf %31, %35 : vector<4x32x32xf32>
    %37 = arith.truncf %36 : vector<4x32x32xf32> to vector<4x32x32xbf16>
    "tpu.trace_start"() <{level = 10 : i32, message = "nts,nsd->ntd"}> : () -> ()
    %cst_14 = arith.constant dense<0.000000e+00> : vector<4x32x32xf32>
    %38 = tpu.matmul %37, %21, %cst_14 {dimension_numbers = #tpu.dot_dimension_numbers<[2], [1], [1], [2], [0, 0, 0, 1, 1, 2], [0], [0]>} : vector<4x32x32xbf16>, vector<4x32x32xbf16>, vector<4x32x32xf32> -> vector<4x32x32xf32>
    "tpu.trace_stop"() : () -> ()
    %c0_15 = arith.constant 0 : index
    %c0_16 = arith.constant 0 : index
    %c0_17 = arith.constant 0 : index
    %39 = vector.load %arg7[%c0_15, %c0_16, %c0_17] : memref<1x128x128xbf16, #tpu.memory_space<vmem>>, vector<1x128x128xbf16>
    %40 = vector.shape_cast %39 : vector<1x128x128xbf16> to vector<128x128xbf16>
    %41 = vector.extract_strided_slice %38 {offsets = [0, 0, 0], sizes = [1, 32, 32], strides = [1, 1, 1]} : vector<4x32x32xf32> to vector<1x32x32xf32>
    %42 = vector.shape_cast %41 : vector<1x32x32xf32> to vector<32x32xf32>
    %43 = arith.truncf %42 : vector<32x32xf32> to vector<32x32xbf16>
    %44 = vector.extract_strided_slice %40 {offsets = [0, 0], sizes = [32, 128], strides = [1, 1]} : vector<128x128xbf16> to vector<32x128xbf16>
    %cst_18 = arith.constant dense<0.000000e+00> : vector<32x128xf32>
    %45 = tpu.matmul %43, %44, %cst_18 {dimension_numbers = #tpu.dot_dimension_numbers<[1], [0], [0], [1], [0, 0, 1, 1], [], []>} : vector<32x32xbf16>, vector<32x128xbf16>, vector<32x128xf32> -> vector<32x128xf32>
    %46 = vector.extract_strided_slice %38 {offsets = [1, 0, 0], sizes = [1, 32, 32], strides = [1, 1, 1]} : vector<4x32x32xf32> to vector<1x32x32xf32>
    %47 = vector.shape_cast %46 : vector<1x32x32xf32> to vector<32x32xf32>
    %48 = arith.truncf %47 : vector<32x32xf32> to vector<32x32xbf16>
    %49 = vector.extract_strided_slice %40 {offsets = [32, 0], sizes = [32, 128], strides = [1, 1]} : vector<128x128xbf16> to vector<32x128xbf16>
    %cst_19 = arith.constant dense<0.000000e+00> : vector<32x128xf32>
    %50 = tpu.matmul %48, %49, %cst_19 {dimension_numbers = #tpu.dot_dimension_numbers<[1], [0], [0], [1], [0, 0, 1, 1], [], []>} : vector<32x32xbf16>, vector<32x128xbf16>, vector<32x128xf32> -> vector<32x128xf32>
    %51 = arith.addf %45, %50 : vector<32x128xf32>
    %52 = vector.extract_strided_slice %38 {offsets = [2, 0, 0], sizes = [1, 32, 32], strides = [1, 1, 1]} : vector<4x32x32xf32> to vector<1x32x32xf32>
    %53 = vector.shape_cast %52 : vector<1x32x32xf32> to vector<32x32xf32>
    %54 = arith.truncf %53 : vector<32x32xf32> to vector<32x32xbf16>
    %55 = vector.extract_strided_slice %40 {offsets = [64, 0], sizes = [32, 128], strides = [1, 1]} : vector<128x128xbf16> to vector<32x128xbf16>
    %cst_20 = arith.constant dense<0.000000e+00> : vector<32x128xf32>
    %56 = tpu.matmul %54, %55, %cst_20 {dimension_numbers = #tpu.dot_dimension_numbers<[1], [0], [0], [1], [0, 0, 1, 1], [], []>} : vector<32x32xbf16>, vector<32x128xbf16>, vector<32x128xf32> -> vector<32x128xf32>
    %57 = arith.addf %51, %56 : vector<32x128xf32>
    %58 = vector.extract_strided_slice %38 {offsets = [3, 0, 0], sizes = [1, 32, 32], strides = [1, 1, 1]} : vector<4x32x32xf32> to vector<1x32x32xf32>
    %59 = vector.shape_cast %58 : vector<1x32x32xf32> to vector<32x32xf32>
    %60 = arith.truncf %59 : vector<32x32xf32> to vector<32x32xbf16>
    %61 = vector.extract_strided_slice %40 {offsets = [96, 0], sizes = [32, 128], strides = [1, 1]} : vector<128x128xbf16> to vector<32x128xbf16>
    %cst_21 = arith.constant dense<0.000000e+00> : vector<32x128xf32>
    %62 = tpu.matmul %60, %61, %cst_21 {dimension_numbers = #tpu.dot_dimension_numbers<[1], [0], [0], [1], [0, 0, 1, 1], [], []>} : vector<32x32xbf16>, vector<32x128xbf16>, vector<32x128xf32> -> vector<32x128xf32>
    %63 = arith.addf %57, %62 : vector<32x128xf32>
    %c0_22 = arith.constant 0 : index
    %c0_23 = arith.constant 0 : index
    %c0_24 = arith.constant 0 : index
    %64 = vector.load %arg8[%c0_22, %c0_23, %c0_24] : memref<1x1x128xf32, #tpu.memory_space<vmem>>, vector<1x1x128xf32>
    %65 = vector.shape_cast %64 : vector<1x1x128xf32> to vector<1x128xf32>
    %66 = vector.broadcast %65 : vector<1x128xf32> to vector<32x128xf32>
    %67 = arith.addf %63, %66 : vector<32x128xf32>
    %68 = arith.addf %3, %67 : vector<32x128xf32>
    %c0_25 = arith.constant 0 : index
    %c0_26 = arith.constant 0 : index
    %c0_27 = arith.constant 0 : index
    %69 = vector.load %arg9[%c0_25, %c0_26, %c0_27] : memref<1x1x128xf32, #tpu.memory_space<vmem>>, vector<1x1x128xf32>
    %70 = vector.shape_cast %69 : vector<1x1x128xf32> to vector<1x128xf32>
    %c0_28 = arith.constant 0 : index
    %c0_29 = arith.constant 0 : index
    %c0_30 = arith.constant 0 : index
    %71 = vector.load %arg10[%c0_28, %c0_29, %c0_30] : memref<1x1x128xf32, #tpu.memory_space<vmem>>, vector<1x1x128xf32>
    %72 = vector.shape_cast %71 : vector<1x1x128xf32> to vector<1x128xf32>
    %cst_31 = arith.constant dense<0.000000e+00> : vector<32xf32>
    %73 = vector.multi_reduction <add>, %68, %cst_31 [1] : vector<32x128xf32> to vector<32xf32>
    %74 = vector.shape_cast %73 : vector<32xf32> to vector<32x1xf32>
    %cst_32 = arith.constant 1.280000e+02 : f32
    %75 = vector.broadcast %cst_32 : f32 to vector<32x1xf32>
    %76 = arith.divf %74, %75 : vector<32x1xf32>
    %77 = arith.mulf %68, %68 : vector<32x128xf32>
    %cst_33 = arith.constant dense<0.000000e+00> : vector<32xf32>
    %78 = vector.multi_reduction <add>, %77, %cst_33 [1] : vector<32x128xf32> to vector<32xf32>
    %79 = vector.shape_cast %78 : vector<32xf32> to vector<32x1xf32>
    %cst_34 = arith.constant 1.280000e+02 : f32
    %80 = vector.broadcast %cst_34 : f32 to vector<32x1xf32>
    %81 = arith.divf %79, %80 : vector<32x1xf32>
    %82 = arith.mulf %76, %76 : vector<32x1xf32>
    %83 = arith.subf %81, %82 : vector<32x1xf32>
    %cst_35 = arith.constant 0.000000e+00 : f32
    %84 = vector.broadcast %cst_35 : f32 to vector<32x1xf32>
    %85 = arith.maximumf %83, %84 : vector<32x1xf32>
    %86 = vector.broadcast %76 : vector<32x1xf32> to vector<32x128xf32>
    %87 = arith.subf %68, %86 : vector<32x128xf32>
    %cst_36 = arith.constant 9.99999996E-13 : f32
    %88 = vector.broadcast %cst_36 : f32 to vector<32x1xf32>
    %89 = arith.addf %85, %88 : vector<32x1xf32>
    %90 = math.rsqrt %89 : vector<32x1xf32>
    %91 = vector.broadcast %90 : vector<32x1xf32> to vector<32x128xf32>
    %92 = arith.mulf %87, %91 : vector<32x128xf32>
    %93 = vector.broadcast %70 : vector<1x128xf32> to vector<32x128xf32>
    %94 = arith.mulf %92, %93 : vector<32x128xf32>
    %95 = vector.broadcast %72 : vector<1x128xf32> to vector<32x128xf32>
    %96 = arith.addf %94, %95 : vector<32x128xf32>
    %97 = arith.truncf %96 : vector<32x128xf32> to vector<32x128xbf16>
    %c0_37 = arith.constant 0 : index
    %c0_38 = arith.constant 0 : index
    %c0_39 = arith.constant 0 : index
    %98 = vector.load %arg11[%c0_37, %c0_38, %c0_39] : memref<1x128x512xbf16, #tpu.memory_space<vmem>>, vector<1x128x512xbf16>
    %99 = vector.shape_cast %98 : vector<1x128x512xbf16> to vector<128x512xbf16>
    %cst_40 = arith.constant dense<0.000000e+00> : vector<32x512xf32>
    %100 = tpu.matmul %97, %99, %cst_40 {dimension_numbers = #tpu.dot_dimension_numbers<[1], [0], [0], [1], [0, 0, 1, 1], [], []>} : vector<32x128xbf16>, vector<128x512xbf16>, vector<32x512xf32> -> vector<32x512xf32>
    %c0_41 = arith.constant 0 : index
    %c0_42 = arith.constant 0 : index
    %c0_43 = arith.constant 0 : index
    %101 = vector.load %arg12[%c0_41, %c0_42, %c0_43] : memref<1x1x512xf32, #tpu.memory_space<vmem>>, vector<1x1x512xf32>
    %102 = vector.shape_cast %101 : vector<1x1x512xf32> to vector<1x512xf32>
    %103 = vector.broadcast %102 : vector<1x512xf32> to vector<32x512xf32>
    %104 = arith.addf %100, %103 : vector<32x512xf32>
    %cst_44 = arith.constant 5.000000e-01 : f32
    %105 = vector.broadcast %cst_44 : f32 to vector<32x512xf32>
    %106 = arith.mulf %105, %104 : vector<32x512xf32>
    %cst_45 = arith.constant 4.471500e-02 : f32
    %107 = vector.broadcast %cst_45 : f32 to vector<32x512xf32>
    %108 = arith.mulf %107, %104 : vector<32x512xf32>
    %109 = arith.mulf %108, %104 : vector<32x512xf32>
    %110 = arith.mulf %109, %104 : vector<32x512xf32>
    %111 = arith.addf %104, %110 : vector<32x512xf32>
    %cst_46 = arith.constant 0.797884583 : f32
    %112 = vector.broadcast %cst_46 : f32 to vector<32x512xf32>
    %113 = arith.mulf %112, %111 : vector<32x512xf32>
    %114 = math.tanh %113 : vector<32x512xf32>
    %cst_47 = arith.constant 1.000000e+00 : f32
    %115 = vector.broadcast %cst_47 : f32 to vector<32x512xf32>
    %116 = arith.addf %115, %114 : vector<32x512xf32>
    %117 = arith.mulf %106, %116 : vector<32x512xf32>
    %118 = arith.truncf %117 : vector<32x512xf32> to vector<32x512xbf16>
    %c0_48 = arith.constant 0 : index
    %c0_49 = arith.constant 0 : index
    %c0_50 = arith.constant 0 : index
    %119 = vector.load %arg13[%c0_48, %c0_49, %c0_50] : memref<1x512x128xbf16, #tpu.memory_space<vmem>>, vector<1x512x128xbf16>
    %120 = vector.shape_cast %119 : vector<1x512x128xbf16> to vector<512x128xbf16>
    %cst_51 = arith.constant dense<0.000000e+00> : vector<32x128xf32>
    %121 = tpu.matmul %118, %120, %cst_51 {dimension_numbers = #tpu.dot_dimension_numbers<[1], [0], [0], [1], [0, 0, 1, 1], [], []>} : vector<32x512xbf16>, vector<512x128xbf16>, vector<32x128xf32> -> vector<32x128xf32>
    %c0_52 = arith.constant 0 : index
    %c0_53 = arith.constant 0 : index
    %c0_54 = arith.constant 0 : index
    %122 = vector.load %arg14[%c0_52, %c0_53, %c0_54] : memref<1x1x128xf32, #tpu.memory_space<vmem>>, vector<1x1x128xf32>
    %123 = vector.shape_cast %122 : vector<1x1x128xf32> to vector<1x128xf32>
    %124 = vector.broadcast %123 : vector<1x128xf32> to vector<32x128xf32>
    %125 = arith.addf %121, %124 : vector<32x128xf32>
    %126 = arith.addf %96, %125 : vector<32x128xf32>
    %c0_55 = arith.constant 0 : index
    %c0_56 = arith.constant 0 : index
    %c0_57 = arith.constant 0 : index
    %127 = vector.load %arg15[%c0_55, %c0_56, %c0_57] : memref<1x1x128xf32, #tpu.memory_space<vmem>>, vector<1x1x128xf32>
    %128 = vector.shape_cast %127 : vector<1x1x128xf32> to vector<1x128xf32>
    %c0_58 = arith.constant 0 : index
    %c0_59 = arith.constant 0 : index
    %c0_60 = arith.constant 0 : index
    %129 = vector.load %arg16[%c0_58, %c0_59, %c0_60] : memref<1x1x128xf32, #tpu.memory_space<vmem>>, vector<1x1x128xf32>
    %130 = vector.shape_cast %129 : vector<1x1x128xf32> to vector<1x128xf32>
    %cst_61 = arith.constant dense<0.000000e+00> : vector<32xf32>
    %131 = vector.multi_reduction <add>, %126, %cst_61 [1] : vector<32x128xf32> to vector<32xf32>
    %132 = vector.shape_cast %131 : vector<32xf32> to vector<32x1xf32>
    %cst_62 = arith.constant 1.280000e+02 : f32
    %133 = vector.broadcast %cst_62 : f32 to vector<32x1xf32>
    %134 = arith.divf %132, %133 : vector<32x1xf32>
    %135 = arith.mulf %126, %126 : vector<32x128xf32>
    %cst_63 = arith.constant dense<0.000000e+00> : vector<32xf32>
    %136 = vector.multi_reduction <add>, %135, %cst_63 [1] : vector<32x128xf32> to vector<32xf32>
    %137 = vector.shape_cast %136 : vector<32xf32> to vector<32x1xf32>
    %cst_64 = arith.constant 1.280000e+02 : f32
    %138 = vector.broadcast %cst_64 : f32 to vector<32x1xf32>
    %139 = arith.divf %137, %138 : vector<32x1xf32>
    %140 = arith.mulf %134, %134 : vector<32x1xf32>
    %141 = arith.subf %139, %140 : vector<32x1xf32>
    %cst_65 = arith.constant 0.000000e+00 : f32
    %142 = vector.broadcast %cst_65 : f32 to vector<32x1xf32>
    %143 = arith.maximumf %141, %142 : vector<32x1xf32>
    %144 = vector.broadcast %134 : vector<32x1xf32> to vector<32x128xf32>
    %145 = arith.subf %126, %144 : vector<32x128xf32>
    %cst_66 = arith.constant 9.99999996E-13 : f32
    %146 = vector.broadcast %cst_66 : f32 to vector<32x1xf32>
    %147 = arith.addf %143, %146 : vector<32x1xf32>
    %148 = math.rsqrt %147 : vector<32x1xf32>
    %149 = vector.broadcast %148 : vector<32x1xf32> to vector<32x128xf32>
    %150 = arith.mulf %145, %149 : vector<32x128xf32>
    %151 = vector.broadcast %128 : vector<1x128xf32> to vector<32x128xf32>
    %152 = arith.mulf %150, %151 : vector<32x128xf32>
    %153 = vector.broadcast %130 : vector<1x128xf32> to vector<32x128xf32>
    %154 = arith.addf %152, %153 : vector<32x128xf32>
    %c0_67 = arith.constant 0 : index
    %c0_68 = arith.constant 0 : index
    %155 = vector.load %arg20[%c0_67, %c0_68] : memref<32x128xf32, #tpu.memory_space<vmem>>, vector<32x128xf32>
    tpu.vector_store %arg20[%c0_67, %c0_68], %154 {strides = array<i32>} : memref<32x128xf32, #tpu.memory_space<vmem>>, vector<32x128xf32>,
    %c1_i32 = arith.constant 1 : i32
    %156 = arith.cmpi eq, %arg0, %c1_i32 : i32
    %157 = arith.extui %156 : i1 to i32
    %c0_i32_69 = arith.constant 0 : i32
    %158 = arith.cmpi ne, %157, %c0_i32_69 : i32
    scf.if %158 {
      %c15 = arith.constant 15 : index
      %c0_70 = arith.constant 0 : index
      %159 = tpu.strided_load %arg20[%c15, %c0_70] {strides = array<i32: 16, 1>} : memref<32x128xf32, #tpu.memory_space<vmem>>, vector<2x128xf32>
      %160 = arith.truncf %159 : vector<2x128xf32> to vector<2x128xbf16>
      %c0_71 = arith.constant 0 : index
      %c0_72 = arith.constant 0 : index
      %161 = vector.load %arg17[%c0_71, %c0_72] : memref<128x1024xbf16, #tpu.memory_space<vmem>>, vector<128x1024xbf16>
      %cst_73 = arith.constant dense<0.000000e+00> : vector<2x1024xf32>
      %162 = tpu.matmul %160, %161, %cst_73 {dimension_numbers = #tpu.dot_dimension_numbers<[1], [0], [0], [1], [0, 0, 1, 1], [], []>} : vector<2x128xbf16>, vector<128x1024xbf16>, vector<2x1024xf32> -> vector<2x1024xf32>
      %c0_74 = arith.constant 0 : index
      %c0_75 = arith.constant 0 : index
      %163 = vector.load %arg18[%c0_74, %c0_75] : memref<1x1024xf32, #tpu.memory_space<vmem>>, vector<1x1024xf32>
      %164 = vector.broadcast %163 : vector<1x1024xf32> to vector<2x1024xf32>
      %165 = arith.addf %162, %164 : vector<2x1024xf32>
      %c0_76 = arith.constant 0 : index
      %c0_77 = arith.constant 0 : index
      %166 = vector.load %arg19[%c0_76, %c0_77] : memref<2x1024xf32, #tpu.memory_space<vmem>>, vector<2x1024xf32>
      tpu.vector_store %arg19[%c0_76, %c0_77], %165 {strides = array<i32>} : memref<2x1024xf32, #tpu.memory_space<vmem>>, vector<2x1024xf32>,
    } else {
    }
    return
  }
  func.func @transform_0(%arg0: i32) -> (i32, i32) {
    %c0_i32 = arith.constant 0 : i32
    %c0_i32_0 = arith.constant 0 : i32
    %c0_i32_1 = arith.constant 0 : i32
    return %c0_i32, %c0_i32_0 : i32, i32
  }
  func.func @transform_1(%arg0: i32) -> (i32, i32) {
    %c0_i32 = arith.constant 0 : i32
    %c0_i32_0 = arith.constant 0 : i32
    %c0_i32_1 = arith.constant 0 : i32
    return %c0_i32, %c0_i32_0 : i32, i32
  }
  func.func @transform_2(%arg0: i32) -> (i32, i32) {
    %c0_i32 = arith.constant 0 : i32
    %c0_i32_0 = arith.constant 0 : i32
    %c0_i32_1 = arith.constant 0 : i32
    return %c0_i32, %c0_i32_0 : i32, i32
  }
  func.func @transform_3(%arg0: i32) -> (i32, i32) {
    %c0_i32 = arith.constant 0 : i32
    %c0_i32_0 = arith.constant 0 : i32
    %c0_i32_1 = arith.constant 0 : i32
    return %c0_i32, %c0_i32_0 : i32, i32
  }
  func.func @transform_4(%arg0: i32) -> (i32, i32, i32) {
    %c0_i32 = arith.constant 0 : i32
    %c0_i32_0 = arith.constant 0 : i32
    %c0_i32_1 = arith.constant 0 : i32
    return %arg0, %c0_i32, %c0_i32_0 : i32, i32, i32
  }
  func.func @transform_5(%arg0: i32) -> (i32, i32, i32) {
    %c0_i32 = arith.constant 0 : i32
    %c0_i32_0 = arith.constant 0 : i32
    %c0_i32_1 = arith.constant 0 : i32
    return %arg0, %c0_i32, %c0_i32_0 : i32, i32, i32
  }
  func.func @transform_6(%arg0: i32) -> (i32, i32, i32) {
    %c0_i32 = arith.constant 0 : i32
    %c0_i32_0 = arith.constant 0 : i32
    %c0_i32_1 = arith.constant 0 : i32
    return %arg0, %c0_i32, %c0_i32_0 : i32, i32, i32
  }
  func.func @transform_7(%arg0: i32) -> (i32, i32, i32) {
    %c0_i32 = arith.constant 0 : i32
    %c0_i32_0 = arith.constant 0 : i32
    %c0_i32_1 = arith.constant 0 : i32
    return %arg0, %c0_i32, %c0_i32_0 : i32, i32, i32
  }
  func.func @transform_8(%arg0: i32) -> (i32, i32, i32) {
    %c0_i32 = arith.constant 0 : i32
    %c0_i32_0 = arith.constant 0 : i32
    %c0_i32_1 = arith.constant 0 : i32
    return %arg0, %c0_i32, %c0_i32_0 : i32, i32, i32
  }
  func.func @transform_9(%arg0: i32) -> (i32, i32, i32) {
    %c0_i32 = arith.constant 0 : i32
    %c0_i32_0 = arith.constant 0 : i32
    %c0_i32_1 = arith.constant 0 : i32
    return %arg0, %c0_i32, %c0_i32_0 : i32, i32, i32
  }
  func.func @transform_10(%arg0: i32) -> (i32, i32, i32) {
    %c0_i32 = arith.constant 0 : i32
    %c0_i32_0 = arith.constant 0 : i32
    %c0_i32_1 = arith.constant 0 : i32
    return %arg0, %c0_i32, %c0_i32_0 : i32, i32, i32
  }
  func.func @transform_11(%arg0: i32) -> (i32, i32, i32) {
    %c0_i32 = arith.constant 0 : i32
    %c0_i32_0 = arith.constant 0 : i32
    %c0_i32_1 = arith.constant 0 : i32
    return %arg0, %c0_i32, %c0_i32_0 : i32, i32, i32
  }
  func.func @transform_12(%arg0: i32) -> (i32, i32, i32) {
    %c0_i32 = arith.constant 0 : i32
    %c0_i32_0 = arith.constant 0 : i32
    %c0_i32_1 = arith.constant 0 : i32
    return %arg0, %c0_i32, %c0_i32_0 : i32, i32, i32
  }
  func.func @transform_13(%arg0: i32) -> (i32, i32, i32) {
    %c0_i32 = arith.constant 0 : i32
    %c0_i32_0 = arith.constant 0 : i32
    %c0_i32_1 = arith.constant 0 : i32
    return %arg0, %c0_i32, %c0_i32_0 : i32, i32, i32
  }
  func.func @transform_14(%arg0: i32) -> (i32, i32, i32) {
    %c0_i32 = arith.constant 0 : i32
    %c0_i32_0 = arith.constant 0 : i32
    %c0_i32_1 = arith.constant 0 : i32
    return %arg0, %c0_i32, %c0_i32_0 : i32, i32, i32
  }
  func.func @transform_15(%arg0: i32) -> (i32, i32, i32) {
    %c0_i32 = arith.constant 0 : i32
    %c0_i32_0 = arith.constant 0 : i32
    %c0_i32_1 = arith.constant 0 : i32
    return %arg0, %c0_i32, %c0_i32_0 : i32, i32, i32
  }
  func.func @transform_16(%arg0: i32) -> (i32, i32) {
    %c0_i32 = arith.constant 0 : i32
    %c0_i32_0 = arith.constant 0 : i32
    %c0_i32_1 = arith.constant 0 : i32
    return %c0_i32, %c0_i32_0 : i32, i32
  }
  func.func @transform_17(%arg0: i32) -> (i32, i32) {
    %c0_i32 = arith.constant 0 : i32
    %c0_i32_0 = arith.constant 0 : i32
    %c0_i32_1 = arith.constant 0 : i32
    return %c0_i32, %c0_i32_0 : i32, i32
  }
  func.func @transform_18(%arg0: i32) -> (i32, i32) {
    %c0_i32 = arith.constant 0 : i32
    %c0_i32_0 = arith.constant 0 : i32
    %c0_i32_1 = arith.constant 0 : i32
    return %c0_i32, %c0_i32_0 : i32, i32
  }
}

</mosaic_0001>

<llo_original>
// kernel: tpu_custom_call.1
$region0: #{tpu_custom_call.1}
  #allocation0 [shape = 'u32[]', space=smem, size = 0x4, offset = 0x4, fixed_abs, tag = 'smem constant byte address 0x4 - core index']
  #allocation1 [shape = 'u32[72,128]{1,0:T(1,128)}', space=vmem, size = 0x9000, scoped, tag = 'internal scratch']
  #allocation2 [shape = 'f32[32,128]{1,0:T(8,128)}', space=vmem, size = 0x4000, scoped, tag = 'scratch operand']
  %s0 = inlined_call_operand.hbm [shape: f32[32,128], index: 0, kind: input, shape index: {}]
  %s1 = inlined_call_operand.hbm [shape: f32[32,32], index: 1, kind: input, shape index: {}]
  %s2 = inlined_call_operand.hbm [shape: f32[1,128], index: 2, kind: input, shape index: {}]
  %s3 = inlined_call_operand.hbm [shape: f32[1,128], index: 3, kind: input, shape index: {}]
  %s4 = inlined_call_operand.hbm [shape: bf16[2,128,384], index: 4, kind: input, shape index: {}]
  %s5 = inlined_call_operand.hbm [shape: f32[2,1,384], index: 5, kind: input, shape index: {}]
  %s6 = inlined_call_operand.hbm [shape: bf16[2,128,128], index: 6, kind: input, shape index: {}]
  %s7 = inlined_call_operand.hbm [shape: f32[2,1,128], index: 7, kind: input, shape index: {}]
  %s8 = inlined_call_operand.hbm [shape: f32[2,1,128], index: 8, kind: input, shape index: {}]
  %s9 = inlined_call_operand.hbm [shape: f32[2,1,128], index: 9, kind: input, shape index: {}]
  %s10 = inlined_call_operand.hbm [shape: bf16[2,128,512], index: 10, kind: input, shape index: {}]
  %s11 = inlined_call_operand.vmem [shape: f32[2,1,512], index: 11, kind: input, shape index: {}]
  %s12 = inlined_call_operand.hbm [shape: bf16[2,512,128], index: 12, kind: input, shape index: {}]
  %s13 = inlined_call_operand.hbm [shape: f32[2,1,128], index: 13, kind: input, shape index: {}]
  %s14 = inlined_call_operand.hbm [shape: f32[2,1,128], index: 14, kind: input, shape index: {}]
  %s15 = inlined_call_operand.hbm [shape: f32[2,1,128], index: 15, kind: input, shape index: {}]
  %s16 = inlined_call_operand.hbm [shape: bf16[128,1024], index: 16, kind: input, shape index: {}]
  %s17 = inlined_call_operand.vmem [shape: f32[1,1024], index: 17, kind: input, shape index: {}]
  %s18 = inlined_call_operand.hbm [shape: f32[2,1024], index: 18, kind: output, shape index: {}]
  %s19 = sld [smem:[#allocation0]]
  $region177: #{tpu_custom_call.1} parent=0
    _
  %s21 = ssub.s32 1, %s19
  %s22 = scalar_select 0, %s21, %s19
  $region1: #{tpu_custom_call.1} parent=0
    #allocation3 [shape = 'u8[16384]{0}', space=vmem, size = 0x4000, scoped, tag = 'input window, operand 0, single buffered']
    #allocation4 [shape = 's32[2]{0}', space=sflag, size = 0x8, scoped, tag = 'scoped memory for tpu_custom_call.1']
    #allocation5 [shape = 's32[2]{0}', space=sflag, size = 0x8, scoped, tag = 'scoped memory for tpu_custom_call.1']
    #allocation6 [shape = 'u8[16384]{0}', space=vmem, size = 0x4000, scoped, tag = 'input window, operand 1, single buffered']
    #allocation7 [shape = 's32[1]{0}', space=sflag, size = 0x4, scoped, tag = 'scoped memory for tpu_custom_call.1']
    #allocation8 [shape = 'u8[512]{0}', space=vmem, size = 0x400, scoped, tag = 'input window, operand 2, single buffered']
    #allocation9 [shape = 'u8[512]{0}', space=vmem, size = 0x400, scoped, tag = 'input window, operand 3, single buffered']
    #allocation10 [shape = 's32[1]{0}', space=sflag, size = 0x4, scoped, tag = 'scoped memory for tpu_custom_call.1']
    #allocation11 [shape = 'u8[196608]{0}', space=vmem, size = 0x30000, scoped, tag = 'input window, operand 4']
    #allocation12 [shape = 'u8[3072]{0}', space=vmem, size = 0xc00, scoped, tag = 'input window, operand 5']
    #allocation13 [shape = 'u8[65536]{0}', space=vmem, size = 0x10000, scoped, tag = 'input window, operand 6']
    #allocation14 [shape = 'u8[1024]{0}', space=vmem, size = 0x400, scoped, tag = 'input window, operand 7']
    #allocation15 [shape = 'u8[1024]{0}', space=vmem, size = 0x400, scoped, tag = 'input window, operand 8']
    #allocation16 [shape = 'u8[1024]{0}', space=vmem, size = 0x400, scoped, tag = 'input window, operand 9']
    #allocation17 [shape = 'u8[262144]{0}', space=vmem, size = 0x40000, scoped, tag = 'input window, operand 10']
    #allocation18 [shape = 'u8[262144]{0}', space=vmem, size = 0x40000, scoped, tag = 'input window, operand 12']
    #allocation19 [shape = 'u8[1024]{0}', space=vmem, size = 0x400, scoped, tag = 'input window, operand 13']
    #allocation20 [shape = 'u8[1024]{0}', space=vmem, size = 0x400, scoped, tag = 'input window, operand 14']
    #allocation21 [shape = 'u8[1024]{0}', space=vmem, size = 0x400, scoped, tag = 'input window, operand 15']
    #allocation22 [shape = 'u8[262144]{0}', space=vmem, size = 0x40000, scoped, tag = 'input window, operand 16, single buffered']
    #allocation23 [shape = 'u8[8192]{0}', space=vmem, size = 0x2000, scoped, tag = 'output window, operand 0, single buffered']
    %23 = vsyncpa [#allocation4], 0
    %24 = vsyncpa [#allocation7], 0
    %25 = vsyncpa [#allocation10], 0
    %26 = vsyncpa [#allocation5], 0
    loop: start=0, step=1, limit=4
    $region2: #{tpu_custom_call.1} parent=1 // loop_pre_header
      _
    $region3: #{tpu_custom_call.1} parent=1 // loop_header
      %s28 = sphi 0, %s32
      %p29 = scmp.ge.s32.totalorder %s28, 4
      %s36 = sphi 0, %s36
      %s38 = sphi 0, %s36
      %s39 = sphi 0, %s38
      %s53 = sphi 0, %s39
      %s57 = sphi 0, %s57
      %s59 = sphi 0, %s57
      %s60 = sphi 0, %s59
      %s74 = sphi 0, %s60
      %s78 = sphi 0, %s78
      %s80 = sphi 0, %s78
      %s81 = sphi 0, %s80
      %s95 = sphi 0, %s81
      %s99 = sphi 0, %s99
      %s101 = sphi 0, %s99
      %s102 = sphi 0, %s101
      %s116 = sphi 0, %s102
      %s122 = sphi 0, %s124
      %s125 = sphi 0, %s122
      %s126 = sphi 0, %s125
      %s142 = sphi 0, %s126
      %s148 = sphi 0, %s150
      %s151 = sphi 0, %s148
      %s152 = sphi 0, %s151
      %s168 = sphi 0, %s152
      %s174 = sphi 0, %s176
      %s177 = sphi 0, %s174
      %s178 = sphi 0, %s177
      %s194 = sphi 0, %s178
      %s200 = sphi 0, %s202
      %s203 = sphi 0, %s200
      %s204 = sphi 0, %s203
      %s220 = sphi 0, %s204
      %s226 = sphi 0, %s228
      %s229 = sphi 0, %s226
      %s230 = sphi 0, %s229
      %s246 = sphi 0, %s230
      %s252 = sphi 0, %s254
      %s255 = sphi 0, %s252
      %s256 = sphi 0, %s255
      %s272 = sphi 0, %s256
      %s278 = sphi 0, %s280
      %s281 = sphi 0, %s278
      %s282 = sphi 0, %s281
      %s298 = sphi 0, %s282
      %s304 = sphi 0, %s306
      %s307 = sphi 0, %s304
      %s308 = sphi 0, %s307
      %s324 = sphi 0, %s308
      %s330 = sphi 0, %s332
      %s333 = sphi 0, %s330
      %s334 = sphi 0, %s333
      %s350 = sphi 0, %s334
      %s356 = sphi 0, %s358
      %s359 = sphi 0, %s356
      %s360 = sphi 0, %s359
      %s376 = sphi 0, %s360
      %s382 = sphi 0, %s384
      %s385 = sphi 0, %s382
      %s386 = sphi 0, %s385
      %s402 = sphi 0, %s386
      %s408 = sphi 0, %s410
      %s411 = sphi 0, %s408
      %s412 = sphi 0, %s411
      %s428 = sphi 0, %s412
      %s432 = sphi 0, %s432
      %s434 = sphi 0, %s432
      %s435 = sphi 0, %s434
      %s449 = sphi 0, %s435
      %s453 = sphi 0, %s453
      %s455 = sphi 0, %s453
      %s456 = sphi 0, %s455
      %s470 = sphi 0, %s456
      %s474 = sphi 0, %s474
      %s476 = sphi 0, %s474
      %s477 = sphi 0, %s476
      %s491 = sphi 0, %s477
    $region4: #{tpu_custom_call.1} parent=1 // loop_header_branch
      %31 = sbr.rel (%p29) target = $region8
    $region5: #{tpu_custom_call.1} parent=1 // loop_body
      %s33 = ssub.s32 %s28, 1
      %s34 = ssub.s32 %s28, 2
      %s35 = sadd.s32 %s28, 1
      %s37 = sadd.s32 %s36, 1
      %p40 = scmp.eq.s32.totalorder %s28, 1
      %p41 = scmp.ne.s32.totalorder %s36, %s38
      %p42 = scmp.eq.s32.totalorder %s28, 0
      %p43 = por %p41, %p42
      %p44 = scmp.ne.s32.totalorder %s36, %s38
      %p45 = scmp.eq.s32.totalorder %s33, 1
      %p46 = por %p44, %p45
      %p47 = scmp.ne.s32.totalorder %s38, %s39
      %p48 = scmp.eq.s32.totalorder %s33, 0
      %p49 = por %p47, %p48
      %p50 = scmp.ne.s32.totalorder %s38, %s39
      %p51 = scmp.eq.s32.totalorder %s34, 1
      %p52 = por %p50, %p51
      %p54 = scmp.ne.s32.totalorder %s39, %s53
      %p55 = scmp.eq.s32.totalorder %s34, 0
      %p56 = por %p54, %p55
      %s58 = sadd.s32 %s57, 1
      %p61 = scmp.eq.s32.totalorder %s28, 1
      %p62 = scmp.ne.s32.totalorder %s57, %s59
      %p63 = scmp.eq.s32.totalorder %s28, 0
      %p64 = por %p62, %p63
      %p65 = scmp.ne.s32.totalorder %s57, %s59
      %p66 = scmp.eq.s32.totalorder %s33, 1
      %p67 = por %p65, %p66
      %p68 = scmp.ne.s32.totalorder %s59, %s60
      %p69 = scmp.eq.s32.totalorder %s33, 0
      %p70 = por %p68, %p69
      %p71 = scmp.ne.s32.totalorder %s59, %s60
      %p72 = scmp.eq.s32.totalorder %s34, 1
      %p73 = por %p71, %p72
      %p75 = scmp.ne.s32.totalorder %s60, %s74
      %p76 = scmp.eq.s32.totalorder %s34, 0
      %p77 = por %p75, %p76
      %s79 = sadd.s32 %s78, 1
      %p82 = scmp.eq.s32.totalorder %s28, 1
      %p83 = scmp.ne.s32.totalorder %s78, %s80
      %p84 = scmp.eq.s32.totalorder %s28, 0
      %p85 = por %p83, %p84
      %p86 = scmp.ne.s32.totalorder %s78, %s80
      %p87 = scmp.eq.s32.totalorder %s33, 1
      %p88 = por %p86, %p87
      %p89 = scmp.ne.s32.totalorder %s80, %s81
      %p90 = scmp.eq.s32.totalorder %s33, 0
      %p91 = por %p89, %p90
      %p92 = scmp.ne.s32.totalorder %s80, %s81
      %p93 = scmp.eq.s32.totalorder %s34, 1
      %p94 = por %p92, %p93
      %p96 = scmp.ne.s32.totalorder %s81, %s95
      %p97 = scmp.eq.s32.totalorder %s34, 0
      %p98 = por %p96, %p97
      %s100 = sadd.s32 %s99, 1
      %p103 = scmp.eq.s32.totalorder %s28, 1
      %p104 = scmp.ne.s32.totalorder %s99, %s101
      %p105 = scmp.eq.s32.totalorder %s28, 0
      %p106 = por %p104, %p105
      %p107 = scmp.ne.s32.totalorder %s99, %s101
      %p108 = scmp.eq.s32.totalorder %s33, 1
      %p109 = por %p107, %p108
      %p110 = scmp.ne.s32.totalorder %s101, %s102
      %p111 = scmp.eq.s32.totalorder %s33, 0
      %p112 = por %p110, %p111
      %p113 = scmp.ne.s32.totalorder %s101, %s102
      %p114 = scmp.eq.s32.totalorder %s34, 1
      %p115 = por %p113, %p114
      %p117 = scmp.ne.s32.totalorder %s102, %s116
      %p118 = scmp.eq.s32.totalorder %s34, 0
      %p119 = por %p117, %p118
      %s120 = ssub.s32 %s28, %s35
      %p121 = scmp.eq.s32.totalorder %s120, 0
      %s123 = sadd.s32 %s122, 1
      %s124 = scalar_select %p121, %s122, %s123
      %p127 = pneg %p121
      %p128 = scmp.eq.s32.totalorder %s28, 1
      %p129 = por %p127, %p128
      %p130 = scmp.ne.s32.totalorder %s122, %s125
      %p131 = scmp.eq.s32.totalorder %s28, 0
      %p132 = por %p130, %p131
      %p133 = scmp.ne.s32.totalorder %s122, %s125
      %p134 = scmp.eq.s32.totalorder %s33, 1
      %p135 = por %p133, %p134
      %p136 = scmp.ne.s32.totalorder %s125, %s126
      %p137 = scmp.eq.s32.totalorder %s33, 0
      %p138 = por %p136, %p137
      %p139 = scmp.ne.s32.totalorder %s125, %s126
      %p140 = scmp.eq.s32.totalorder %s34, 1
      %p141 = por %p139, %p140
      %p143 = scmp.ne.s32.totalorder %s126, %s142
      %p144 = scmp.eq.s32.totalorder %s34, 0
      %p145 = por %p143, %p144
      %s146 = ssub.s32 %s28, %s35
      %p147 = scmp.eq.s32.totalorder %s146, 0
      %s149 = sadd.s32 %s148, 1
      %s150 = scalar_select %p147, %s148, %s149
      %p153 = pneg %p147
      %p154 = scmp.eq.s32.totalorder %s28, 1
      %p155 = por %p153, %p154
      %p156 = scmp.ne.s32.totalorder %s148, %s151
      %p157 = scmp.eq.s32.totalorder %s28, 0
      %p158 = por %p156, %p157
      %p159 = scmp.ne.s32.totalorder %s148, %s151
      %p160 = scmp.eq.s32.totalorder %s33, 1
      %p161 = por %p159, %p160
      %p162 = scmp.ne.s32.totalorder %s151, %s152
      %p163 = scmp.eq.s32.totalorder %s33, 0
      %p164 = por %p162, %p163
      %p165 = scmp.ne.s32.totalorder %s151, %s152
      %p166 = scmp.eq.s32.totalorder %s34, 1
      %p167 = por %p165, %p166
      %p169 = scmp.ne.s32.totalorder %s152, %s168
      %p170 = scmp.eq.s32.totalorder %s34, 0
      %p171 = por %p169, %p170
      %s172 = ssub.s32 %s28, %s35
      %p173 = scmp.eq.s32.totalorder %s172, 0
      %s175 = sadd.s32 %s174, 1
      %s176 = scalar_select %p173, %s174, %s175
      %p179 = pneg %p173
      %p180 = scmp.eq.s32.totalorder %s28, 1
      %p181 = por %p179, %p180
      %p182 = scmp.ne.s32.totalorder %s174, %s177
      %p183 = scmp.eq.s32.totalorder %s28, 0
      %p184 = por %p182, %p183
      %p185 = scmp.ne.s32.totalorder %s174, %s177
      %p186 = scmp.eq.s32.totalorder %s33, 1
      %p187 = por %p185, %p186
      %p188 = scmp.ne.s32.totalorder %s177, %s178
      %p189 = scmp.eq.s32.totalorder %s33, 0
      %p190 = por %p188, %p189
      %p191 = scmp.ne.s32.totalorder %s177, %s178
      %p192 = scmp.eq.s32.totalorder %s34, 1
      %p193 = por %p191, %p192
      %p195 = scmp.ne.s32.totalorder %s178, %s194
      %p196 = scmp.eq.s32.totalorder %s34, 0
      %p197 = por %p195, %p196
      %s198 = ssub.s32 %s28, %s35
      %p199 = scmp.eq.s32.totalorder %s198, 0
      %s201 = sadd.s32 %s200, 1
      %s202 = scalar_select %p199, %s200, %s201
      %p205 = pneg %p199
      %p206 = scmp.eq.s32.totalorder %s28, 1
      %p207 = por %p205, %p206
      %p208 = scmp.ne.s32.totalorder %s200, %s203
      %p209 = scmp.eq.s32.totalorder %s28, 0
      %p210 = por %p208, %p209
      %p211 = scmp.ne.s32.totalorder %s200, %s203
      %p212 = scmp.eq.s32.totalorder %s33, 1
      %p213 = por %p211, %p212
      %p214 = scmp.ne.s32.totalorder %s203, %s204
      %p215 = scmp.eq.s32.totalorder %s33, 0
      %p216 = por %p214, %p215
      %p217 = scmp.ne.s32.totalorder %s203, %s204
      %p218 = scmp.eq.s32.totalorder %s34, 1
      %p219 = por %p217, %p218
      %p221 = scmp.ne.s32.totalorder %s204, %s220
      %p222 = scmp.eq.s32.totalorder %s34, 0
      %p223 = por %p221, %p222
      %s224 = ssub.s32 %s28, %s35
      %p225 = scmp.eq.s32.totalorder %s224, 0
      %s227 = sadd.s32 %s226, 1
      %s228 = scalar_select %p225, %s226, %s227
      %p231 = pneg %p225
      %p232 = scmp.eq.s32.totalorder %s28, 1
      %p233 = por %p231, %p232
      %p234 = scmp.ne.s32.totalorder %s226, %s229
      %p235 = scmp.eq.s32.totalorder %s28, 0
      %p236 = por %p234, %p235
      %p237 = scmp.ne.s32.totalorder %s226, %s229
      %p238 = scmp.eq.s32.totalorder %s33, 1
      %p239 = por %p237, %p238
      %p240 = scmp.ne.s32.totalorder %s229, %s230
      %p241 = scmp.eq.s32.totalorder %s33, 0
      %p242 = por %p240, %p241
      %p243 = scmp.ne.s32.totalorder %s229, %s230
      %p244 = scmp.eq.s32.totalorder %s34, 1
      %p245 = por %p243, %p244
      %p247 = scmp.ne.s32.totalorder %s230, %s246
      %p248 = scmp.eq.s32.totalorder %s34, 0
      %p249 = por %p247, %p248
      %s250 = ssub.s32 %s28, %s35
      %p251 = scmp.eq.s32.totalorder %s250, 0
      %s253 = sadd.s32 %s252, 1
      %s254 = scalar_select %p251, %s252, %s253
      %p257 = pneg %p251
      %p258 = scmp.eq.s32.totalorder %s28, 1
      %p259 = por %p257, %p258
      %p260 = scmp.ne.s32.totalorder %s252, %s255
      %p261 = scmp.eq.s32.totalorder %s28, 0
      %p262 = por %p260, %p261
      %p263 = scmp.ne.s32.totalorder %s252, %s255
      %p264 = scmp.eq.s32.totalorder %s33, 1
      %p265 = por %p263, %p264
      %p266 = scmp.ne.s32.totalorder %s255, %s256
      %p267 = scmp.eq.s32.totalorder %s33, 0
      %p268 = por %p266, %p267
      %p269 = scmp.ne.s32.totalorder %s255, %s256
      %p270 = scmp.eq.s32.totalorder %s34, 1
      %p271 = por %p269, %p270
      %p273 = scmp.ne.s32.totalorder %s256, %s272
      %p274 = scmp.eq.s32.totalorder %s34, 0
      %p275 = por %p273, %p274
      %s276 = ssub.s32 %s28, %s35
      %p277 = scmp.eq.s32.totalorder %s276, 0
      %s279 = sadd.s32 %s278, 1
      %s280 = scalar_select %p277, %s278, %s279
      %p283 = pneg %p277
      %p284 = scmp.eq.s32.totalorder %s28, 1
      %p285 = por %p283, %p284
      %p286 = scmp.ne.s32.totalorder %s278, %s281
      %p287 = scmp.eq.s32.totalorder %s28, 0
      %p288 = por %p286, %p287
      %p289 = scmp.ne.s32.totalorder %s278, %s281
      %p290 = scmp.eq.s32.totalorder %s33, 1
      %p291 = por %p289, %p290
      %p292 = scmp.ne.s32.totalorder %s281, %s282
      %p293 = scmp.eq.s32.totalorder %s33, 0
      %p294 = por %p292, %p293
      %p295 = scmp.ne.s32.totalorder %s281, %s282
      %p296 = scmp.eq.s32.totalorder %s34, 1
      %p297 = por %p295, %p296
      %p299 = scmp.ne.s32.totalorder %s282, %s298
      %p300 = scmp.eq.s32.totalorder %s34, 0
      %p301 = por %p299, %p300
      %s302 = ssub.s32 %s28, %s35
      %p303 = scmp.eq.s32.totalorder %s302, 0
      %s305 = sadd.s32 %s304, 1
      %s306 = scalar_select %p303, %s304, %s305
      %p309 = pneg %p303
      %p310 = scmp.eq.s32.totalorder %s28, 1
      %p311 = por %p309, %p310
      %p312 = scmp.ne.s32.totalorder %s304, %s307
      %p313 = scmp.eq.s32.totalorder %s28, 0
      %p314 = por %p312, %p313
      %p315 = scmp.ne.s32.totalorder %s304, %s307
      %p316 = scmp.eq.s32.totalorder %s33, 1
      %p317 = por %p315, %p316
      %p318 = scmp.ne.s32.totalorder %s307, %s308
      %p319 = scmp.eq.s32.totalorder %s33, 0
      %p320 = por %p318, %p319
      %p321 = scmp.ne.s32.totalorder %s307, %s308
      %p322 = scmp.eq.s32.totalorder %s34, 1
      %p323 = por %p321, %p322
      %p325 = scmp.ne.s32.totalorder %s308, %s324
      %p326 = scmp.eq.s32.totalorder %s34, 0
      %p327 = por %p325, %p326
      %s328 = ssub.s32 %s28, %s35
      %p329 = scmp.eq.s32.totalorder %s328, 0
      %s331 = sadd.s32 %s330, 1
      %s332 = scalar_select %p329, %s330, %s331
      %p335 = pneg %p329
      %p336 = scmp.eq.s32.totalorder %s28, 1
      %p337 = por %p335, %p336
      %p338 = scmp.ne.s32.totalorder %s330, %s333
      %p339 = scmp.eq.s32.totalorder %s28, 0
      %p340 = por %p338, %p339
      %p341 = scmp.ne.s32.totalorder %s330, %s333
      %p342 = scmp.eq.s32.totalorder %s33, 1
      %p343 = por %p341, %p342
      %p344 = scmp.ne.s32.totalorder %s333, %s334
      %p345 = scmp.eq.s32.totalorder %s33, 0
      %p346 = por %p344, %p345
      %p347 = scmp.ne.s32.totalorder %s333, %s334
      %p348 = scmp.eq.s32.totalorder %s34, 1
      %p349 = por %p347, %p348
      %p351 = scmp.ne.s32.totalorder %s334, %s350
      %p352 = scmp.eq.s32.totalorder %s34, 0
      %p353 = por %p351, %p352
      %s354 = ssub.s32 %s28, %s35
      %p355 = scmp.eq.s32.totalorder %s354, 0
      %s357 = sadd.s32 %s356, 1
      %s358 = scalar_select %p355, %s356, %s357
      %p361 = pneg %p355
      %p362 = scmp.eq.s32.totalorder %s28, 1
      %p363 = por %p361, %p362
      %p364 = scmp.ne.s32.totalorder %s356, %s359
      %p365 = scmp.eq.s32.totalorder %s28, 0
      %p366 = por %p364, %p365
      %p367 = scmp.ne.s32.totalorder %s356, %s359
      %p368 = scmp.eq.s32.totalorder %s33, 1
      %p369 = por %p367, %p368
      %p370 = scmp.ne.s32.totalorder %s359, %s360
      %p371 = scmp.eq.s32.totalorder %s33, 0
      %p372 = por %p370, %p371
      %p373 = scmp.ne.s32.totalorder %s359, %s360
      %p374 = scmp.eq.s32.totalorder %s34, 1
      %p375 = por %p373, %p374
      %p377 = scmp.ne.s32.totalorder %s360, %s376
      %p378 = scmp.eq.s32.totalorder %s34, 0
      %p379 = por %p377, %p378
      %s380 = ssub.s32 %s28, %s35
      %p381 = scmp.eq.s32.totalorder %s380, 0
      %s383 = sadd.s32 %s382, 1
      %s384 = scalar_select %p381, %s382, %s383
      %p387 = pneg %p381
      %p388 = scmp.eq.s32.totalorder %s28, 1
      %p389 = por %p387, %p388
      %p390 = scmp.ne.s32.totalorder %s382, %s385
      %p391 = scmp.eq.s32.totalorder %s28, 0
      %p392 = por %p390, %p391
      %p393 = scmp.ne.s32.totalorder %s382, %s385
      %p394 = scmp.eq.s32.totalorder %s33, 1
      %p395 = por %p393, %p394
      %p396 = scmp.ne.s32.totalorder %s385, %s386
      %p397 = scmp.eq.s32.totalorder %s33, 0
      %p398 = por %p396, %p397
      %p399 = scmp.ne.s32.totalorder %s385, %s386
      %p400 = scmp.eq.s32.totalorder %s34, 1
      %p401 = por %p399, %p400
      %p403 = scmp.ne.s32.totalorder %s386, %s402
      %p404 = scmp.eq.s32.totalorder %s34, 0
      %p405 = por %p403, %p404
      %s406 = ssub.s32 %s28, %s35
      %p407 = scmp.eq.s32.totalorder %s406, 0
      %s409 = sadd.s32 %s408, 1
      %s410 = scalar_select %p407, %s408, %s409
      %p413 = pneg %p407
      %p414 = scmp.eq.s32.totalorder %s28, 1
      %p415 = por %p413, %p414
      %p416 = scmp.ne.s32.totalorder %s408, %s411
      %p417 = scmp.eq.s32.totalorder %s28, 0
      %p418 = por %p416, %p417
      %p419 = scmp.ne.s32.totalorder %s408, %s411
      %p420 = scmp.eq.s32.totalorder %s33, 1
      %p421 = por %p419, %p420
      %p422 = scmp.ne.s32.totalorder %s411, %s412
      %p423 = scmp.eq.s32.totalorder %s33, 0
      %p424 = por %p422, %p423
      %p425 = scmp.ne.s32.totalorder %s411, %s412
      %p426 = scmp.eq.s32.totalorder %s34, 1
      %p427 = por %p425, %p426
      %p429 = scmp.ne.s32.totalorder %s412, %s428
      %p430 = scmp.eq.s32.totalorder %s34, 0
      %p431 = por %p429, %p430
      %s433 = sadd.s32 %s432, 1
      %p436 = scmp.eq.s32.totalorder %s28, 1
      %p437 = scmp.ne.s32.totalorder %s432, %s434
      %p438 = scmp.eq.s32.totalorder %s28, 0
      %p439 = por %p437, %p438
      %p440 = scmp.ne.s32.totalorder %s432, %s434
      %p441 = scmp.eq.s32.totalorder %s33, 1
      %p442 = por %p440, %p441
      %p443 = scmp.ne.s32.totalorder %s434, %s435
      %p444 = scmp.eq.s32.totalorder %s33, 0
      %p445 = por %p443, %p444
      %p446 = scmp.ne.s32.totalorder %s434, %s435
      %p447 = scmp.eq.s32.totalorder %s34, 1
      %p448 = por %p446, %p447
      %p450 = scmp.ne.s32.totalorder %s435, %s449
      %p451 = scmp.eq.s32.totalorder %s34, 0
      %p452 = por %p450, %p451
      %s454 = sadd.s32 %s453, 1
      %p457 = scmp.eq.s32.totalorder %s28, 1
      %p458 = scmp.ne.s32.totalorder %s453, %s455
      %p459 = scmp.eq.s32.totalorder %s28, 0
      %p460 = por %p458, %p459
      %p461 = scmp.ne.s32.totalorder %s453, %s455
      %p462 = scmp.eq.s32.totalorder %s33, 1
      %p463 = por %p461, %p462
      %p464 = scmp.ne.s32.totalorder %s455, %s456
      %p465 = scmp.eq.s32.totalorder %s33, 0
      %p466 = por %p464, %p465
      %p467 = scmp.ne.s32.totalorder %s455, %s456
      %p468 = scmp.eq.s32.totalorder %s34, 1
      %p469 = por %p467, %p468
      %p471 = scmp.ne.s32.totalorder %s456, %s470
      %p472 = scmp.eq.s32.totalorder %s34, 0
      %p473 = por %p471, %p472
      %s475 = sadd.s32 %s474, 1
      %p478 = scmp.eq.s32.totalorder %s28, 1
      %p479 = scmp.ne.s32.totalorder %s474, %s476
      %p480 = scmp.eq.s32.totalorder %s28, 0
      %p481 = por %p479, %p480
      %p482 = scmp.ne.s32.totalorder %s474, %s476
      %p483 = scmp.eq.s32.totalorder %s33, 1
      %p484 = por %p482, %p483
      %p485 = scmp.ne.s32.totalorder %s476, %s477
      %p486 = scmp.eq.s32.totalorder %s33, 0
      %p487 = por %p485, %p486
      %p488 = scmp.ne.s32.totalorder %s476, %s477
      %p489 = scmp.eq.s32.totalorder %s34, 1
      %p490 = por %p488, %p489
      %p492 = scmp.ne.s32.totalorder %s477, %s491
      %p493 = scmp.eq.s32.totalorder %s34, 0
      %p494 = por %p492, %p493
      %p495 = scmp.le.s32.totalorder 1, %s28
      %p496 = scmp.lt.s32.totalorder %s28, 3
      %p497 = pnand %p495, %p496
      %p498 = pneg %p497
      // Predicated region
      $region9: #{tpu_custom_call.1} parent=5 // pred_check
        _
      $region10: #{tpu_custom_call.1} parent=5 // pred_check_branch
        %500 = sbr.rel (%p497) target = $region12
      $region11: #{tpu_custom_call.1} parent=5 // pred_region
        %s501 = ssub.s32 %s28, 1
        // Predicated region
        $region13: #{tpu_custom_call.1} parent=11 // pred_check
          %p502 = pneg %p49
        $region14: #{tpu_custom_call.1} parent=11 // pred_check_branch
          %504 = sbr.rel (%p502) target = $region16
        $region15: #{tpu_custom_call.1} parent=11 // pred_region
          %506 = vsyncadd [#allocation4], 0
          %s507 = sshll.u32 %s0, 4
          %s508 = int_to_ptr.hbm [resolvable:$true] %s507
          %s509 = sshll.u32 [#allocation3], 4
          %s510 = int_to_ptr.vmem [resolvable:$true] %s509
          %515 = dma.hbm_to_vmem [thread:$0]  %s508, 512, %s510, [#allocation4], 128, 128, 8
        $region16: #{tpu_custom_call.1} parent=11 // pred_fallthru
          _
        // Predicated region
        $region17: #{tpu_custom_call.1} parent=11 // pred_check
          %p516 = pneg %p70
        $region18: #{tpu_custom_call.1} parent=11 // pred_check_branch
          %518 = sbr.rel (%p516) target = $region20
        $region19: #{tpu_custom_call.1} parent=11 // pred_region
          %520 = vsyncadd [#allocation7], 0
          %s521 = sshll.u32 %s1, 4
          %s522 = int_to_ptr.hbm [resolvable:$true] %s521
          %s523 = sshll.u32 [#allocation6], 4
          %s524 = int_to_ptr.vmem [resolvable:$true] %s523
          %529 = dma.hbm_to_vmem [thread:$0]  %s522, 512, %s524, [#allocation7], 128, 128, 8
        $region20: #{tpu_custom_call.1} parent=11 // pred_fallthru
          _
        // Predicated region
        $region21: #{tpu_custom_call.1} parent=11 // pred_check
          %p530 = pneg %p91
        $region22: #{tpu_custom_call.1} parent=11 // pred_check_branch
          %532 = sbr.rel (%p530) target = $region24
        $region23: #{tpu_custom_call.1} parent=11 // pred_region
          %534 = vsyncadd [#allocation7], 0
          %s536 = sshll.u32 %s2, 4
          %s537 = int_to_ptr.hbm [resolvable:$true] %s536
          %s538 = sshll.u32 [#allocation8], 4
          %s539 = int_to_ptr.vmem [resolvable:$true] %s538
          %541 = dma.hbm_to_vmem [thread:$0]  %s537, 16, %s539, [#allocation7]
        $region24: #{tpu_custom_call.1} parent=11 // pred_fallthru
          _
        // Predicated region
        $region25: #{tpu_custom_call.1} parent=11 // pred_check
          %p542 = pneg %p112
        $region26: #{tpu_custom_call.1} parent=11 // pred_check_branch
          %544 = sbr.rel (%p542) target = $region28
        $region27: #{tpu_custom_call.1} parent=11 // pred_region
          %546 = vsyncadd [#allocation10], 0
          %s548 = sshll.u32 %s3, 4
          %s549 = int_to_ptr.hbm [resolvable:$true] %s548
          %s550 = sshll.u32 [#allocation9], 4
          %s551 = int_to_ptr.vmem [resolvable:$true] %s550
          %553 = dma.hbm_to_vmem [thread:$0]  %s549, 16, %s551, [#allocation10]
        $region28: #{tpu_custom_call.1} parent=11 // pred_fallthru
          _
        // Predicated region
        $region29: #{tpu_custom_call.1} parent=11 // pred_check
          %p554 = pneg %p445
        $region30: #{tpu_custom_call.1} parent=11 // pred_check_branch
          %556 = sbr.rel (%p554) target = $region32
        $region31: #{tpu_custom_call.1} parent=11 // pred_region
          %558 = vsyncadd [#allocation7], 0
          %s559 = sshll.u32 %s16, 4
          %s560 = int_to_ptr.hbm [resolvable:$true] %s559
          %s561 = sshll.u32 [#allocation22], 4
          %s562 = int_to_ptr.vmem [resolvable:$true] %s561
          %567 = dma.hbm_to_vmem [thread:$0]  %s560, 8192, %s562, [#allocation7], 512, 512, 32
        $region32: #{tpu_custom_call.1} parent=11 // pred_fallthru
          _
        // Predicated region
        $region33: #{tpu_custom_call.1} parent=11 // pred_check
          %p568 = pneg %p466
        $region34: #{tpu_custom_call.1} parent=11 // pred_check_branch
          %570 = sbr.rel (%p568) target = $region36
        $region35: #{tpu_custom_call.1} parent=11 // pred_region
          _
        $region36: #{tpu_custom_call.1} parent=11 // pred_fallthru
          _
      $region12: #{tpu_custom_call.1} parent=5 // pred_fallthru
        _
      %p571 = scmp.lt.s32.totalorder %s28, 2
      // Predicated region
      $region37: #{tpu_custom_call.1} parent=5 // pred_check
        %p572 = pneg %p571
      $region38: #{tpu_custom_call.1} parent=5 // pred_check_branch
        %574 = sbr.rel (%p572) target = $region40
      $region39: #{tpu_custom_call.1} parent=5 // pred_region
        // Predicated region
        $region41: #{tpu_custom_call.1} parent=39 // pred_check
          %p575 = pneg %p132
        $region42: #{tpu_custom_call.1} parent=39 // pred_check_branch
          %577 = sbr.rel (%p575) target = $region44
        $region43: #{tpu_custom_call.1} parent=39 // pred_region
          %s578 = sand.u32 %s28, 1
          %s579 = scalar_lea.sflag [#allocation4], %s578
          %s580 = sand.u32 %s122, 1
          %s581 = smul.addr %s580, 192
          %s582 = scalar_lea.vmem [#allocation11], %s581
          %584 = vsyncadd %s579, 0
          %s585 = smul.addr %s28, 48
          %s586 = smul.addr %s585, 4
          %s587 = scalar_lea.hbm %s4, %s586
          %s588 = sshll.u32 %s587, 4
          %s589 = int_to_ptr.hbm [resolvable:$true] %s588
          %s590 = sshll.u32 %s582, 4
          %s591 = int_to_ptr.vmem [resolvable:$true] %s590
          %596 = dma.hbm_to_vmem [thread:$0]  %s589, 3072, %s591, %s579, 192, 192, 12
        $region44: #{tpu_custom_call.1} parent=39 // pred_fallthru
          _
        // Predicated region
        $region45: #{tpu_custom_call.1} parent=39 // pred_check
          %p597 = pneg %p158
        $region46: #{tpu_custom_call.1} parent=39 // pred_check_branch
          %599 = sbr.rel (%p597) target = $region48
        $region47: #{tpu_custom_call.1} parent=39 // pred_region
          %s600 = sand.u32 %s28, 1
          %s601 = scalar_lea.sflag [#allocation4], %s600
          %s602 = sand.u32 %s148, 1
          %s603 = smul.addr %s602, 3
          %s604 = scalar_lea.vmem [#allocation12], %s603
          %606 = vsyncadd %s601, 0
          %s607 = smul.addr %s28, 3
          %s608 = scalar_lea.hbm %s5, %s607
          %s610 = sshll.u32 %s608, 4
          %s611 = int_to_ptr.hbm [resolvable:$true] %s610
          %s612 = sshll.u32 %s604, 4
          %s613 = int_to_ptr.vmem [resolvable:$true] %s612
          %615 = dma.hbm_to_vmem [thread:$0]  %s611, 48, %s613, %s601
        $region48: #{tpu_custom_call.1} parent=39 // pred_fallthru
          _
        // Predicated region
        $region49: #{tpu_custom_call.1} parent=39 // pred_check
          %p616 = pneg %p184
        $region50: #{tpu_custom_call.1} parent=39 // pred_check_branch
          %618 = sbr.rel (%p616) target = $region52
        $region51: #{tpu_custom_call.1} parent=39 // pred_region
          %s619 = sand.u32 %s28, 1
          %s620 = scalar_lea.sflag [#allocation4], %s619
          %s621 = sand.u32 %s174, 1
          %s622 = smul.addr %s621, 64
          %s623 = scalar_lea.vmem [#allocation13], %s622
          %625 = vsyncadd %s620, 0
          %s626 = smul.addr %s28, 16
          %s627 = smul.addr %s626, 4
          %s628 = scalar_lea.hbm %s6, %s627
          %s629 = sshll.u32 %s628, 4
          %s630 = int_to_ptr.hbm [resolvable:$true] %s629
          %s631 = sshll.u32 %s623, 4
          %s632 = int_to_ptr.vmem [resolvable:$true] %s631
          %637 = dma.hbm_to_vmem [thread:$0]  %s630, 1024, %s632, %s620, 64, 64, 4
        $region52: #{tpu_custom_call.1} parent=39 // pred_fallthru
          _
        // Predicated region
        $region53: #{tpu_custom_call.1} parent=39 // pred_check
          %p638 = pneg %p210
        $region54: #{tpu_custom_call.1} parent=39 // pred_check_branch
          %640 = sbr.rel (%p638) target = $region56
        $region55: #{tpu_custom_call.1} parent=39 // pred_region
          %s641 = sand.u32 %s28, 1
          %s642 = scalar_lea.sflag [#allocation4], %s641
          %s643 = sand.u32 %s200, 1
          %s644 = scalar_lea.vmem [#allocation14], %s643
          %646 = vsyncadd %s642, 0
          %s647 = scalar_lea.hbm %s7, %s28
          %s649 = sshll.u32 %s647, 4
          %s650 = int_to_ptr.hbm [resolvable:$true] %s649
          %s651 = sshll.u32 %s644, 4
          %s652 = int_to_ptr.vmem [resolvable:$true] %s651
          %654 = dma.hbm_to_vmem [thread:$0]  %s650, 16, %s652, %s642
        $region56: #{tpu_custom_call.1} parent=39 // pred_fallthru
          _
        // Predicated region
        $region57: #{tpu_custom_call.1} parent=39 // pred_check
          %p655 = pneg %p236
        $region58: #{tpu_custom_call.1} parent=39 // pred_check_branch
          %657 = sbr.rel (%p655) target = $region60
        $region59: #{tpu_custom_call.1} parent=39 // pred_region
          %s658 = sand.u32 %s28, 1
          %s659 = scalar_lea.sflag [#allocation4], %s658
          %s660 = sand.u32 %s226, 1
          %s661 = scalar_lea.vmem [#allocation15], %s660
          %663 = vsyncadd %s659, 0
          %s664 = scalar_lea.hbm %s8, %s28
          %s666 = sshll.u32 %s664, 4
          %s667 = int_to_ptr.hbm [resolvable:$true] %s666
          %s668 = sshll.u32 %s661, 4
          %s669 = int_to_ptr.vmem [resolvable:$true] %s668
          %671 = dma.hbm_to_vmem [thread:$0]  %s667, 16, %s669, %s659
        $region60: #{tpu_custom_call.1} parent=39 // pred_fallthru
          _
        // Predicated region
        $region61: #{tpu_custom_call.1} parent=39 // pred_check
          %p672 = pneg %p262
        $region62: #{tpu_custom_call.1} parent=39 // pred_check_branch
          %674 = sbr.rel (%p672) target = $region64
        $region63: #{tpu_custom_call.1} parent=39 // pred_region
          %s675 = sand.u32 %s28, 1
          %s676 = scalar_lea.sflag [#allocation4], %s675
          %s677 = sand.u32 %s252, 1
          %s678 = scalar_lea.vmem [#allocation16], %s677
          %680 = vsyncadd %s676, 0
          %s681 = scalar_lea.hbm %s9, %s28
          %s683 = sshll.u32 %s681, 4
          %s684 = int_to_ptr.hbm [resolvable:$true] %s683
          %s685 = sshll.u32 %s678, 4
          %s686 = int_to_ptr.vmem [resolvable:$true] %s685
          %688 = dma.hbm_to_vmem [thread:$0]  %s684, 16, %s686, %s676
        $region64: #{tpu_custom_call.1} parent=39 // pred_fallthru
          _
        // Predicated region
        $region65: #{tpu_custom_call.1} parent=39 // pred_check
          %p689 = pneg %p288
        $region66: #{tpu_custom_call.1} parent=39 // pred_check_branch
          %691 = sbr.rel (%p689) target = $region68
        $region67: #{tpu_custom_call.1} parent=39 // pred_region
          %s692 = sand.u32 %s28, 1
          %s693 = scalar_lea.sflag [#allocation4], %s692
          %s694 = sand.u32 %s278, 1
          %s695 = smul.addr %s694, 256
          %s696 = scalar_lea.vmem [#allocation17], %s695
          %698 = vsyncadd %s693, 0
          %s699 = smul.addr %s28, 64
          %s700 = smul.addr %s699, 4
          %s701 = scalar_lea.hbm %s10, %s700
          %s702 = sshll.u32 %s701, 4
          %s703 = int_to_ptr.hbm [resolvable:$true] %s702
          %s704 = sshll.u32 %s696, 4
          %s705 = int_to_ptr.vmem [resolvable:$true] %s704
          %710 = dma.hbm_to_vmem [thread:$0]  %s703, 4096, %s705, %s693, 256, 256, 16
        $region68: #{tpu_custom_call.1} parent=39 // pred_fallthru
          _
        // Predicated region
        $region69: #{tpu_custom_call.1} parent=39 // pred_check
          %p711 = pneg %p314
        $region70: #{tpu_custom_call.1} parent=39 // pred_check_branch
          %713 = sbr.rel (%p711) target = $region72
        $region71: #{tpu_custom_call.1} parent=39 // pred_region
          %p714 = scmp.lt.s32.totalorder %s28, 1
          %s715 = scalar_select %p714, %s28, 1
          %s716 = smul.addr %s715, 4
          %s717 = scalar_lea.vmem %s11, %s716
        $region72: #{tpu_custom_call.1} parent=39 // pred_fallthru
          _
        // Predicated region
        $region73: #{tpu_custom_call.1} parent=39 // pred_check
          %p718 = pneg %p340
        $region74: #{tpu_custom_call.1} parent=39 // pred_check_branch
          %720 = sbr.rel (%p718) target = $region76
        $region75: #{tpu_custom_call.1} parent=39 // pred_region
          %s721 = sand.u32 %s28, 1
          %s722 = scalar_lea.sflag [#allocation4], %s721
          %s723 = sand.u32 %s330, 1
          %s724 = smul.addr %s723, 256
          %s725 = scalar_lea.vmem [#allocation18], %s724
          %727 = vsyncadd %s722, 0
          %s728 = smul.addr %s28, 64
          %s729 = smul.addr %s728, 4
          %s730 = scalar_lea.hbm %s12, %s729
          %s731 = sshll.u32 %s730, 4
          %s732 = int_to_ptr.hbm [resolvable:$true] %s731
          %s733 = sshll.u32 %s725, 4
          %s734 = int_to_ptr.vmem [resolvable:$true] %s733
          %739 = dma.hbm_to_vmem [thread:$0]  %s732, 4096, %s734, %s722, 64, 64, 4
        $region76: #{tpu_custom_call.1} parent=39 // pred_fallthru
          _
        // Predicated region
        $region77: #{tpu_custom_call.1} parent=39 // pred_check
          %p740 = pneg %p366
        $region78: #{tpu_custom_call.1} parent=39 // pred_check_branch
          %742 = sbr.rel (%p740) target = $region80
        $region79: #{tpu_custom_call.1} parent=39 // pred_region
          %s743 = sand.u32 %s28, 1
          %s744 = scalar_lea.sflag [#allocation4], %s743
          %s745 = sand.u32 %s356, 1
          %s746 = scalar_lea.vmem [#allocation19], %s745
          %748 = vsyncadd %s744, 0
          %s749 = scalar_lea.hbm %s13, %s28
          %s751 = sshll.u32 %s749, 4
          %s752 = int_to_ptr.hbm [resolvable:$true] %s751
          %s753 = sshll.u32 %s746, 4
          %s754 = int_to_ptr.vmem [resolvable:$true] %s753
          %756 = dma.hbm_to_vmem [thread:$0]  %s752, 16, %s754, %s744
        $region80: #{tpu_custom_call.1} parent=39 // pred_fallthru
          _
        // Predicated region
        $region81: #{tpu_custom_call.1} parent=39 // pred_check
          %p757 = pneg %p392
        $region82: #{tpu_custom_call.1} parent=39 // pred_check_branch
          %759 = sbr.rel (%p757) target = $region84
        $region83: #{tpu_custom_call.1} parent=39 // pred_region
          %s760 = sand.u32 %s28, 1
          %s761 = scalar_lea.sflag [#allocation4], %s760
          %s762 = sand.u32 %s382, 1
          %s763 = scalar_lea.vmem [#allocation20], %s762
          %765 = vsyncadd %s761, 0
          %s766 = scalar_lea.hbm %s14, %s28
          %s768 = sshll.u32 %s766, 4
          %s769 = int_to_ptr.hbm [resolvable:$true] %s768
          %s770 = sshll.u32 %s763, 4
          %s771 = int_to_ptr.vmem [resolvable:$true] %s770
          %773 = dma.hbm_to_vmem [thread:$0]  %s769, 16, %s771, %s761
        $region84: #{tpu_custom_call.1} parent=39 // pred_fallthru
          _
        // Predicated region
        $region85: #{tpu_custom_call.1} parent=39 // pred_check
          %p774 = pneg %p418
        $region86: #{tpu_custom_call.1} parent=39 // pred_check_branch
          %776 = sbr.rel (%p774) target = $region88
        $region87: #{tpu_custom_call.1} parent=39 // pred_region
          %s777 = sand.u32 %s28, 1
          %s778 = scalar_lea.sflag [#allocation4], %s777
          %s779 = sand.u32 %s408, 1
          %s780 = scalar_lea.vmem [#allocation21], %s779
          %782 = vsyncadd %s778, 0
          %s783 = scalar_lea.hbm %s15, %s28
          %s785 = sshll.u32 %s783, 4
          %s786 = int_to_ptr.hbm [resolvable:$true] %s785
          %s787 = sshll.u32 %s780, 4
          %s788 = int_to_ptr.vmem [resolvable:$true] %s787
          %790 = dma.hbm_to_vmem [thread:$0]  %s786, 16, %s788, %s778
        $region88: #{tpu_custom_call.1} parent=39 // pred_fallthru
          _
      $region40: #{tpu_custom_call.1} parent=5 // pred_fallthru
        _
      %p791 = scmp.le.s32.totalorder 1, %s28
      %p792 = scmp.lt.s32.totalorder %s28, 3
      %p793 = pnand %p791, %p792
      %p794 = pneg %p793
      // Predicated region
      $region89: #{tpu_custom_call.1} parent=5 // pred_check
        _
      $region90: #{tpu_custom_call.1} parent=5 // pred_check_branch
        %796 = sbr.rel (%p793) target = $region92
      $region91: #{tpu_custom_call.1} parent=5 // pred_region
        %s797 = ssub.s32 %s28, 1
        // Predicated region
        $region93: #{tpu_custom_call.1} parent=91 // pred_check
          %p798 = pneg %p49
        $region94: #{tpu_custom_call.1} parent=91 // pred_check_branch
          %800 = sbr.rel (%p798) target = $region96
        $region95: #{tpu_custom_call.1} parent=91 // pred_region
          %802 = dma.done [#allocation4], 512
        $region96: #{tpu_custom_call.1} parent=91 // pred_fallthru
          _
        // Predicated region
        $region97: #{tpu_custom_call.1} parent=91 // pred_check
          %p803 = pneg %p70
        $region98: #{tpu_custom_call.1} parent=91 // pred_check_branch
          %805 = sbr.rel (%p803) target = $region100
        $region99: #{tpu_custom_call.1} parent=91 // pred_region
          %807 = dma.done [#allocation7], 512
        $region100: #{tpu_custom_call.1} parent=91 // pred_fallthru
          _
        // Predicated region
        $region101: #{tpu_custom_call.1} parent=91 // pred_check
          %p808 = pneg %p91
        $region102: #{tpu_custom_call.1} parent=91 // pred_check_branch
          %810 = sbr.rel (%p808) target = $region104
        $region103: #{tpu_custom_call.1} parent=91 // pred_region
          %812 = dma.done [#allocation7], 16
        $region104: #{tpu_custom_call.1} parent=91 // pred_fallthru
          _
        // Predicated region
        $region105: #{tpu_custom_call.1} parent=91 // pred_check
          %p813 = pneg %p112
        $region106: #{tpu_custom_call.1} parent=91 // pred_check_branch
          %815 = sbr.rel (%p813) target = $region108
        $region107: #{tpu_custom_call.1} parent=91 // pred_region
          %817 = dma.done [#allocation10], 16
        $region108: #{tpu_custom_call.1} parent=91 // pred_fallthru
          _
        %s818 = sand.u32 %s33, 1
        %s819 = scalar_lea.sflag [#allocation4], %s818
        %s820 = sand.u32 %s125, 1
        %s821 = smul.addr %s820, 192
        %s822 = scalar_lea.vmem [#allocation11], %s821
        // Predicated region
        $region109: #{tpu_custom_call.1} parent=91 // pred_check
          %p823 = pneg %p138
        $region110: #{tpu_custom_call.1} parent=91 // pred_check_branch
          %825 = sbr.rel (%p823) target = $region112
        $region111: #{tpu_custom_call.1} parent=91 // pred_region
          %827 = dma.done %s819, 3072
        $region112: #{tpu_custom_call.1} parent=91 // pred_fallthru
          _
        %s828 = sand.u32 %s33, 1
        %s829 = scalar_lea.sflag [#allocation4], %s828
        %s830 = sand.u32 %s151, 1
        %s831 = smul.addr %s830, 3
        %s832 = scalar_lea.vmem [#allocation12], %s831
        // Predicated region
        $region113: #{tpu_custom_call.1} parent=91 // pred_check
          %p833 = pneg %p164
        $region114: #{tpu_custom_call.1} parent=91 // pred_check_branch
          %835 = sbr.rel (%p833) target = $region116
        $region115: #{tpu_custom_call.1} parent=91 // pred_region
          %837 = dma.done %s829, 48
        $region116: #{tpu_custom_call.1} parent=91 // pred_fallthru
          _
        %s838 = sand.u32 %s33, 1
        %s839 = scalar_lea.sflag [#allocation4], %s838
        %s840 = sand.u32 %s177, 1
        %s841 = smul.addr %s840, 64
        %s842 = scalar_lea.vmem [#allocation13], %s841
        // Predicated region
        $region117: #{tpu_custom_call.1} parent=91 // pred_check
          %p843 = pneg %p190
        $region118: #{tpu_custom_call.1} parent=91 // pred_check_branch
          %845 = sbr.rel (%p843) target = $region120
        $region119: #{tpu_custom_call.1} parent=91 // pred_region
          %847 = dma.done %s839, 1024
        $region120: #{tpu_custom_call.1} parent=91 // pred_fallthru
          _
        %s848 = sand.u32 %s33, 1
        %s849 = scalar_lea.sflag [#allocation4], %s848
        %s850 = sand.u32 %s203, 1
        %s851 = scalar_lea.vmem [#allocation14], %s850
        // Predicated region
        $region121: #{tpu_custom_call.1} parent=91 // pred_check
          %p852 = pneg %p216
        $region122: #{tpu_custom_call.1} parent=91 // pred_check_branch
          %854 = sbr.rel (%p852) target = $region124
        $region123: #{tpu_custom_call.1} parent=91 // pred_region
          %856 = dma.done %s849, 16
        $region124: #{tpu_custom_call.1} parent=91 // pred_fallthru
          _
        %s857 = sand.u32 %s33, 1
        %s858 = scalar_lea.sflag [#allocation4], %s857
        %s859 = sand.u32 %s229, 1
        %s860 = scalar_lea.vmem [#allocation15], %s859
        // Predicated region
        $region125: #{tpu_custom_call.1} parent=91 // pred_check
          %p861 = pneg %p242
        $region126: #{tpu_custom_call.1} parent=91 // pred_check_branch
          %863 = sbr.rel (%p861) target = $region128
        $region127: #{tpu_custom_call.1} parent=91 // pred_region
          %865 = dma.done %s858, 16
        $region128: #{tpu_custom_call.1} parent=91 // pred_fallthru
          _
        %s866 = sand.u32 %s33, 1
        %s867 = scalar_lea.sflag [#allocation4], %s866
        %s868 = sand.u32 %s255, 1
        %s869 = scalar_lea.vmem [#allocation16], %s868
        // Predicated region
        $region129: #{tpu_custom_call.1} parent=91 // pred_check
          %p870 = pneg %p268
        $region130: #{tpu_custom_call.1} parent=91 // pred_check_branch
          %872 = sbr.rel (%p870) target = $region132
        $region131: #{tpu_custom_call.1} parent=91 // pred_region
          %874 = dma.done %s867, 16
        $region132: #{tpu_custom_call.1} parent=91 // pred_fallthru
          _
        %s875 = sand.u32 %s33, 1
        %s876 = scalar_lea.sflag [#allocation4], %s875
        %s877 = sand.u32 %s281, 1
        %s878 = smul.addr %s877, 256
        %s879 = scalar_lea.vmem [#allocation17], %s878
        // Predicated region
        $region133: #{tpu_custom_call.1} parent=91 // pred_check
          %p880 = pneg %p294
        $region134: #{tpu_custom_call.1} parent=91 // pred_check_branch
          %882 = sbr.rel (%p880) target = $region136
        $region135: #{tpu_custom_call.1} parent=91 // pred_region
          %884 = dma.done %s876, 4096
        $region136: #{tpu_custom_call.1} parent=91 // pred_fallthru
          _
        %s885 = sand.u32 %s33, 1
        %s886 = scalar_lea.sflag [#allocation4], %s885
        %s887 = sand.u32 %s333, 1
        %s888 = smul.addr %s887, 256
        %s889 = scalar_lea.vmem [#allocation18], %s888
        // Predicated region
        $region137: #{tpu_custom_call.1} parent=91 // pred_check
          %p890 = pneg %p346
        $region138: #{tpu_custom_call.1} parent=91 // pred_check_branch
          %892 = sbr.rel (%p890) target = $region140
        $region139: #{tpu_custom_call.1} parent=91 // pred_region
          %894 = dma.done %s886, 4096
        $region140: #{tpu_custom_call.1} parent=91 // pred_fallthru
          _
        %s895 = sand.u32 %s33, 1
        %s896 = scalar_lea.sflag [#allocation4], %s895
        %s897 = sand.u32 %s359, 1
        %s898 = scalar_lea.vmem [#allocation19], %s897
        // Predicated region
        $region141: #{tpu_custom_call.1} parent=91 // pred_check
          %p899 = pneg %p372
        $region142: #{tpu_custom_call.1} parent=91 // pred_check_branch
          %901 = sbr.rel (%p899) target = $region144
        $region143: #{tpu_custom_call.1} parent=91 // pred_region
          %903 = dma.done %s896, 16
        $region144: #{tpu_custom_call.1} parent=91 // pred_fallthru
          _
        %s904 = sand.u32 %s33, 1
        %s905 = scalar_lea.sflag [#allocation4], %s904
        %s906 = sand.u32 %s385, 1
        %s907 = scalar_lea.vmem [#allocation20], %s906
        // Predicated region
        $region145: #{tpu_custom_call.1} parent=91 // pred_check
          %p908 = pneg %p398
        $region146: #{tpu_custom_call.1} parent=91 // pred_check_branch
          %910 = sbr.rel (%p908) target = $region148
        $region147: #{tpu_custom_call.1} parent=91 // pred_region
          %912 = dma.done %s905, 16
        $region148: #{tpu_custom_call.1} parent=91 // pred_fallthru
          _
        %s913 = sand.u32 %s33, 1
        %s914 = scalar_lea.sflag [#allocation4], %s913
        %s915 = sand.u32 %s411, 1
        %s916 = scalar_lea.vmem [#allocation21], %s915
        // Predicated region
        $region149: #{tpu_custom_call.1} parent=91 // pred_check
          %p917 = pneg %p424
        $region150: #{tpu_custom_call.1} parent=91 // pred_check_branch
          %919 = sbr.rel (%p917) target = $region152
        $region151: #{tpu_custom_call.1} parent=91 // pred_region
          %921 = dma.done %s914, 16
        $region152: #{tpu_custom_call.1} parent=91 // pred_fallthru
          _
        // Predicated region
        $region153: #{tpu_custom_call.1} parent=91 // pred_check
          %p922 = pneg %p445
        $region154: #{tpu_custom_call.1} parent=91 // pred_check_branch
          %924 = sbr.rel (%p922) target = $region156
        $region155: #{tpu_custom_call.1} parent=91 // pred_region
          %926 = dma.done [#allocation7], 8192
        $region156: #{tpu_custom_call.1} parent=91 // pred_fallthru
          _
        %p927 = pneg %p49
        %p928 = pneg %p46
        %p929 = pneg %p70
        %p930 = pneg %p67
        %p931 = pneg %p91
        %p932 = pneg %p88
        %p933 = pneg %p112
        %p934 = pneg %p109
        %s935 = sand.u32 %s33, 1
        %s936 = scalar_lea.sflag [#allocation4], %s935
        %s937 = sand.u32 %s125, 1
        %s938 = smul.addr %s937, 192
        %s939 = scalar_lea.vmem [#allocation11], %s938
        %p940 = pneg %p138
        %p941 = pneg %p135
        %s942 = sand.u32 %s33, 1
        %s943 = scalar_lea.sflag [#allocation4], %s942
        %s944 = sand.u32 %s151, 1
        %s945 = smul.addr %s944, 3
        %s946 = scalar_lea.vmem [#allocation12], %s945
        %p947 = pneg %p164
        %p948 = pneg %p161
        %s949 = sand.u32 %s33, 1
        %s950 = scalar_lea.sflag [#allocation4], %s949
        %s951 = sand.u32 %s177, 1
        %s952 = smul.addr %s951, 64
        %s953 = scalar_lea.vmem [#allocation13], %s952
        %p954 = pneg %p190
        %p955 = pneg %p187
        %s956 = sand.u32 %s33, 1
        %s957 = scalar_lea.sflag [#allocation4], %s956
        %s958 = sand.u32 %s203, 1
        %s959 = scalar_lea.vmem [#allocation14], %s958
        %p960 = pneg %p216
        %p961 = pneg %p213
        %s962 = sand.u32 %s33, 1
        %s963 = scalar_lea.sflag [#allocation4], %s962
        %s964 = sand.u32 %s229, 1
        %s965 = scalar_lea.vmem [#allocation15], %s964
        %p966 = pneg %p242
        %p967 = pneg %p239
        %s968 = sand.u32 %s33, 1
        %s969 = scalar_lea.sflag [#allocation4], %s968
        %s970 = sand.u32 %s255, 1
        %s971 = scalar_lea.vmem [#allocation16], %s970
        %p972 = pneg %p268
        %p973 = pneg %p265
        %s974 = sand.u32 %s33, 1
        %s975 = scalar_lea.sflag [#allocation4], %s974
        %s976 = sand.u32 %s281, 1
        %s977 = smul.addr %s976, 256
        %s978 = scalar_lea.vmem [#allocation17], %s977
        %p979 = pneg %p294
        %p980 = pneg %p291
        %p981 = scmp.lt.s32.totalorder %s33, 1
        %s982 = scalar_select %p981, %s33, 1
        %s983 = smul.addr %s982, 4
        %s984 = scalar_lea.vmem %s11, %s983
        %p985 = pneg %p320
        %p986 = pneg %p317
        %s987 = sand.u32 %s33, 1
        %s988 = scalar_lea.sflag [#allocation4], %s987
        %s989 = sand.u32 %s333, 1
        %s990 = smul.addr %s989, 256
        %s991 = scalar_lea.vmem [#allocation18], %s990
        %p992 = pneg %p346
        %p993 = pneg %p343
        %s994 = sand.u32 %s33, 1
        %s995 = scalar_lea.sflag [#allocation4], %s994
        %s996 = sand.u32 %s359, 1
        %s997 = scalar_lea.vmem [#allocation19], %s996
        %p998 = pneg %p372
        %p999 = pneg %p369
        %s1000 = sand.u32 %s33, 1
        %s1001 = scalar_lea.sflag [#allocation4], %s1000
        %s1002 = sand.u32 %s385, 1
        %s1003 = scalar_lea.vmem [#allocation20], %s1002
        %p1004 = pneg %p398
        %p1005 = pneg %p395
        %s1006 = sand.u32 %s33, 1
        %s1007 = scalar_lea.sflag [#allocation4], %s1006
        %s1008 = sand.u32 %s411, 1
        %s1009 = scalar_lea.vmem [#allocation21], %s1008
        %p1010 = pneg %p424
        %p1011 = pneg %p421
        %p1012 = pneg %p445
        %p1013 = pneg %p442
        %p1014 = pneg %p466
        %p1015 = pneg %p463
        %p1016 = pneg %p487
        %p1017 = pneg %p484
        %p1018 = scmp.lt.s32.totalorder %s33, 1
        %s1019 = scalar_select %p1018, %s33, 1
        %s1020 = smul.addr %s1019, 4
        %s1021 = scalar_lea.vmem %s11, %s1020
        %p1023 = scmp.eq.s32.totalorder %s33, 0
        // Predicated region
        $region157: #{tpu_custom_call.1} parent=91 // pred_check
          %p1024 = pneg %p1023
        $region158: #{tpu_custom_call.1} parent=91 // pred_check_branch
          %1026 = sbr.rel (%p1024) target = $region160
        $region159: #{tpu_custom_call.1} parent=91 // pred_region
          %v1027 = vld [vmem:[#allocation3] sm:$0xff]
          %v1028 = vld [vmem:[#allocation3 + $0x8] sm:$0xff]
          %v1029 = vld [vmem:[#allocation3 + $0x10] sm:$0xff]
          %v1030 = vld [vmem:[#allocation3 + $0x18] sm:$0xff]
          %v1031 = vld [vmem:[#allocation8] sm:$0x1]
          %v1032 = vld [vmem:[#allocation9] sm:$0x1]
          %1033 = vadd.xlane.f32.xlu0 %v1027
          %v1034 = vpop.xlane.xlu0 %1033
          %1035 = vadd.xlane.f32.xlu0 %v1028
          %v1036 = vpop.xlane.xlu0 %1035
          %1037 = vadd.xlane.f32.xlu0 %v1029
          %v1038 = vpop.xlane.xlu0 %1037
          %1039 = vadd.xlane.f32.xlu0 %v1030
          %v1040 = vpop.xlane.xlu0 %1039
          %v1041 = vrcp.pop 128.0
          %v1042 = vmul.f32 128.0, %v1041
          %v1043 = vsub.f32 1.0, %v1042
          %v1044 = vmul.f32 %v1041, %v1043
          %v1045 = vadd.f32 %v1041, %v1044
          %vm1046 = vweird.f32 %v1041
          %v1047 = vsel %vm1046, %v1041, %v1045
          %v1048 = vmul.f32 %v1034, %v1047
          %v1049 = vmul.f32 %v1036, %v1047
          %v1050 = vmul.f32 %v1038, %v1047
          %v1051 = vmul.f32 %v1040, %v1047
          %v1052 = vmul.f32 %v1027, %v1027
          %v1053 = vmul.f32 %v1028, %v1028
          %v1054 = vmul.f32 %v1029, %v1029
          %v1055 = vmul.f32 %v1030, %v1030
          %1056 = vadd.xlane.f32.xlu0 %v1052
          %v1057 = vpop.xlane.xlu0 %1056
          %1058 = vadd.xlane.f32.xlu0 %v1053
          %v1059 = vpop.xlane.xlu0 %1058
          %1060 = vadd.xlane.f32.xlu0 %v1054
          %v1061 = vpop.xlane.xlu0 %1060
          %1062 = vadd.xlane.f32.xlu0 %v1055
          %v1063 = vpop.xlane.xlu0 %1062
          %v1064 = vmul.f32 %v1057, %v1047
          %v1065 = vmul.f32 %v1059, %v1047
          %v1066 = vmul.f32 %v1061, %v1047
          %v1067 = vmul.f32 %v1063, %v1047
          %v1068 = vmul.f32 %v1048, %v1048
          %v1069 = vmul.f32 %v1049, %v1049
          %v1070 = vmul.f32 %v1050, %v1050
          %v1071 = vmul.f32 %v1051, %v1051
          %v1072 = vsub.f32 %v1064, %v1068
          %v1073 = vsub.f32 %v1065, %v1069
          %v1074 = vsub.f32 %v1066, %v1070
          %v1075 = vsub.f32 %v1067, %v1071
          %v1076 = vmax.f32 %v1072, 0.0
          %v1077 = vmax.f32 %v1073, 0.0
          %v1078 = vmax.f32 %v1074, 0.0
          %v1079 = vmax.f32 %v1075, 0.0
          %v1080 = vsub.f32 %v1027, %v1048
          %v1081 = vsub.f32 %v1028, %v1049
          %v1082 = vsub.f32 %v1029, %v1050
          %v1083 = vsub.f32 %v1030, %v1051
          %v1084 = vadd.f32 %v1076, 1e-12
          %v1085 = vadd.f32 %v1077, 1e-12
          %v1086 = vadd.f32 %v1078, 1e-12
          %v1087 = vadd.f32 %v1079, 1e-12
          %v1088 = vrsqrt.pop %v1084
          %v1089 = vmul.f32 %v1088, %v1084
          %v1090 = vmul.f32 %v1089, %v1088
          %v1091 = vmul.f32 0.5, %v1090
          %v1092 = vsub.f32 1.5, %v1091
          %v1093 = vmul.f32 %v1088, %v1092
          %vm1094 = vweird.f32 %v1084
          %vm1095 = vweird.f32 %v1088
          %vm1096 = vmor %vm1094, %vm1095
          %v1097 = vsel %vm1096, %v1088, %v1093
          %v1098 = vrsqrt.pop %v1085
          %v1099 = vmul.f32 %v1098, %v1085
          %v1100 = vmul.f32 %v1099, %v1098
          %v1101 = vmul.f32 0.5, %v1100
          %v1102 = vsub.f32 1.5, %v1101
          %v1103 = vmul.f32 %v1098, %v1102
          %vm1104 = vweird.f32 %v1085
          %vm1105 = vweird.f32 %v1098
          %vm1106 = vmor %vm1104, %vm1105
          %v1107 = vsel %vm1106, %v1098, %v1103
          %v1108 = vrsqrt.pop %v1086
          %v1109 = vmul.f32 %v1108, %v1086
          %v1110 = vmul.f32 %v1109, %v1108
          %v1111 = vmul.f32 0.5, %v1110
          %v1112 = vsub.f32 1.5, %v1111
          %v1113 = vmul.f32 %v1108, %v1112
          %vm1114 = vweird.f32 %v1086
          %vm1115 = vweird.f32 %v1108
          %vm1116 = vmor %vm1114, %vm1115
          %v1117 = vsel %vm1116, %v1108, %v1113
          %v1118 = vrsqrt.pop %v1087
          %v1119 = vmul.f32 %v1118, %v1087
          %v1120 = vmul.f32 %v1119, %v1118
          %v1121 = vmul.f32 0.5, %v1120
          %v1122 = vsub.f32 1.5, %v1121
          %v1123 = vmul.f32 %v1118, %v1122
          %vm1124 = vweird.f32 %v1087
          %vm1125 = vweird.f32 %v1118
          %vm1126 = vmor %vm1124, %vm1125
          %v1127 = vsel %vm1126, %v1118, %v1123
          %v1128 = vmul.f32 %v1080, %v1097
          %v1129 = vmul.f32 %v1081, %v1107
          %v1130 = vmul.f32 %v1082, %v1117
          %v1131 = vmul.f32 %v1083, %v1127
          %v1133 = vperm.slane %v1031, 0
          %v1135 = vmul.f32 %v1128, %v1133
          %v1136 = vmul.f32 %v1129, %v1133
          %v1137 = vmul.f32 %v1130, %v1133
          %v1138 = vmul.f32 %v1131, %v1133
          %v1140 = vperm.slane %v1032, 0
          %v1142 = vadd.f32 %v1135, %v1140
          %v1143 = vadd.f32 %v1136, %v1140
          %v1144 = vadd.f32 %v1137, %v1140
          %v1145 = vadd.f32 %v1138, %v1140
          %1146 = vst [vmem:[#allocation2] sm:$0xff] %v1142
          %1147 = vst [vmem:[#allocation2 + $0x8] sm:$0xff] %v1143
          %1148 = vst [vmem:[#allocation2 + $0x10] sm:$0xff] %v1144
          %1149 = vst [vmem:[#allocation2 + $0x18] sm:$0xff] %v1145
        $region160: #{tpu_custom_call.1} parent=91 // pred_fallthru
          _
        %v1150 = vld [vmem:[#allocation2] sm:$0xff]
        %v1151 = vld [vmem:[#allocation2 + $0x8] sm:$0xff]
        %v1152 = vld [vmem:[#allocation2 + $0x10] sm:$0xff]
        %v1153 = vld [vmem:[#allocation2 + $0x18] sm:$0xff]
        %v1154 = vpack.c.bf16 %v1151, %v1150
        %v1155 = vpack.c.bf16 %v1153, %v1152
        %v1156 = vld [vmem:[%s822] sm:$0xff]
        %v1157 = vld [vmem:[%s822 + $0x8] sm:$0xf]
        %v1158 = vld [vmem:[%s822 + $0xc] sm:$0xff]
        %v1159 = vld [vmem:[%s822 + $0x14] sm:$0xf]
        %v1160 = vld [vmem:[%s822 + $0x18] sm:$0xff]
        %v1161 = vld [vmem:[%s822 + $0x20] sm:$0xf]
        %v1162 = vld [vmem:[%s822 + $0x24] sm:$0xff]
        %v1163 = vld [vmem:[%s822 + $0x2c] sm:$0xf]
        %v1164 = vld [vmem:[%s822 + $0x30] sm:$0xff]
        %v1165 = vld [vmem:[%s822 + $0x38] sm:$0xf]
        %v1166 = vld [vmem:[%s822 + $0x3c] sm:$0xff]
        %v1167 = vld [vmem:[%s822 + $0x44] sm:$0xf]
        %v1168 = vld [vmem:[%s822 + $0x48] sm:$0xff]
        %v1169 = vld [vmem:[%s822 + $0x50] sm:$0xf]
        %v1170 = vld [vmem:[%s822 + $0x54] sm:$0xff]
        %v1171 = vld [vmem:[%s822 + $0x5c] sm:$0xf]
        %v1172 = vld [vmem:[%s822 + $0x60] sm:$0xff]
        %v1173 = vld [vmem:[%s822 + $0x68] sm:$0xf]
        %v1174 = vld [vmem:[%s822 + $0x6c] sm:$0xff]
        %v1175 = vld [vmem:[%s822 + $0x74] sm:$0xf]
        %v1176 = vld [vmem:[%s822 + $0x78] sm:$0xff]
        %v1177 = vld [vmem:[%s822 + $0x80] sm:$0xf]
        %v1178 = vld [vmem:[%s822 + $0x84] sm:$0xff]
        %v1179 = vld [vmem:[%s822 + $0x8c] sm:$0xf]
        %v1180 = vld [vmem:[%s822 + $0x90] sm:$0xff]
        %v1181 = vld [vmem:[%s822 + $0x98] sm:$0xf]
        %v1182 = vld [vmem:[%s822 + $0x9c] sm:$0xff]
        %v1183 = vld [vmem:[%s822 + $0xa4] sm:$0xf]
        %v1184 = vld [vmem:[%s822 + $0xa8] sm:$0xff]
        %v1185 = vld [vmem:[%s822 + $0xb0] sm:$0xf]
        %v1186 = vld [vmem:[%s822 + $0xb4] sm:$0xff]
        %v1187 = vld [vmem:[%s822 + $0xbc] sm:$0xf]
        %v1188 = vld [vmem:[%s832] sm:$0x7]
        %v1190 = vperm.slane %v1188, 0
        %v1191 = vperm.slane %v1188, 1
        %v1192 = vperm.slane %v1188, 2
        %v1228 = vunpack.c.l.b16 %v1156
        %v1229 = vunpack.c.h.b16 %v1156
        %v1230 = vunpack.c.l.b16 %v1157
        %v1231 = vunpack.c.l.b16 %v1158
        %v1232 = vunpack.c.h.b16 %v1158
        %v1233 = vunpack.c.l.b16 %v1159
        %v1234 = vunpack.c.l.b16 %v1160
        %v1235 = vunpack.c.h.b16 %v1160
        %v1236 = vunpack.c.l.b16 %v1161
        %v1237 = vunpack.c.l.b16 %v1162
        %v1238 = vunpack.c.h.b16 %v1162
        %v1239 = vunpack.c.l.b16 %v1163
        %v1240 = vunpack.c.l.b16 %v1164
        %v1241 = vunpack.c.h.b16 %v1164
        %v1242 = vunpack.c.l.b16 %v1165
        %v1243 = vunpack.c.l.b16 %v1166
        %v1244 = vunpack.c.h.b16 %v1166
        %v1245 = vunpack.c.l.b16 %v1167
        %v1246 = vunpack.c.l.b16 %v1168
        %v1247 = vunpack.c.h.b16 %v1168
        %v1248 = vunpack.c.l.b16 %v1169
        %v1249 = vunpack.c.l.b16 %v1170
        %v1250 = vunpack.c.h.b16 %v1170
        %v1251 = vunpack.c.l.b16 %v1171
        %v1252 = vunpack.c.l.b16 %v1172
        %v1253 = vunpack.c.h.b16 %v1172
        %v1254 = vunpack.c.l.b16 %v1173
        %v1255 = vunpack.c.l.b16 %v1174
        %v1256 = vunpack.c.h.b16 %v1174
        %v1257 = vunpack.c.l.b16 %v1175
        %v1258 = vunpack.c.l.b16 %v1176
        %v1259 = vunpack.c.h.b16 %v1176
        %v1260 = vunpack.c.l.b16 %v1177
        %v1261 = vunpack.c.l.b16 %v1178
        %v1262 = vunpack.c.h.b16 %v1178
        %v1263 = vunpack.c.l.b16 %v1179
        %v1264 = vunpack.c.l.b16 %v1180
        %v1265 = vunpack.c.h.b16 %v1180
        %v1266 = vunpack.c.l.b16 %v1181
        %v1267 = vunpack.c.l.b16 %v1182
        %v1268 = vunpack.c.h.b16 %v1182
        %v1269 = vunpack.c.l.b16 %v1183
        %v1270 = vunpack.c.l.b16 %v1184
        %v1271 = vunpack.c.h.b16 %v1184
        %v1272 = vunpack.c.l.b16 %v1185
        %v1273 = vunpack.c.l.b16 %v1186
        %v1274 = vunpack.c.h.b16 %v1186
        %v1275 = vunpack.c.l.b16 %v1187
        %v1276 = vpack.c.b16 %v1231, %v1228
        %v1277 = vpack.c.b16 %v1232, %v1229
        %v1278 = vpack.c.b16 %v1233, %v1230
        %v1279 = vpack.c.b16 %v1237, %v1234
        %v1280 = vpack.c.b16 %v1238, %v1235
        %v1281 = vpack.c.b16 %v1239, %v1236
        %v1282 = vpack.c.b16 %v1243, %v1240
        %v1283 = vpack.c.b16 %v1244, %v1241
        %v1284 = vpack.c.b16 %v1245, %v1242
        %v1285 = vpack.c.b16 %v1249, %v1246
        %v1286 = vpack.c.b16 %v1250, %v1247
        %v1287 = vpack.c.b16 %v1251, %v1248
        %v1288 = vpack.c.b16 %v1255, %v1252
        %v1289 = vpack.c.b16 %v1256, %v1253
        %v1290 = vpack.c.b16 %v1257, %v1254
        %v1291 = vpack.c.b16 %v1261, %v1258
        %v1292 = vpack.c.b16 %v1262, %v1259
        %v1293 = vpack.c.b16 %v1263, %v1260
        %v1294 = vpack.c.b16 %v1267, %v1264
        %v1295 = vpack.c.b16 %v1268, %v1265
        %v1296 = vpack.c.b16 %v1269, %v1266
        %v1297 = vpack.c.b16 %v1273, %v1270
        %v1298 = vpack.c.b16 %v1274, %v1271
        %v1299 = vpack.c.b16 %v1275, %v1272
        %1324 = vmatpush.bf16.msra.mxu0 %v1297
        %1325 = vmatpush.bf16.msra.mxu0 %v1294
        %1326 = vmatpush.bf16.msra.mxu0 %v1291
        %1327 = vmatpush.bf16.msra.mxu0 %v1288
        %1328 = vmatpush.bf16.msra.mxu0 %v1285
        %1329 = vmatpush.bf16.msra.mxu0 %v1282
        %1330 = vmatpush.bf16.msra.mxu0 %v1279
        %1331 = vmatpush.bf16.msra.mxu0 %v1276
        %1332 = vmatmul.bf16.gmra.mxu0 %v1154
        %v1333 = vpop.f32.mrf.mxu0
        %v1334 = vadd.f32 %v1190, %v1333
        %v1335 = vpop.f32.mrf.mxu0
        %v1336 = vadd.f32 %v1190, %v1335
        %1337 = vmatmul.bf16.gmra.mxu0 %v1155
        %v1338 = vpop.f32.mrf.mxu0
        %v1339 = vadd.f32 %v1190, %v1338
        %v1340 = vpop.f32.mrf.mxu0
        %v1341 = vadd.f32 %v1190, %v1340
        %1342 = vdwg.mxu0
        %1343 = vmatpush.bf16.msra.mxu0 %v1298
        %1344 = vmatpush.bf16.msra.mxu0 %v1295
        %1345 = vmatpush.bf16.msra.mxu0 %v1292
        %1346 = vmatpush.bf16.msra.mxu0 %v1289
        %1347 = vmatpush.bf16.msra.mxu0 %v1286
        %1348 = vmatpush.bf16.msra.mxu0 %v1283
        %1349 = vmatpush.bf16.msra.mxu0 %v1280
        %1350 = vmatpush.bf16.msra.mxu0 %v1277
        %1351 = vmatmul.bf16.gmra.mxu0 %v1154
        %v1352 = vpop.f32.mrf.mxu0
        %v1353 = vadd.f32 %v1191, %v1352
        %v1354 = vpop.f32.mrf.mxu0
        %v1355 = vadd.f32 %v1191, %v1354
        %1356 = vmatmul.bf16.gmra.mxu0 %v1155
        %v1357 = vpop.f32.mrf.mxu0
        %v1358 = vadd.f32 %v1191, %v1357
        %v1359 = vpop.f32.mrf.mxu0
        %v1360 = vadd.f32 %v1191, %v1359
        %1361 = vdwg.mxu0
        %1362 = vmatpush.bf16.msra.mxu0 %v1299
        %1363 = vmatpush.bf16.msra.mxu0 %v1296
        %1364 = vmatpush.bf16.msra.mxu0 %v1293
        %1365 = vmatpush.bf16.msra.mxu0 %v1290
        %1366 = vmatpush.bf16.msra.mxu0 %v1287
        %1367 = vmatpush.bf16.msra.mxu0 %v1284
        %1368 = vmatpush.bf16.msra.mxu0 %v1281
        %1369 = vmatpush.bf16.msra.mxu0 %v1278
        %1370 = vmatmul.bf16.gmra.mxu0 %v1154
        %v1371 = vpop.f32.mrf.mxu0
        %v1372 = vadd.f32 %v1192, %v1371
        %v1373 = vpop.f32.mrf.mxu0
        %v1374 = vadd.f32 %v1192, %v1373
        %1375 = vmatmul.bf16.gmra.mxu0 %v1155
        %v1376 = vpop.f32.mrf.mxu0
        %v1377 = vadd.f32 %v1192, %v1376
        %v1378 = vpop.f32.mrf.mxu0
        %v1379 = vadd.f32 %v1192, %v1378
        %1380 = vdwg.mxu0
        %1385 = vrot.lane.b32.xlu0 %v1334, 96
        %v1386 = vpop.permute.xlu0 %1385
        %1387 = vrot.lane.b32.xlu0 %v1336, 96
        %v1388 = vpop.permute.xlu0 %1387
        %1389 = vrot.lane.b32.xlu0 %v1339, 96
        %v1390 = vpop.permute.xlu0 %1389
        %1391 = vrot.lane.b32.xlu0 %v1341, 96
        %v1392 = vpop.permute.xlu0 %1391
        %1397 = vrot.lane.b32.xlu0 %v1334, 64
        %v1398 = vpop.permute.xlu0 %1397
        %1399 = vrot.lane.b32.xlu0 %v1336, 64
        %v1400 = vpop.permute.xlu0 %1399
        %1401 = vrot.lane.b32.xlu0 %v1339, 64
        %v1402 = vpop.permute.xlu0 %1401
        %1403 = vrot.lane.b32.xlu0 %v1341, 64
        %v1404 = vpop.permute.xlu0 %1403
        %1409 = vrot.lane.b32.xlu0 %v1334, 32
        %v1410 = vpop.permute.xlu0 %1409
        %1411 = vrot.lane.b32.xlu0 %v1336, 32
        %v1412 = vpop.permute.xlu0 %1411
        %1413 = vrot.lane.b32.xlu0 %v1339, 32
        %v1414 = vpop.permute.xlu0 %1413
        %1415 = vrot.lane.b32.xlu0 %v1341, 32
        %v1416 = vpop.permute.xlu0 %1415
        %1425 = vrot.lane.b32.xlu0 %v1353, 96
        %v1426 = vpop.permute.xlu0 %1425
        %1427 = vrot.lane.b32.xlu0 %v1355, 96
        %v1428 = vpop.permute.xlu0 %1427
        %1429 = vrot.lane.b32.xlu0 %v1358, 96
        %v1430 = vpop.permute.xlu0 %1429
        %1431 = vrot.lane.b32.xlu0 %v1360, 96
        %v1432 = vpop.permute.xlu0 %1431
        %1437 = vrot.lane.b32.xlu0 %v1353, 64
        %v1438 = vpop.permute.xlu0 %1437
        %1439 = vrot.lane.b32.xlu0 %v1355, 64
        %v1440 = vpop.permute.xlu0 %1439
        %1441 = vrot.lane.b32.xlu0 %v1358, 64
        %v1442 = vpop.permute.xlu0 %1441
        %1443 = vrot.lane.b32.xlu0 %v1360, 64
        %v1444 = vpop.permute.xlu0 %1443
        %1449 = vrot.lane.b32.xlu0 %v1353, 32
        %v1450 = vpop.permute.xlu0 %1449
        %1451 = vrot.lane.b32.xlu0 %v1355, 32
        %v1452 = vpop.permute.xlu0 %1451
        %1453 = vrot.lane.b32.xlu0 %v1358, 32
        %v1454 = vpop.permute.xlu0 %1453
        %1455 = vrot.lane.b32.xlu0 %v1360, 32
        %v1456 = vpop.permute.xlu0 %1455
        %1465 = vrot.lane.b32.xlu0 %v1372, 96
        %v1466 = vpop.permute.xlu0 %1465
        %1467 = vrot.lane.b32.xlu0 %v1374, 96
        %v1468 = vpop.permute.xlu0 %1467
        %1469 = vrot.lane.b32.xlu0 %v1377, 96
        %v1470 = vpop.permute.xlu0 %1469
        %1471 = vrot.lane.b32.xlu0 %v1379, 96
        %v1472 = vpop.permute.xlu0 %1471
        %1477 = vrot.lane.b32.xlu0 %v1372, 64
        %v1478 = vpop.permute.xlu0 %1477
        %1479 = vrot.lane.b32.xlu0 %v1374, 64
        %v1480 = vpop.permute.xlu0 %1479
        %1481 = vrot.lane.b32.xlu0 %v1377, 64
        %v1482 = vpop.permute.xlu0 %1481
        %1483 = vrot.lane.b32.xlu0 %v1379, 64
        %v1484 = vpop.permute.xlu0 %1483
        %1489 = vrot.lane.b32.xlu0 %v1372, 32
        %v1490 = vpop.permute.xlu0 %1489
        %1491 = vrot.lane.b32.xlu0 %v1374, 32
        %v1492 = vpop.permute.xlu0 %1491
        %1493 = vrot.lane.b32.xlu0 %v1377, 32
        %v1494 = vpop.permute.xlu0 %1493
        %1495 = vrot.lane.b32.xlu0 %v1379, 32
        %v1496 = vpop.permute.xlu0 %1495
        %v1501 = vrot.slane %v1398, 4
        %vm1502 = vcmask 1047556
        %v1503 = vsel %vm1502, %v1501, %v1334
        %v1504 = vrot.slane %v1334, 4
        %v1505 = vsel %vm1502, %v1398, %v1504
        %v1507 = vunpack.c.l.s4 1983009808
        %v1508 = vunpack.c.0.s8 %v1507
        %v1509 = vperm.slane %v1503, %v1508
        %v1511 = vunpack.c.l.s4 1983009808
        %v1512 = vunpack.c.0.s8 %v1511
        %v1513 = vperm.slane %v1505, %v1512
        %v1514 = vrot.slane %v1410, 4
        %v1515 = vsel %vm1502, %v1514, %v1386
        %v1516 = vrot.slane %v1386, 4
        %v1517 = vsel %vm1502, %v1410, %v1516
        %v1519 = vunpack.c.l.s4 1983009808
        %v1520 = vunpack.c.0.s8 %v1519
        %v1521 = vperm.slane %v1515, %v1520
        %v1523 = vunpack.c.l.s4 1983009808
        %v1524 = vunpack.c.0.s8 %v1523
        %v1525 = vperm.slane %v1517, %v1524
        %v1526 = vrot.slane %v1438, 4
        %v1527 = vsel %vm1502, %v1526, %v1353
        %v1528 = vrot.slane %v1353, 4
        %v1529 = vsel %vm1502, %v1438, %v1528
        %v1531 = vunpack.c.l.s4 1983009808
        %v1532 = vunpack.c.0.s8 %v1531
        %v1533 = vperm.slane %v1527, %v1532
        %v1535 = vunpack.c.l.s4 1983009808
        %v1536 = vunpack.c.0.s8 %v1535
        %v1537 = vperm.slane %v1529, %v1536
        %v1538 = vrot.slane %v1450, 4
        %v1539 = vsel %vm1502, %v1538, %v1426
        %v1540 = vrot.slane %v1426, 4
        %v1541 = vsel %vm1502, %v1450, %v1540
        %v1543 = vunpack.c.l.s4 1983009808
        %v1544 = vunpack.c.0.s8 %v1543
        %v1545 = vperm.slane %v1539, %v1544
        %v1547 = vunpack.c.l.s4 1983009808
        %v1548 = vunpack.c.0.s8 %v1547
        %v1549 = vperm.slane %v1541, %v1548
        %v1550 = vrot.slane %v1521, 4
        %v1551 = vsel %vm1502, %v1550, %v1509
        %v1552 = vrot.slane %v1509, 4
        %v1553 = vsel %vm1502, %v1521, %v1552
        %v1555 = vunpack.c.l.s4 1934713408
        %v1556 = vunpack.c.0.s8 %v1555
        %v1557 = vperm.slane %v1551, %v1556
        %v1559 = vunpack.c.l.s4 1934713408
        %v1560 = vunpack.c.0.s8 %v1559
        %v1561 = vperm.slane %v1553, %v1560
        %v1562 = vrot.slane %v1525, 4
        %v1563 = vsel %vm1502, %v1562, %v1513
        %v1564 = vrot.slane %v1513, 4
        %v1565 = vsel %vm1502, %v1525, %v1564
        %v1567 = vunpack.c.l.s4 1934713408
        %v1568 = vunpack.c.0.s8 %v1567
        %v1569 = vperm.slane %v1563, %v1568
        %v1571 = vunpack.c.l.s4 1934713408
        %v1572 = vunpack.c.0.s8 %v1571
        %v1573 = vperm.slane %v1565, %v1572
        %v1574 = vrot.slane %v1545, 4
        %v1575 = vsel %vm1502, %v1574, %v1533
        %v1576 = vrot.slane %v1533, 4
        %v1577 = vsel %vm1502, %v1545, %v1576
        %v1579 = vunpack.c.l.s4 1934713408
        %v1580 = vunpack.c.0.s8 %v1579
        %v1581 = vperm.slane %v1575, %v1580
        %v1583 = vunpack.c.l.s4 1934713408
        %v1584 = vunpack.c.0.s8 %v1583
        %v1585 = vperm.slane %v1577, %v1584
        %v1586 = vrot.slane %v1549, 4
        %v1587 = vsel %vm1502, %v1586, %v1537
        %v1588 = vrot.slane %v1537, 4
        %v1589 = vsel %vm1502, %v1549, %v1588
        %v1591 = vunpack.c.l.s4 1934713408
        %v1592 = vunpack.c.0.s8 %v1591
        %v1593 = vperm.slane %v1587, %v1592
        %v1595 = vunpack.c.l.s4 1934713408
        %v1596 = vunpack.c.0.s8 %v1595
        %v1597 = vperm.slane %v1589, %v1596
        %v1598 = vrot.slane %v1581, 4
        %v1599 = vsel %vm1502, %v1598, %v1557
        %v1600 = vrot.slane %v1557, 4
        %v1601 = vsel %vm1502, %v1581, %v1600
        %v1602 = vrot.slane %v1585, 4
        %v1603 = vsel %vm1502, %v1602, %v1561
        %v1604 = vrot.slane %v1561, 4
        %v1605 = vsel %vm1502, %v1585, %v1604
        %v1606 = vrot.slane %v1593, 4
        %v1607 = vsel %vm1502, %v1606, %v1569
        %v1608 = vrot.slane %v1569, 4
        %v1609 = vsel %vm1502, %v1593, %v1608
        %v1610 = vrot.slane %v1597, 4
        %v1611 = vsel %vm1502, %v1610, %v1573
        %v1612 = vrot.slane %v1573, 4
        %v1613 = vsel %vm1502, %v1597, %v1612
        %v1614 = vrot.slane %v1478, 4
        %v1615 = vsel %vm1502, %v1614, %v1372
        %v1616 = vrot.slane %v1372, 4
        %v1617 = vsel %vm1502, %v1478, %v1616
        %v1619 = vunpack.c.l.s4 1983009808
        %v1620 = vunpack.c.0.s8 %v1619
        %v1621 = vperm.slane %v1615, %v1620
        %v1623 = vunpack.c.l.s4 1983009808
        %v1624 = vunpack.c.0.s8 %v1623
        %v1625 = vperm.slane %v1617, %v1624
        %v1626 = vrot.slane %v1490, 4
        %v1627 = vsel %vm1502, %v1626, %v1466
        %v1628 = vrot.slane %v1466, 4
        %v1629 = vsel %vm1502, %v1490, %v1628
        %v1631 = vunpack.c.l.s4 1983009808
        %v1632 = vunpack.c.0.s8 %v1631
        %v1633 = vperm.slane %v1627, %v1632
        %v1635 = vunpack.c.l.s4 1983009808
        %v1636 = vunpack.c.0.s8 %v1635
        %v1637 = vperm.slane %v1629, %v1636
        %v1638 = vrot.slane %v1633, 4
        %v1639 = vsel %vm1502, %v1638, %v1621
        %v1640 = vrot.slane %v1621, 4
        %v1641 = vsel %vm1502, %v1633, %v1640
        %v1643 = vunpack.c.l.s4 1934713408
        %v1644 = vunpack.c.0.s8 %v1643
        %v1645 = vperm.slane %v1639, %v1644
        %v1647 = vunpack.c.l.s4 1934713408
        %v1648 = vunpack.c.0.s8 %v1647
        %v1649 = vperm.slane %v1641, %v1648
        %v1650 = vrot.slane %v1637, 4
        %v1651 = vsel %vm1502, %v1650, %v1625
        %v1652 = vrot.slane %v1625, 4
        %v1653 = vsel %vm1502, %v1637, %v1652
        %v1655 = vunpack.c.l.s4 1934713408
        %v1656 = vunpack.c.0.s8 %v1655
        %v1657 = vperm.slane %v1651, %v1656
        %v1659 = vunpack.c.l.s4 1934713408
        %v1660 = vunpack.c.0.s8 %v1659
        %v1661 = vperm.slane %v1653, %v1660
        %v1662 = vrot.slane %v1645, 4
        %v1663 = vsel %vm1502, 0.0, %v1662
        %v1664 = vrot.slane %v1649, 4
        %v1665 = vsel %vm1502, 0.0, %v1664
        %v1666 = vrot.slane %v1657, 4
        %v1667 = vsel %vm1502, 0.0, %v1666
        %v1668 = vrot.slane %v1661, 4
        %v1669 = vsel %vm1502, 0.0, %v1668
        %v1670 = vrot.slane %v1400, 4
        %v1671 = vsel %vm1502, %v1670, %v1336
        %v1672 = vrot.slane %v1336, 4
        %v1673 = vsel %vm1502, %v1400, %v1672
        %v1675 = vunpack.c.l.s4 1983009808
        %v1676 = vunpack.c.0.s8 %v1675
        %v1677 = vperm.slane %v1671, %v1676
        %v1679 = vunpack.c.l.s4 1983009808
        %v1680 = vunpack.c.0.s8 %v1679
        %v1681 = vperm.slane %v1673, %v1680
        %v1682 = vrot.slane %v1412, 4
        %v1683 = vsel %vm1502, %v1682, %v1388
        %v1684 = vrot.slane %v1388, 4
        %v1685 = vsel %vm1502, %v1412, %v1684
        %v1687 = vunpack.c.l.s4 1983009808
        %v1688 = vunpack.c.0.s8 %v1687
        %v1689 = vperm.slane %v1683, %v1688
        %v1691 = vunpack.c.l.s4 1983009808
        %v1692 = vunpack.c.0.s8 %v1691
        %v1693 = vperm.slane %v1685, %v1692
        %v1694 = vrot.slane %v1440, 4
        %v1695 = vsel %vm1502, %v1694, %v1355
        %v1696 = vrot.slane %v1355, 4
        %v1697 = vsel %vm1502, %v1440, %v1696
        %v1699 = vunpack.c.l.s4 1983009808
        %v1700 = vunpack.c.0.s8 %v1699
        %v1701 = vperm.slane %v1695, %v1700
        %v1703 = vunpack.c.l.s4 1983009808
        %v1704 = vunpack.c.0.s8 %v1703
        %v1705 = vperm.slane %v1697, %v1704
        %v1706 = vrot.slane %v1452, 4
        %v1707 = vsel %vm1502, %v1706, %v1428
        %v1708 = vrot.slane %v1428, 4
        %v1709 = vsel %vm1502, %v1452, %v1708
        %v1711 = vunpack.c.l.s4 1983009808
        %v1712 = vunpack.c.0.s8 %v1711
        %v1713 = vperm.slane %v1707, %v1712
        %v1715 = vunpack.c.l.s4 1983009808
        %v1716 = vunpack.c.0.s8 %v1715
        %v1717 = vperm.slane %v1709, %v1716
        %v1718 = vrot.slane %v1689, 4
        %v1719 = vsel %vm1502, %v1718, %v1677
        %v1720 = vrot.slane %v1677, 4
        %v1721 = vsel %vm1502, %v1689, %v1720
        %v1723 = vunpack.c.l.s4 1934713408
        %v1724 = vunpack.c.0.s8 %v1723
        %v1725 = vperm.slane %v1719, %v1724
        %v1727 = vunpack.c.l.s4 1934713408
        %v1728 = vunpack.c.0.s8 %v1727
        %v1729 = vperm.slane %v1721, %v1728
        %v1730 = vrot.slane %v1693, 4
        %v1731 = vsel %vm1502, %v1730, %v1681
        %v1732 = vrot.slane %v1681, 4
        %v1733 = vsel %vm1502, %v1693, %v1732
        %v1735 = vunpack.c.l.s4 1934713408
        %v1736 = vunpack.c.0.s8 %v1735
        %v1737 = vperm.slane %v1731, %v1736
        %v1739 = vunpack.c.l.s4 1934713408
        %v1740 = vunpack.c.0.s8 %v1739
        %v1741 = vperm.slane %v1733, %v1740
        %v1742 = vrot.slane %v1713, 4
        %v1743 = vsel %vm1502, %v1742, %v1701
        %v1744 = vrot.slane %v1701, 4
        %v1745 = vsel %vm1502, %v1713, %v1744
        %v1747 = vunpack.c.l.s4 1934713408
        %v1748 = vunpack.c.0.s8 %v1747
        %v1749 = vperm.slane %v1743, %v1748
        %v1751 = vunpack.c.l.s4 1934713408
        %v1752 = vunpack.c.0.s8 %v1751
        %v1753 = vperm.slane %v1745, %v1752
        %v1754 = vrot.slane %v1717, 4
        %v1755 = vsel %vm1502, %v1754, %v1705
        %v1756 = vrot.slane %v1705, 4
        %v1757 = vsel %vm1502, %v1717, %v1756
        %v1759 = vunpack.c.l.s4 1934713408
        %v1760 = vunpack.c.0.s8 %v1759
        %v1761 = vperm.slane %v1755, %v1760
        %v1763 = vunpack.c.l.s4 1934713408
        %v1764 = vunpack.c.0.s8 %v1763
        %v1765 = vperm.slane %v1757, %v1764
        %v1766 = vrot.slane %v1749, 4
        %v1767 = vsel %vm1502, %v1766, %v1725
        %v1768 = vrot.slane %v1725, 4
        %v1769 = vsel %vm1502, %v1749, %v1768
        %v1770 = vrot.slane %v1753, 4
        %v1771 = vsel %vm1502, %v1770, %v1729
        %v1772 = vrot.slane %v1729, 4
        %v1773 = vsel %vm1502, %v1753, %v1772
        %v1774 = vrot.slane %v1761, 4
        %v1775 = vsel %vm1502, %v1774, %v1737
        %v1776 = vrot.slane %v1737, 4
        %v1777 = vsel %vm1502, %v1761, %v1776
        %v1778 = vrot.slane %v1765, 4
        %v1779 = vsel %vm1502, %v1778, %v1741
        %v1780 = vrot.slane %v1741, 4
        %v1781 = vsel %vm1502, %v1765, %v1780
        %v1782 = vrot.slane %v1480, 4
        %v1783 = vsel %vm1502, %v1782, %v1374
        %v1784 = vrot.slane %v1374, 4
        %v1785 = vsel %vm1502, %v1480, %v1784
        %v1787 = vunpack.c.l.s4 1983009808
        %v1788 = vunpack.c.0.s8 %v1787
        %v1789 = vperm.slane %v1783, %v1788
        %v1791 = vunpack.c.l.s4 1983009808
        %v1792 = vunpack.c.0.s8 %v1791
        %v1793 = vperm.slane %v1785, %v1792
        %v1794 = vrot.slane %v1492, 4
        %v1795 = vsel %vm1502, %v1794, %v1468
        %v1796 = vrot.slane %v1468, 4
        %v1797 = vsel %vm1502, %v1492, %v1796
        %v1799 = vunpack.c.l.s4 1983009808
        %v1800 = vunpack.c.0.s8 %v1799
        %v1801 = vperm.slane %v1795, %v1800
        %v1803 = vunpack.c.l.s4 1983009808
        %v1804 = vunpack.c.0.s8 %v1803
        %v1805 = vperm.slane %v1797, %v1804
        %v1806 = vrot.slane %v1801, 4
        %v1807 = vsel %vm1502, %v1806, %v1789
        %v1808 = vrot.slane %v1789, 4
        %v1809 = vsel %vm1502, %v1801, %v1808
        %v1811 = vunpack.c.l.s4 1934713408
        %v1812 = vunpack.c.0.s8 %v1811
        %v1813 = vperm.slane %v1807, %v1812
        %v1815 = vunpack.c.l.s4 1934713408
        %v1816 = vunpack.c.0.s8 %v1815
        %v1817 = vperm.slane %v1809, %v1816
        %v1818 = vrot.slane %v1805, 4
        %v1819 = vsel %vm1502, %v1818, %v1793
        %v1820 = vrot.slane %v1793, 4
        %v1821 = vsel %vm1502, %v1805, %v1820
        %v1823 = vunpack.c.l.s4 1934713408
        %v1824 = vunpack.c.0.s8 %v1823
        %v1825 = vperm.slane %v1819, %v1824
        %v1827 = vunpack.c.l.s4 1934713408
        %v1828 = vunpack.c.0.s8 %v1827
        %v1829 = vperm.slane %v1821, %v1828
        %v1830 = vrot.slane %v1813, 4
        %v1831 = vsel %vm1502, 0.0, %v1830
        %v1832 = vrot.slane %v1817, 4
        %v1833 = vsel %vm1502, 0.0, %v1832
        %v1834 = vrot.slane %v1825, 4
        %v1835 = vsel %vm1502, 0.0, %v1834
        %v1836 = vrot.slane %v1829, 4
        %v1837 = vsel %vm1502, 0.0, %v1836
        %v1838 = vrot.slane %v1402, 4
        %v1839 = vsel %vm1502, %v1838, %v1339
        %v1840 = vrot.slane %v1339, 4
        %v1841 = vsel %vm1502, %v1402, %v1840
        %v1843 = vunpack.c.l.s4 1983009808
        %v1844 = vunpack.c.0.s8 %v1843
        %v1845 = vperm.slane %v1839, %v1844
        %v1847 = vunpack.c.l.s4 1983009808
        %v1848 = vunpack.c.0.s8 %v1847
        %v1849 = vperm.slane %v1841, %v1848
        %v1850 = vrot.slane %v1414, 4
        %v1851 = vsel %vm1502, %v1850, %v1390
        %v1852 = vrot.slane %v1390, 4
        %v1853 = vsel %vm1502, %v1414, %v1852
        %v1855 = vunpack.c.l.s4 1983009808
        %v1856 = vunpack.c.0.s8 %v1855
        %v1857 = vperm.slane %v1851, %v1856
        %v1859 = vunpack.c.l.s4 1983009808
        %v1860 = vunpack.c.0.s8 %v1859
        %v1861 = vperm.slane %v1853, %v1860
        %v1862 = vrot.slane %v1442, 4
        %v1863 = vsel %vm1502, %v1862, %v1358
        %v1864 = vrot.slane %v1358, 4
        %v1865 = vsel %vm1502, %v1442, %v1864
        %v1867 = vunpack.c.l.s4 1983009808
        %v1868 = vunpack.c.0.s8 %v1867
        %v1869 = vperm.slane %v1863, %v1868
        %v1871 = vunpack.c.l.s4 1983009808
        %v1872 = vunpack.c.0.s8 %v1871
        %v1873 = vperm.slane %v1865, %v1872
        %v1874 = vrot.slane %v1454, 4
        %v1875 = vsel %vm1502, %v1874, %v1430
        %v1876 = vrot.slane %v1430, 4
        %v1877 = vsel %vm1502, %v1454, %v1876
        %v1879 = vunpack.c.l.s4 1983009808
        %v1880 = vunpack.c.0.s8 %v1879
        %v1881 = vperm.slane %v1875, %v1880
        %v1883 = vunpack.c.l.s4 1983009808
        %v1884 = vunpack.c.0.s8 %v1883
        %v1885 = vperm.slane %v1877, %v1884
        %v1886 = vrot.slane %v1857, 4
        %v1887 = vsel %vm1502, %v1886, %v1845
        %v1888 = vrot.slane %v1845, 4
        %v1889 = vsel %vm1502, %v1857, %v1888
        %v1891 = vunpack.c.l.s4 1934713408
        %v1892 = vunpack.c.0.s8 %v1891
        %v1893 = vperm.slane %v1887, %v1892
        %v1895 = vunpack.c.l.s4 1934713408
        %v1896 = vunpack.c.0.s8 %v1895
        %v1897 = vperm.slane %v1889, %v1896
        %v1898 = vrot.slane %v1861, 4
        %v1899 = vsel %vm1502, %v1898, %v1849
        %v1900 = vrot.slane %v1849, 4
        %v1901 = vsel %vm1502, %v1861, %v1900
        %v1903 = vunpack.c.l.s4 1934713408
        %v1904 = vunpack.c.0.s8 %v1903
        %v1905 = vperm.slane %v1899, %v1904
        %v1907 = vunpack.c.l.s4 1934713408
        %v1908 = vunpack.c.0.s8 %v1907
        %v1909 = vperm.slane %v1901, %v1908
        %v1910 = vrot.slane %v1881, 4
        %v1911 = vsel %vm1502, %v1910, %v1869
        %v1912 = vrot.slane %v1869, 4
        %v1913 = vsel %vm1502, %v1881, %v1912
        %v1915 = vunpack.c.l.s4 1934713408
        %v1916 = vunpack.c.0.s8 %v1915
        %v1917 = vperm.slane %v1911, %v1916
        %v1919 = vunpack.c.l.s4 1934713408
        %v1920 = vunpack.c.0.s8 %v1919
        %v1921 = vperm.slane %v1913, %v1920
        %v1922 = vrot.slane %v1885, 4
        %v1923 = vsel %vm1502, %v1922, %v1873
        %v1924 = vrot.slane %v1873, 4
        %v1925 = vsel %vm1502, %v1885, %v1924
        %v1927 = vunpack.c.l.s4 1934713408
        %v1928 = vunpack.c.0.s8 %v1927
        %v1929 = vperm.slane %v1923, %v1928
        %v1931 = vunpack.c.l.s4 1934713408
        %v1932 = vunpack.c.0.s8 %v1931
        %v1933 = vperm.slane %v1925, %v1932
        %v1934 = vrot.slane %v1917, 4
        %v1935 = vsel %vm1502, %v1934, %v1893
        %v1936 = vrot.slane %v1893, 4
        %v1937 = vsel %vm1502, %v1917, %v1936
        %v1938 = vrot.slane %v1921, 4
        %v1939 = vsel %vm1502, %v1938, %v1897
        %v1940 = vrot.slane %v1897, 4
        %v1941 = vsel %vm1502, %v1921, %v1940
        %v1942 = vrot.slane %v1929, 4
        %v1943 = vsel %vm1502, %v1942, %v1905
        %v1944 = vrot.slane %v1905, 4
        %v1945 = vsel %vm1502, %v1929, %v1944
        %v1946 = vrot.slane %v1933, 4
        %v1947 = vsel %vm1502, %v1946, %v1909
        %v1948 = vrot.slane %v1909, 4
        %v1949 = vsel %vm1502, %v1933, %v1948
        %v1950 = vrot.slane %v1482, 4
        %v1951 = vsel %vm1502, %v1950, %v1377
        %v1952 = vrot.slane %v1377, 4
        %v1953 = vsel %vm1502, %v1482, %v1952
        %v1955 = vunpack.c.l.s4 1983009808
        %v1956 = vunpack.c.0.s8 %v1955
        %v1957 = vperm.slane %v1951, %v1956
        %v1959 = vunpack.c.l.s4 1983009808
        %v1960 = vunpack.c.0.s8 %v1959
        %v1961 = vperm.slane %v1953, %v1960
        %v1962 = vrot.slane %v1494, 4
        %v1963 = vsel %vm1502, %v1962, %v1470
        %v1964 = vrot.slane %v1470, 4
        %v1965 = vsel %vm1502, %v1494, %v1964
        %v1967 = vunpack.c.l.s4 1983009808
        %v1968 = vunpack.c.0.s8 %v1967
        %v1969 = vperm.slane %v1963, %v1968
        %v1971 = vunpack.c.l.s4 1983009808
        %v1972 = vunpack.c.0.s8 %v1971
        %v1973 = vperm.slane %v1965, %v1972
        %v1974 = vrot.slane %v1969, 4
        %v1975 = vsel %vm1502, %v1974, %v1957
        %v1976 = vrot.slane %v1957, 4
        %v1977 = vsel %vm1502, %v1969, %v1976
        %v1979 = vunpack.c.l.s4 1934713408
        %v1980 = vunpack.c.0.s8 %v1979
        %v1981 = vperm.slane %v1975, %v1980
        %v1983 = vunpack.c.l.s4 1934713408
        %v1984 = vunpack.c.0.s8 %v1983
        %v1985 = vperm.slane %v1977, %v1984
        %v1986 = vrot.slane %v1973, 4
        %v1987 = vsel %vm1502, %v1986, %v1961
        %v1988 = vrot.slane %v1961, 4
        %v1989 = vsel %vm1502, %v1973, %v1988
        %v1991 = vunpack.c.l.s4 1934713408
        %v1992 = vunpack.c.0.s8 %v1991
        %v1993 = vperm.slane %v1987, %v1992
        %v1995 = vunpack.c.l.s4 1934713408
        %v1996 = vunpack.c.0.s8 %v1995
        %v1997 = vperm.slane %v1989, %v1996
        %v1998 = vrot.slane %v1981, 4
        %v1999 = vsel %vm1502, 0.0, %v1998
        %v2000 = vrot.slane %v1985, 4
        %v2001 = vsel %vm1502, 0.0, %v2000
        %v2002 = vrot.slane %v1993, 4
        %v2003 = vsel %vm1502, 0.0, %v2002
        %v2004 = vrot.slane %v1997, 4
        %v2005 = vsel %vm1502, 0.0, %v2004
        %v2006 = vrot.slane %v1404, 4
        %v2007 = vsel %vm1502, %v2006, %v1341
        %v2008 = vrot.slane %v1341, 4
        %v2009 = vsel %vm1502, %v1404, %v2008
        %v2011 = vunpack.c.l.s4 1983009808
        %v2012 = vunpack.c.0.s8 %v2011
        %v2013 = vperm.slane %v2007, %v2012
        %v2015 = vunpack.c.l.s4 1983009808
        %v2016 = vunpack.c.0.s8 %v2015
        %v2017 = vperm.slane %v2009, %v2016
        %v2018 = vrot.slane %v1416, 4
        %v2019 = vsel %vm1502, %v2018, %v1392
        %v2020 = vrot.slane %v1392, 4
        %v2021 = vsel %vm1502, %v1416, %v2020
        %v2023 = vunpack.c.l.s4 1983009808
        %v2024 = vunpack.c.0.s8 %v2023
        %v2025 = vperm.slane %v2019, %v2024
        %v2027 = vunpack.c.l.s4 1983009808
        %v2028 = vunpack.c.0.s8 %v2027
        %v2029 = vperm.slane %v2021, %v2028
        %v2030 = vrot.slane %v1444, 4
        %v2031 = vsel %vm1502, %v2030, %v1360
        %v2032 = vrot.slane %v1360, 4
        %v2033 = vsel %vm1502, %v1444, %v2032
        %v2035 = vunpack.c.l.s4 1983009808
        %v2036 = vunpack.c.0.s8 %v2035
        %v2037 = vperm.slane %v2031, %v2036
        %v2039 = vunpack.c.l.s4 1983009808
        %v2040 = vunpack.c.0.s8 %v2039
        %v2041 = vperm.slane %v2033, %v2040
        %v2042 = vrot.slane %v1456, 4
        %v2043 = vsel %vm1502, %v2042, %v1432
        %v2044 = vrot.slane %v1432, 4
        %v2045 = vsel %vm1502, %v1456, %v2044
        %v2047 = vunpack.c.l.s4 1983009808
        %v2048 = vunpack.c.0.s8 %v2047
        %v2049 = vperm.slane %v2043, %v2048
        %v2051 = vunpack.c.l.s4 1983009808
        %v2052 = vunpack.c.0.s8 %v2051
        %v2053 = vperm.slane %v2045, %v2052
        %v2054 = vrot.slane %v2025, 4
        %v2055 = vsel %vm1502, %v2054, %v2013
        %v2056 = vrot.slane %v2013, 4
        %v2057 = vsel %vm1502, %v2025, %v2056
        %v2059 = vunpack.c.l.s4 1934713408
        %v2060 = vunpack.c.0.s8 %v2059
        %v2061 = vperm.slane %v2055, %v2060
        %v2063 = vunpack.c.l.s4 1934713408
        %v2064 = vunpack.c.0.s8 %v2063
        %v2065 = vperm.slane %v2057, %v2064
        %v2066 = vrot.slane %v2029, 4
        %v2067 = vsel %vm1502, %v2066, %v2017
        %v2068 = vrot.slane %v2017, 4
        %v2069 = vsel %vm1502, %v2029, %v2068
        %v2071 = vunpack.c.l.s4 1934713408
        %v2072 = vunpack.c.0.s8 %v2071
        %v2073 = vperm.slane %v2067, %v2072
        %v2075 = vunpack.c.l.s4 1934713408
        %v2076 = vunpack.c.0.s8 %v2075
        %v2077 = vperm.slane %v2069, %v2076
        %v2078 = vrot.slane %v2049, 4
        %v2079 = vsel %vm1502, %v2078, %v2037
        %v2080 = vrot.slane %v2037, 4
        %v2081 = vsel %vm1502, %v2049, %v2080
        %v2083 = vunpack.c.l.s4 1934713408
        %v2084 = vunpack.c.0.s8 %v2083
        %v2085 = vperm.slane %v2079, %v2084
        %v2087 = vunpack.c.l.s4 1934713408
        %v2088 = vunpack.c.0.s8 %v2087
        %v2089 = vperm.slane %v2081, %v2088
        %v2090 = vrot.slane %v2053, 4
        %v2091 = vsel %vm1502, %v2090, %v2041
        %v2092 = vrot.slane %v2041, 4
        %v2093 = vsel %vm1502, %v2053, %v2092
        %v2095 = vunpack.c.l.s4 1934713408
        %v2096 = vunpack.c.0.s8 %v2095
        %v2097 = vperm.slane %v2091, %v2096
        %v2099 = vunpack.c.l.s4 1934713408
        %v2100 = vunpack.c.0.s8 %v2099
        %v2101 = vperm.slane %v2093, %v2100
        %v2102 = vrot.slane %v2085, 4
        %v2103 = vsel %vm1502, %v2102, %v2061
        %v2104 = vrot.slane %v2061, 4
        %v2105 = vsel %vm1502, %v2085, %v2104
        %v2106 = vrot.slane %v2089, 4
        %v2107 = vsel %vm1502, %v2106, %v2065
        %v2108 = vrot.slane %v2065, 4
        %v2109 = vsel %vm1502, %v2089, %v2108
        %v2110 = vrot.slane %v2097, 4
        %v2111 = vsel %vm1502, %v2110, %v2073
        %v2112 = vrot.slane %v2073, 4
        %v2113 = vsel %vm1502, %v2097, %v2112
        %v2114 = vrot.slane %v2101, 4
        %v2115 = vsel %vm1502, %v2114, %v2077
        %v2116 = vrot.slane %v2077, 4
        %v2117 = vsel %vm1502, %v2101, %v2116
        %v2118 = vrot.slane %v1484, 4
        %v2119 = vsel %vm1502, %v2118, %v1379
        %v2120 = vrot.slane %v1379, 4
        %v2121 = vsel %vm1502, %v1484, %v2120
        %v2123 = vunpack.c.l.s4 1983009808
        %v2124 = vunpack.c.0.s8 %v2123
        %v2125 = vperm.slane %v2119, %v2124
        %v2127 = vunpack.c.l.s4 1983009808
        %v2128 = vunpack.c.0.s8 %v2127
        %v2129 = vperm.slane %v2121, %v2128
        %v2130 = vrot.slane %v1496, 4
        %v2131 = vsel %vm1502, %v2130, %v1472
        %v2132 = vrot.slane %v1472, 4
        %v2133 = vsel %vm1502, %v1496, %v2132
        %v2135 = vunpack.c.l.s4 1983009808
        %v2136 = vunpack.c.0.s8 %v2135
        %v2137 = vperm.slane %v2131, %v2136
        %v2139 = vunpack.c.l.s4 1983009808
        %v2140 = vunpack.c.0.s8 %v2139
        %v2141 = vperm.slane %v2133, %v2140
        %v2142 = vrot.slane %v2137, 4
        %v2143 = vsel %vm1502, %v2142, %v2125
        %v2144 = vrot.slane %v2125, 4
        %v2145 = vsel %vm1502, %v2137, %v2144
        %v2147 = vunpack.c.l.s4 1934713408
        %v2148 = vunpack.c.0.s8 %v2147
        %v2149 = vperm.slane %v2143, %v2148
        %v2151 = vunpack.c.l.s4 1934713408
        %v2152 = vunpack.c.0.s8 %v2151
        %v2153 = vperm.slane %v2145, %v2152
        %v2154 = vrot.slane %v2141, 4
        %v2155 = vsel %vm1502, %v2154, %v2129
        %v2156 = vrot.slane %v2129, 4
        %v2157 = vsel %vm1502, %v2141, %v2156
        %v2159 = vunpack.c.l.s4 1934713408
        %v2160 = vunpack.c.0.s8 %v2159
        %v2161 = vperm.slane %v2155, %v2160
        %v2163 = vunpack.c.l.s4 1934713408
        %v2164 = vunpack.c.0.s8 %v2163
        %v2165 = vperm.slane %v2157, %v2164
        %v2166 = vrot.slane %v2149, 4
        %v2167 = vsel %vm1502, 0.0, %v2166
        %v2168 = vrot.slane %v2153, 4
        %v2169 = vsel %vm1502, 0.0, %v2168
        %v2170 = vrot.slane %v2161, 4
        %v2171 = vsel %vm1502, 0.0, %v2170
        %v2172 = vrot.slane %v2165, 4
        %v2173 = vsel %vm1502, 0.0, %v2172
        %v2174 = vrot.slane %v1603, 4
        %v2175 = vsel %vm1502, %v2174, %v1599
        %v2176 = vrot.slane %v1599, 4
        %v2177 = vsel %vm1502, %v1603, %v2176
        %v2179 = vunpack.c.l.s4 1983009808
        %v2180 = vunpack.c.0.s8 %v2179
        %v2181 = vperm.slane %v2175, %v2180
        %v2183 = vunpack.c.l.s4 1983009808
        %v2184 = vunpack.c.0.s8 %v2183
        %v2185 = vperm.slane %v2177, %v2184
        %v2186 = vrot.slane %v1605, 4
        %v2187 = vsel %vm1502, %v2186, %v1601
        %v2188 = vrot.slane %v1601, 4
        %v2189 = vsel %vm1502, %v1605, %v2188
        %v2191 = vunpack.c.l.s4 1983009808
        %v2192 = vunpack.c.0.s8 %v2191
        %v2193 = vperm.slane %v2187, %v2192
        %v2195 = vunpack.c.l.s4 1983009808
        %v2196 = vunpack.c.0.s8 %v2195
        %v2197 = vperm.slane %v2189, %v2196
        %v2198 = vrot.slane %v1611, 4
        %v2199 = vsel %vm1502, %v2198, %v1607
        %v2200 = vrot.slane %v1607, 4
        %v2201 = vsel %vm1502, %v1611, %v2200
        %v2203 = vunpack.c.l.s4 1983009808
        %v2204 = vunpack.c.0.s8 %v2203
        %v2205 = vperm.slane %v2199, %v2204
        %v2207 = vunpack.c.l.s4 1983009808
        %v2208 = vunpack.c.0.s8 %v2207
        %v2209 = vperm.slane %v2201, %v2208
        %v2210 = vrot.slane %v1613, 4
        %v2211 = vsel %vm1502, %v2210, %v1609
        %v2212 = vrot.slane %v1609, 4
        %v2213 = vsel %vm1502, %v1613, %v2212
        %v2215 = vunpack.c.l.s4 1983009808
        %v2216 = vunpack.c.0.s8 %v2215
        %v2217 = vperm.slane %v2211, %v2216
        %v2219 = vunpack.c.l.s4 1983009808
        %v2220 = vunpack.c.0.s8 %v2219
        %v2221 = vperm.slane %v2213, %v2220
        %v2222 = vrot.slane %v2193, 4
        %v2223 = vsel %vm1502, %v2222, %v2181
        %v2224 = vrot.slane %v2181, 4
        %v2225 = vsel %vm1502, %v2193, %v2224
        %v2227 = vunpack.c.l.s4 1934713408
        %v2228 = vunpack.c.0.s8 %v2227
        %v2229 = vperm.slane %v2223, %v2228
        %v2231 = vunpack.c.l.s4 1934713408
        %v2232 = vunpack.c.0.s8 %v2231
        %v2233 = vperm.slane %v2225, %v2232
        %v2234 = vrot.slane %v2197, 4
        %v2235 = vsel %vm1502, %v2234, %v2185
        %v2236 = vrot.slane %v2185, 4
        %v2237 = vsel %vm1502, %v2197, %v2236
        %v2239 = vunpack.c.l.s4 1934713408
        %v2240 = vunpack.c.0.s8 %v2239
        %v2241 = vperm.slane %v2235, %v2240
        %v2243 = vunpack.c.l.s4 1934713408
        %v2244 = vunpack.c.0.s8 %v2243
        %v2245 = vperm.slane %v2237, %v2244
        %v2246 = vrot.slane %v2217, 4
        %v2247 = vsel %vm1502, %v2246, %v2205
        %v2248 = vrot.slane %v2205, 4
        %v2249 = vsel %vm1502, %v2217, %v2248
        %v2251 = vunpack.c.l.s4 1934713408
        %v2252 = vunpack.c.0.s8 %v2251
        %v2253 = vperm.slane %v2247, %v2252
        %v2255 = vunpack.c.l.s4 1934713408
        %v2256 = vunpack.c.0.s8 %v2255
        %v2257 = vperm.slane %v2249, %v2256
        %v2258 = vrot.slane %v2221, 4
        %v2259 = vsel %vm1502, %v2258, %v2209
        %v2260 = vrot.slane %v2209, 4
        %v2261 = vsel %vm1502, %v2221, %v2260
        %v2263 = vunpack.c.l.s4 1934713408
        %v2264 = vunpack.c.0.s8 %v2263
        %v2265 = vperm.slane %v2259, %v2264
        %v2267 = vunpack.c.l.s4 1934713408
        %v2268 = vunpack.c.0.s8 %v2267
        %v2269 = vperm.slane %v2261, %v2268
        %v2270 = vrot.slane %v2253, 4
        %v2271 = vsel %vm1502, %v2270, %v2229
        %v2272 = vrot.slane %v2229, 4
        %v2273 = vsel %vm1502, %v2253, %v2272
        %v2274 = vrot.slane %v2257, 4
        %v2275 = vsel %vm1502, %v2274, %v2233
        %v2276 = vrot.slane %v2233, 4
        %v2277 = vsel %vm1502, %v2257, %v2276
        %v2278 = vrot.slane %v2265, 4
        %v2279 = vsel %vm1502, %v2278, %v2241
        %v2280 = vrot.slane %v2241, 4
        %v2281 = vsel %vm1502, %v2265, %v2280
        %v2282 = vrot.slane %v2269, 4
        %v2283 = vsel %vm1502, %v2282, %v2245
        %v2284 = vrot.slane %v2245, 4
        %v2285 = vsel %vm1502, %v2269, %v2284
        %v2286 = vrot.slane %v1771, 4
        %v2287 = vsel %vm1502, %v2286, %v1767
        %v2288 = vrot.slane %v1767, 4
        %v2289 = vsel %vm1502, %v1771, %v2288
        %v2291 = vunpack.c.l.s4 1983009808
        %v2292 = vunpack.c.0.s8 %v2291
        %v2293 = vperm.slane %v2287, %v2292
        %v2295 = vunpack.c.l.s4 1983009808
        %v2296 = vunpack.c.0.s8 %v2295
        %v2297 = vperm.slane %v2289, %v2296
        %v2298 = vrot.slane %v1773, 4
        %v2299 = vsel %vm1502, %v2298, %v1769
        %v2300 = vrot.slane %v1769, 4
        %v2301 = vsel %vm1502, %v1773, %v2300
        %v2303 = vunpack.c.l.s4 1983009808
        %v2304 = vunpack.c.0.s8 %v2303
        %v2305 = vperm.slane %v2299, %v2304
        %v2307 = vunpack.c.l.s4 1983009808
        %v2308 = vunpack.c.0.s8 %v2307
        %v2309 = vperm.slane %v2301, %v2308
        %v2310 = vrot.slane %v1779, 4
        %v2311 = vsel %vm1502, %v2310, %v1775
        %v2312 = vrot.slane %v1775, 4
        %v2313 = vsel %vm1502, %v1779, %v2312
        %v2315 = vunpack.c.l.s4 1983009808
        %v2316 = vunpack.c.0.s8 %v2315
        %v2317 = vperm.slane %v2311, %v2316
        %v2319 = vunpack.c.l.s4 1983009808
        %v2320 = vunpack.c.0.s8 %v2319
        %v2321 = vperm.slane %v2313, %v2320
        %v2322 = vrot.slane %v1781, 4
        %v2323 = vsel %vm1502, %v2322, %v1777
        %v2324 = vrot.slane %v1777, 4
        %v2325 = vsel %vm1502, %v1781, %v2324
        %v2327 = vunpack.c.l.s4 1983009808
        %v2328 = vunpack.c.0.s8 %v2327
        %v2329 = vperm.slane %v2323, %v2328
        %v2331 = vunpack.c.l.s4 1983009808
        %v2332 = vunpack.c.0.s8 %v2331
        %v2333 = vperm.slane %v2325, %v2332
        %v2334 = vrot.slane %v2305, 4
        %v2335 = vsel %vm1502, %v2334, %v2293
        %v2336 = vrot.slane %v2293, 4
        %v2337 = vsel %vm1502, %v2305, %v2336
        %v2339 = vunpack.c.l.s4 1934713408
        %v2340 = vunpack.c.0.s8 %v2339
        %v2341 = vperm.slane %v2335, %v2340
        %v2343 = vunpack.c.l.s4 1934713408
        %v2344 = vunpack.c.0.s8 %v2343
        %v2345 = vperm.slane %v2337, %v2344
        %v2346 = vrot.slane %v2309, 4
        %v2347 = vsel %vm1502, %v2346, %v2297
        %v2348 = vrot.slane %v2297, 4
        %v2349 = vsel %vm1502, %v2309, %v2348
        %v2351 = vunpack.c.l.s4 1934713408
        %v2352 = vunpack.c.0.s8 %v2351
        %v2353 = vperm.slane %v2347, %v2352
        %v2355 = vunpack.c.l.s4 1934713408
        %v2356 = vunpack.c.0.s8 %v2355
        %v2357 = vperm.slane %v2349, %v2356
        %v2358 = vrot.slane %v2329, 4
        %v2359 = vsel %vm1502, %v2358, %v2317
        %v2360 = vrot.slane %v2317, 4
        %v2361 = vsel %vm1502, %v2329, %v2360
        %v2363 = vunpack.c.l.s4 1934713408
        %v2364 = vunpack.c.0.s8 %v2363
        %v2365 = vperm.slane %v2359, %v2364
        %v2367 = vunpack.c.l.s4 1934713408
        %v2368 = vunpack.c.0.s8 %v2367
        %v2369 = vperm.slane %v2361, %v2368
        %v2370 = vrot.slane %v2333, 4
        %v2371 = vsel %vm1502, %v2370, %v2321
        %v2372 = vrot.slane %v2321, 4
        %v2373 = vsel %vm1502, %v2333, %v2372
        %v2375 = vunpack.c.l.s4 1934713408
        %v2376 = vunpack.c.0.s8 %v2375
        %v2377 = vperm.slane %v2371, %v2376
        %v2379 = vunpack.c.l.s4 1934713408
        %v2380 = vunpack.c.0.s8 %v2379
        %v2381 = vperm.slane %v2373, %v2380
        %v2382 = vrot.slane %v2365, 4
        %v2383 = vsel %vm1502, %v2382, %v2341
        %v2384 = vrot.slane %v2341, 4
        %v2385 = vsel %vm1502, %v2365, %v2384
        %v2386 = vrot.slane %v2369, 4
        %v2387 = vsel %vm1502, %v2386, %v2345
        %v2388 = vrot.slane %v2345, 4
        %v2389 = vsel %vm1502, %v2369, %v2388
        %v2390 = vrot.slane %v2377, 4
        %v2391 = vsel %vm1502, %v2390, %v2353
        %v2392 = vrot.slane %v2353, 4
        %v2393 = vsel %vm1502, %v2377, %v2392
        %v2394 = vrot.slane %v2381, 4
        %v2395 = vsel %vm1502, %v2394, %v2357
        %v2396 = vrot.slane %v2357, 4
        %v2397 = vsel %vm1502, %v2381, %v2396
        %v2398 = vrot.slane %v1939, 4
        %v2399 = vsel %vm1502, %v2398, %v1935
        %v2400 = vrot.slane %v1935, 4
        %v2401 = vsel %vm1502, %v1939, %v2400
        %v2403 = vunpack.c.l.s4 1983009808
        %v2404 = vunpack.c.0.s8 %v2403
        %v2405 = vperm.slane %v2399, %v2404
        %v2407 = vunpack.c.l.s4 1983009808
        %v2408 = vunpack.c.0.s8 %v2407
        %v2409 = vperm.slane %v2401, %v2408
        %v2410 = vrot.slane %v1941, 4
        %v2411 = vsel %vm1502, %v2410, %v1937
        %v2412 = vrot.slane %v1937, 4
        %v2413 = vsel %vm1502, %v1941, %v2412
        %v2415 = vunpack.c.l.s4 1983009808
        %v2416 = vunpack.c.0.s8 %v2415
        %v2417 = vperm.slane %v2411, %v2416
        %v2419 = vunpack.c.l.s4 1983009808
        %v2420 = vunpack.c.0.s8 %v2419
        %v2421 = vperm.slane %v2413, %v2420
        %v2422 = vrot.slane %v1947, 4
        %v2423 = vsel %vm1502, %v2422, %v1943
        %v2424 = vrot.slane %v1943, 4
        %v2425 = vsel %vm1502, %v1947, %v2424
        %v2427 = vunpack.c.l.s4 1983009808
        %v2428 = vunpack.c.0.s8 %v2427
        %v2429 = vperm.slane %v2423, %v2428
        %v2431 = vunpack.c.l.s4 1983009808
        %v2432 = vunpack.c.0.s8 %v2431
        %v2433 = vperm.slane %v2425, %v2432
        %v2434 = vrot.slane %v1949, 4
        %v2435 = vsel %vm1502, %v2434, %v1945
        %v2436 = vrot.slane %v1945, 4
        %v2437 = vsel %vm1502, %v1949, %v2436
        %v2439 = vunpack.c.l.s4 1983009808
        %v2440 = vunpack.c.0.s8 %v2439
        %v2441 = vperm.slane %v2435, %v2440
        %v2443 = vunpack.c.l.s4 1983009808
        %v2444 = vunpack.c.0.s8 %v2443
        %v2445 = vperm.slane %v2437, %v2444
        %v2446 = vrot.slane %v2417, 4
        %v2447 = vsel %vm1502, %v2446, %v2405
        %v2448 = vrot.slane %v2405, 4
        %v2449 = vsel %vm1502, %v2417, %v2448
        %v2451 = vunpack.c.l.s4 1934713408
        %v2452 = vunpack.c.0.s8 %v2451
        %v2453 = vperm.slane %v2447, %v2452
        %v2455 = vunpack.c.l.s4 1934713408
        %v2456 = vunpack.c.0.s8 %v2455
        %v2457 = vperm.slane %v2449, %v2456
        %v2458 = vrot.slane %v2421, 4
        %v2459 = vsel %vm1502, %v2458, %v2409
        %v2460 = vrot.slane %v2409, 4
        %v2461 = vsel %vm1502, %v2421, %v2460
        %v2463 = vunpack.c.l.s4 1934713408
        %v2464 = vunpack.c.0.s8 %v2463
        %v2465 = vperm.slane %v2459, %v2464
        %v2467 = vunpack.c.l.s4 1934713408
        %v2468 = vunpack.c.0.s8 %v2467
        %v2469 = vperm.slane %v2461, %v2468
        %v2470 = vrot.slane %v2441, 4
        %v2471 = vsel %vm1502, %v2470, %v2429
        %v2472 = vrot.slane %v2429, 4
        %v2473 = vsel %vm1502, %v2441, %v2472
        %v2475 = vunpack.c.l.s4 1934713408
        %v2476 = vunpack.c.0.s8 %v2475
        %v2477 = vperm.slane %v2471, %v2476
        %v2479 = vunpack.c.l.s4 1934713408
        %v2480 = vunpack.c.0.s8 %v2479
        %v2481 = vperm.slane %v2473, %v2480
        %v2482 = vrot.slane %v2445, 4
        %v2483 = vsel %vm1502, %v2482, %v2433
        %v2484 = vrot.slane %v2433, 4
        %v2485 = vsel %vm1502, %v2445, %v2484
        %v2487 = vunpack.c.l.s4 1934713408
        %v2488 = vunpack.c.0.s8 %v2487
        %v2489 = vperm.slane %v2483, %v2488
        %v2491 = vunpack.c.l.s4 1934713408
        %v2492 = vunpack.c.0.s8 %v2491
        %v2493 = vperm.slane %v2485, %v2492
        %v2494 = vrot.slane %v2477, 4
        %v2495 = vsel %vm1502, %v2494, %v2453
        %v2496 = vrot.slane %v2453, 4
        %v2497 = vsel %vm1502, %v2477, %v2496
        %v2498 = vrot.slane %v2481, 4
        %v2499 = vsel %vm1502, %v2498, %v2457
        %v2500 = vrot.slane %v2457, 4
        %v2501 = vsel %vm1502, %v2481, %v2500
        %v2502 = vrot.slane %v2489, 4
        %v2503 = vsel %vm1502, %v2502, %v2465
        %v2504 = vrot.slane %v2465, 4
        %v2505 = vsel %vm1502, %v2489, %v2504
        %v2506 = vrot.slane %v2493, 4
        %v2507 = vsel %vm1502, %v2506, %v2469
        %v2508 = vrot.slane %v2469, 4
        %v2509 = vsel %vm1502, %v2493, %v2508
        %v2510 = vrot.slane %v2107, 4
        %v2511 = vsel %vm1502, %v2510, %v2103
        %v2512 = vrot.slane %v2103, 4
        %v2513 = vsel %vm1502, %v2107, %v2512
        %v2515 = vunpack.c.l.s4 1983009808
        %v2516 = vunpack.c.0.s8 %v2515
        %v2517 = vperm.slane %v2511, %v2516
        %v2519 = vunpack.c.l.s4 1983009808
        %v2520 = vunpack.c.0.s8 %v2519
        %v2521 = vperm.slane %v2513, %v2520
        %v2522 = vrot.slane %v2109, 4
        %v2523 = vsel %vm1502, %v2522, %v2105
        %v2524 = vrot.slane %v2105, 4
        %v2525 = vsel %vm1502, %v2109, %v2524
        %v2527 = vunpack.c.l.s4 1983009808
        %v2528 = vunpack.c.0.s8 %v2527
        %v2529 = vperm.slane %v2523, %v2528
        %v2531 = vunpack.c.l.s4 1983009808
        %v2532 = vunpack.c.0.s8 %v2531
        %v2533 = vperm.slane %v2525, %v2532
        %v2534 = vrot.slane %v2115, 4
        %v2535 = vsel %vm1502, %v2534, %v2111
        %v2536 = vrot.slane %v2111, 4
        %v2537 = vsel %vm1502, %v2115, %v2536
        %v2539 = vunpack.c.l.s4 1983009808
        %v2540 = vunpack.c.0.s8 %v2539
        %v2541 = vperm.slane %v2535, %v2540
        %v2543 = vunpack.c.l.s4 1983009808
        %v2544 = vunpack.c.0.s8 %v2543
        %v2545 = vperm.slane %v2537, %v2544
        %v2546 = vrot.slane %v2117, 4
        %v2547 = vsel %vm1502, %v2546, %v2113
        %v2548 = vrot.slane %v2113, 4
        %v2549 = vsel %vm1502, %v2117, %v2548
        %v2551 = vunpack.c.l.s4 1983009808
        %v2552 = vunpack.c.0.s8 %v2551
        %v2553 = vperm.slane %v2547, %v2552
        %v2555 = vunpack.c.l.s4 1983009808
        %v2556 = vunpack.c.0.s8 %v2555
        %v2557 = vperm.slane %v2549, %v2556
        %v2558 = vrot.slane %v2529, 4
        %v2559 = vsel %vm1502, %v2558, %v2517
        %v2560 = vrot.slane %v2517, 4
        %v2561 = vsel %vm1502, %v2529, %v2560
        %v2563 = vunpack.c.l.s4 1934713408
        %v2564 = vunpack.c.0.s8 %v2563
        %v2565 = vperm.slane %v2559, %v2564
        %v2567 = vunpack.c.l.s4 1934713408
        %v2568 = vunpack.c.0.s8 %v2567
        %v2569 = vperm.slane %v2561, %v2568
        %v2570 = vrot.slane %v2533, 4
        %v2571 = vsel %vm1502, %v2570, %v2521
        %v2572 = vrot.slane %v2521, 4
        %v2573 = vsel %vm1502, %v2533, %v2572
        %v2575 = vunpack.c.l.s4 1934713408
        %v2576 = vunpack.c.0.s8 %v2575
        %v2577 = vperm.slane %v2571, %v2576
        %v2579 = vunpack.c.l.s4 1934713408
        %v2580 = vunpack.c.0.s8 %v2579
        %v2581 = vperm.slane %v2573, %v2580
        %v2582 = vrot.slane %v2553, 4
        %v2583 = vsel %vm1502, %v2582, %v2541
        %v2584 = vrot.slane %v2541, 4
        %v2585 = vsel %vm1502, %v2553, %v2584
        %v2587 = vunpack.c.l.s4 1934713408
        %v2588 = vunpack.c.0.s8 %v2587
        %v2589 = vperm.slane %v2583, %v2588
        %v2591 = vunpack.c.l.s4 1934713408
        %v2592 = vunpack.c.0.s8 %v2591
        %v2593 = vperm.slane %v2585, %v2592
        %v2594 = vrot.slane %v2557, 4
        %v2595 = vsel %vm1502, %v2594, %v2545
        %v2596 = vrot.slane %v2545, 4
        %v2597 = vsel %vm1502, %v2557, %v2596
        %v2599 = vunpack.c.l.s4 1934713408
        %v2600 = vunpack.c.0.s8 %v2599
        %v2601 = vperm.slane %v2595, %v2600
        %v2603 = vunpack.c.l.s4 1934713408
        %v2604 = vunpack.c.0.s8 %v2603
        %v2605 = vperm.slane %v2597, %v2604
        %v2606 = vrot.slane %v2589, 4
        %v2607 = vsel %vm1502, %v2606, %v2565
        %v2608 = vrot.slane %v2565, 4
        %v2609 = vsel %vm1502, %v2589, %v2608
        %v2610 = vrot.slane %v2593, 4
        %v2611 = vsel %vm1502, %v2610, %v2569
        %v2612 = vrot.slane %v2569, 4
        %v2613 = vsel %vm1502, %v2593, %v2612
        %v2614 = vrot.slane %v2601, 4
        %v2615 = vsel %vm1502, %v2614, %v2577
        %v2616 = vrot.slane %v2577, 4
        %v2617 = vsel %vm1502, %v2601, %v2616
        %v2618 = vrot.slane %v2605, 4
        %v2619 = vsel %vm1502, %v2618, %v2581
        %v2620 = vrot.slane %v2581, 4
        %v2621 = vsel %vm1502, %v2605, %v2620
        %v2622 = vsel %vm1502, %v1664, %v1645
        %v2624 = vunpack.c.l.s4 1983009808
        %v2625 = vunpack.c.0.s8 %v2624
        %v2626 = vperm.slane %v2622, %v2625
        %v2627 = vrot.slane %v1665, 4
        %v2628 = vsel %vm1502, %v2627, %v1663
        %v2630 = vunpack.c.l.s4 1983009808
        %v2631 = vunpack.c.0.s8 %v2630
        %v2632 = vperm.slane %v2628, %v2631
        %v2633 = vsel %vm1502, %v1668, %v1657
        %v2635 = vunpack.c.l.s4 1983009808
        %v2636 = vunpack.c.0.s8 %v2635
        %v2637 = vperm.slane %v2633, %v2636
        %v2638 = vrot.slane %v1669, 4
        %v2639 = vsel %vm1502, %v2638, %v1667
        %v2641 = vunpack.c.l.s4 1983009808
        %v2642 = vunpack.c.0.s8 %v2641
        %v2643 = vperm.slane %v2639, %v2642
        %v2644 = vrot.slane %v2632, 4
        %v2645 = vsel %vm1502, %v2644, %v2626
        %v2646 = vrot.slane %v2626, 4
        %v2647 = vsel %vm1502, %v2632, %v2646
        %v2649 = vunpack.c.l.s4 1934713408
        %v2650 = vunpack.c.0.s8 %v2649
        %v2651 = vperm.slane %v2645, %v2650
        %v2653 = vunpack.c.l.s4 1934713408
        %v2654 = vunpack.c.0.s8 %v2653
        %v2655 = vperm.slane %v2647, %v2654
        %v2656 = vrot.slane %v2643, 4
        %v2657 = vsel %vm1502, %v2656, %v2637
        %v2658 = vrot.slane %v2637, 4
        %v2659 = vsel %vm1502, %v2643, %v2658
        %v2661 = vunpack.c.l.s4 1934713408
        %v2662 = vunpack.c.0.s8 %v2661
        %v2663 = vperm.slane %v2657, %v2662
        %v2665 = vunpack.c.l.s4 1934713408
        %v2666 = vunpack.c.0.s8 %v2665
        %v2667 = vperm.slane %v2659, %v2666
        %v2668 = vrot.slane %v2663, 4
        %v2669 = vsel %vm1502, %v2668, %v2651
        %v2670 = vrot.slane %v2651, 4
        %v2671 = vsel %vm1502, %v2663, %v2670
        %v2672 = vrot.slane %v2667, 4
        %v2673 = vsel %vm1502, %v2672, %v2655
        %v2674 = vrot.slane %v2655, 4
        %v2675 = vsel %vm1502, %v2667, %v2674
        %v2676 = vsel %vm1502, %v1832, %v1813
        %v2678 = vunpack.c.l.s4 1983009808
        %v2679 = vunpack.c.0.s8 %v2678
        %v2680 = vperm.slane %v2676, %v2679
        %v2681 = vrot.slane %v1833, 4
        %v2682 = vsel %vm1502, %v2681, %v1831
        %v2684 = vunpack.c.l.s4 1983009808
        %v2685 = vunpack.c.0.s8 %v2684
        %v2686 = vperm.slane %v2682, %v2685
        %v2687 = vsel %vm1502, %v1836, %v1825
        %v2689 = vunpack.c.l.s4 1983009808
        %v2690 = vunpack.c.0.s8 %v2689
        %v2691 = vperm.slane %v2687, %v2690
        %v2692 = vrot.slane %v1837, 4
        %v2693 = vsel %vm1502, %v2692, %v1835
        %v2695 = vunpack.c.l.s4 1983009808
        %v2696 = vunpack.c.0.s8 %v2695
        %v2697 = vperm.slane %v2693, %v2696
        %v2698 = vrot.slane %v2686, 4
        %v2699 = vsel %vm1502, %v2698, %v2680
        %v2700 = vrot.slane %v2680, 4
        %v2701 = vsel %vm1502, %v2686, %v2700
        %v2703 = vunpack.c.l.s4 1934713408
        %v2704 = vunpack.c.0.s8 %v2703
        %v2705 = vperm.slane %v2699, %v2704
        %v2707 = vunpack.c.l.s4 1934713408
        %v2708 = vunpack.c.0.s8 %v2707
        %v2709 = vperm.slane %v2701, %v2708
        %v2710 = vrot.slane %v2697, 4
        %v2711 = vsel %vm1502, %v2710, %v2691
        %v2712 = vrot.slane %v2691, 4
        %v2713 = vsel %vm1502, %v2697, %v2712
        %v2715 = vunpack.c.l.s4 1934713408
        %v2716 = vunpack.c.0.s8 %v2715
        %v2717 = vperm.slane %v2711, %v2716
        %v2719 = vunpack.c.l.s4 1934713408
        %v2720 = vunpack.c.0.s8 %v2719
        %v2721 = vperm.slane %v2713, %v2720
        %v2722 = vrot.slane %v2717, 4
        %v2723 = vsel %vm1502, %v2722, %v2705
        %v2724 = vrot.slane %v2705, 4
        %v2725 = vsel %vm1502, %v2717, %v2724
        %v2726 = vrot.slane %v2721, 4
        %v2727 = vsel %vm1502, %v2726, %v2709
        %v2728 = vrot.slane %v2709, 4
        %v2729 = vsel %vm1502, %v2721, %v2728
        %v2730 = vsel %vm1502, %v2000, %v1981
        %v2732 = vunpack.c.l.s4 1983009808
        %v2733 = vunpack.c.0.s8 %v2732
        %v2734 = vperm.slane %v2730, %v2733
        %v2735 = vrot.slane %v2001, 4
        %v2736 = vsel %vm1502, %v2735, %v1999
        %v2738 = vunpack.c.l.s4 1983009808
        %v2739 = vunpack.c.0.s8 %v2738
        %v2740 = vperm.slane %v2736, %v2739
        %v2741 = vsel %vm1502, %v2004, %v1993
        %v2743 = vunpack.c.l.s4 1983009808
        %v2744 = vunpack.c.0.s8 %v2743
        %v2745 = vperm.slane %v2741, %v2744
        %v2746 = vrot.slane %v2005, 4
        %v2747 = vsel %vm1502, %v2746, %v2003
        %v2749 = vunpack.c.l.s4 1983009808
        %v2750 = vunpack.c.0.s8 %v2749
        %v2751 = vperm.slane %v2747, %v2750
        %v2752 = vrot.slane %v2740, 4
        %v2753 = vsel %vm1502, %v2752, %v2734
        %v2754 = vrot.slane %v2734, 4
        %v2755 = vsel %vm1502, %v2740, %v2754
        %v2757 = vunpack.c.l.s4 1934713408
        %v2758 = vunpack.c.0.s8 %v2757
        %v2759 = vperm.slane %v2753, %v2758
        %v2761 = vunpack.c.l.s4 1934713408
        %v2762 = vunpack.c.0.s8 %v2761
        %v2763 = vperm.slane %v2755, %v2762
        %v2764 = vrot.slane %v2751, 4
        %v2765 = vsel %vm1502, %v2764, %v2745
        %v2766 = vrot.slane %v2745, 4
        %v2767 = vsel %vm1502, %v2751, %v2766
        %v2769 = vunpack.c.l.s4 1934713408
        %v2770 = vunpack.c.0.s8 %v2769
        %v2771 = vperm.slane %v2765, %v2770
        %v2773 = vunpack.c.l.s4 1934713408
        %v2774 = vunpack.c.0.s8 %v2773
        %v2775 = vperm.slane %v2767, %v2774
        %v2776 = vrot.slane %v2771, 4
        %v2777 = vsel %vm1502, %v2776, %v2759
        %v2778 = vrot.slane %v2759, 4
        %v2779 = vsel %vm1502, %v2771, %v2778
        %v2780 = vrot.slane %v2775, 4
        %v2781 = vsel %vm1502, %v2780, %v2763
        %v2782 = vrot.slane %v2763, 4
        %v2783 = vsel %vm1502, %v2775, %v2782
        %v2784 = vsel %vm1502, %v2168, %v2149
        %v2786 = vunpack.c.l.s4 1983009808
        %v2787 = vunpack.c.0.s8 %v2786
        %v2788 = vperm.slane %v2784, %v2787
        %v2789 = vrot.slane %v2169, 4
        %v2790 = vsel %vm1502, %v2789, %v2167
        %v2792 = vunpack.c.l.s4 1983009808
        %v2793 = vunpack.c.0.s8 %v2792
        %v2794 = vperm.slane %v2790, %v2793
        %v2795 = vsel %vm1502, %v2172, %v2161
        %v2797 = vunpack.c.l.s4 1983009808
        %v2798 = vunpack.c.0.s8 %v2797
        %v2799 = vperm.slane %v2795, %v2798
        %v2800 = vrot.slane %v2173, 4
        %v2801 = vsel %vm1502, %v2800, %v2171
        %v2803 = vunpack.c.l.s4 1983009808
        %v2804 = vunpack.c.0.s8 %v2803
        %v2805 = vperm.slane %v2801, %v2804
        %v2806 = vrot.slane %v2794, 4
        %v2807 = vsel %vm1502, %v2806, %v2788
        %v2808 = vrot.slane %v2788, 4
        %v2809 = vsel %vm1502, %v2794, %v2808
        %v2811 = vunpack.c.l.s4 1934713408
        %v2812 = vunpack.c.0.s8 %v2811
        %v2813 = vperm.slane %v2807, %v2812
        %v2815 = vunpack.c.l.s4 1934713408
        %v2816 = vunpack.c.0.s8 %v2815
        %v2817 = vperm.slane %v2809, %v2816
        %v2818 = vrot.slane %v2805, 4
        %v2819 = vsel %vm1502, %v2818, %v2799
        %v2820 = vrot.slane %v2799, 4
        %v2821 = vsel %vm1502, %v2805, %v2820
        %v2823 = vunpack.c.l.s4 1934713408
        %v2824 = vunpack.c.0.s8 %v2823
        %v2825 = vperm.slane %v2819, %v2824
        %v2827 = vunpack.c.l.s4 1934713408
        %v2828 = vunpack.c.0.s8 %v2827
        %v2829 = vperm.slane %v2821, %v2828
        %v2830 = vrot.slane %v2825, 4
        %v2831 = vsel %vm1502, %v2830, %v2813
        %v2832 = vrot.slane %v2813, 4
        %v2833 = vsel %vm1502, %v2825, %v2832
        %v2834 = vrot.slane %v2829, 4
        %v2835 = vsel %vm1502, %v2834, %v2817
        %v2836 = vrot.slane %v2817, 4
        %v2837 = vsel %vm1502, %v2829, %v2836
        %v2838 = vmul.f32 %v2271, 0.17677669
        %v2839 = vmul.f32 %v2383, 0.17677669
        %v2840 = vmul.f32 %v2495, 0.17677669
        %v2841 = vmul.f32 %v2607, 0.17677669
        %v2842 = vmul.f32 %v2273, 0.17677669
        %v2843 = vmul.f32 %v2385, 0.17677669
        %v2844 = vmul.f32 %v2497, 0.17677669
        %v2845 = vmul.f32 %v2609, 0.17677669
        %v2846 = vmul.f32 %v2275, 0.17677669
        %v2847 = vmul.f32 %v2387, 0.17677669
        %v2848 = vmul.f32 %v2499, 0.17677669
        %v2849 = vmul.f32 %v2611, 0.17677669
        %v2850 = vmul.f32 %v2277, 0.17677669
        %v2851 = vmul.f32 %v2389, 0.17677669
        %v2852 = vmul.f32 %v2501, 0.17677669
        %v2853 = vmul.f32 %v2613, 0.17677669
        %v2854 = vpack.c.bf16 %v2838, %v2838
        %v2855 = vpack.c.bf16 %v2839, %v2839
        %v2856 = vpack.c.bf16 %v2840, %v2840
        %v2857 = vpack.c.bf16 %v2841, %v2841
        %v2858 = vpack.c.bf16 %v2842, %v2842
        %v2859 = vpack.c.bf16 %v2843, %v2843
        %v2860 = vpack.c.bf16 %v2844, %v2844
        %v2861 = vpack.c.bf16 %v2845, %v2845
        %v2862 = vpack.c.bf16 %v2846, %v2846
        %v2863 = vpack.c.bf16 %v2847, %v2847
        %v2864 = vpack.c.bf16 %v2848, %v2848
        %v2865 = vpack.c.bf16 %v2849, %v2849
        %v2866 = vpack.c.bf16 %v2850, %v2850
        %v2867 = vpack.c.bf16 %v2851, %v2851
        %v2868 = vpack.c.bf16 %v2852, %v2852
        %v2869 = vpack.c.bf16 %v2853, %v2853
        %v2870 = vpack.c.bf16 %v2279, %v2279
        %v2871 = vpack.c.bf16 %v2391, %v2391
        %v2872 = vpack.c.bf16 %v2503, %v2503
        %v2873 = vpack.c.bf16 %v2615, %v2615
        %v2874 = vpack.c.bf16 %v2281, %v2281
        %v2875 = vpack.c.bf16 %v2393, %v2393
        %v2876 = vpack.c.bf16 %v2505, %v2505
        %v2877 = vpack.c.bf16 %v2617, %v2617
        %v2878 = vpack.c.bf16 %v2283, %v2283
        %v2879 = vpack.c.bf16 %v2395, %v2395
        %v2880 = vpack.c.bf16 %v2507, %v2507
        %v2881 = vpack.c.bf16 %v2619, %v2619
        %v2882 = vpack.c.bf16 %v2285, %v2285
        %v2883 = vpack.c.bf16 %v2397, %v2397
        %v2884 = vpack.c.bf16 %v2509, %v2509
        %v2885 = vpack.c.bf16 %v2621, %v2621
        %v2886 = vpack.c.bf16 %v2669, %v2669
        %v2887 = vpack.c.bf16 %v2723, %v2723
        %v2888 = vpack.c.bf16 %v2777, %v2777
        %v2889 = vpack.c.bf16 %v2831, %v2831
        %v2890 = vpack.c.bf16 %v2671, %v2671
        %v2891 = vpack.c.bf16 %v2725, %v2725
        %v2892 = vpack.c.bf16 %v2779, %v2779
        %v2893 = vpack.c.bf16 %v2833, %v2833
        %v2894 = vpack.c.bf16 %v2673, %v2673
        %v2895 = vpack.c.bf16 %v2727, %v2727
        %v2896 = vpack.c.bf16 %v2781, %v2781
        %v2897 = vpack.c.bf16 %v2835, %v2835
        %v2898 = vpack.c.bf16 %v2675, %v2675
        %v2899 = vpack.c.bf16 %v2729, %v2729
        %v2900 = vpack.c.bf16 %v2783, %v2783
        %v2901 = vpack.c.bf16 %v2837, %v2837
        %v2902 = vld [vmem:[#allocation6] sm:$0xff]
        %v2903 = vld [vmem:[#allocation6 + $0x8] sm:$0xff]
        %v2904 = vld [vmem:[#allocation6 + $0x10] sm:$0xff]
        %v2905 = vld [vmem:[#allocation6 + $0x18] sm:$0xff]
        %v2910 = vunpack.c.l.b16 %v2854
        %v2911 = vunpack.c.l.b16 %v2855
        %v2912 = vunpack.c.l.b16 %v2856
        %v2913 = vunpack.c.l.b16 %v2857
        %v2914 = vpack.c.b16 %v2911, %v2910
        %v2915 = vpack.c.b16 %v2913, %v2912
        %v2920 = vunpack.c.l.b16 %v2870
        %v2921 = vunpack.c.l.b16 %v2871
        %v2922 = vunpack.c.l.b16 %v2872
        %v2923 = vunpack.c.l.b16 %v2873
        %v2924 = vpack.c.b16 %v2921, %v2920
        %v2925 = vpack.c.b16 %v2923, %v2922
        %vm2926 = vcmask 261120
        %v2928 = vsel %vm2926, %v2914, 0
        %v2931 = vsel %vm2926, %v2915, 0
        %v2934 = vsel %vm2926, %v2924, 0
        %v2937 = vsel %vm2926, %v2925, 0
        %2939 = vmatpush.bf16.xpose.msra.mxu0 0
        %2940 = vmatpush.bf16.xpose.msra.mxu0 0
        %2941 = vmatpush.bf16.xpose.msra.mxu0 0
        %2942 = vmatpush.bf16.xpose.msra.mxu0 0
        %2943 = vmatpush.bf16.xpose.msra.mxu0 0
        %2944 = vmatpush.bf16.xpose.msra.mxu0 0
        %2945 = vmatpush.bf16.xpose.msra.mxu0 %v2937
        %2946 = vmatpush.bf16.xpose.msra.mxu0 %v2934
        %2947 = vmatmul.bf16.gmra.mxu0 %v2928
        %v2948 = vpop.f32.mrf.mxu0
        %v2949 = vadd.f32 %v2902, %v2948
        %v2950 = vpop.f32.mrf.mxu0
        %v2951 = vadd.f32 %v2903, %v2950
        %2952 = vmatmul.bf16.gmra.mxu0 %v2931
        %v2953 = vpop.f32.mrf.mxu0
        %v2954 = vadd.f32 %v2904, %v2953
        %v2955 = vpop.f32.mrf.mxu0
        %v2956 = vadd.f32 %v2905, %v2955
        %2957 = vdwg.mxu0
        %v2962 = vunpack.c.l.b16 %v2858
        %v2963 = vunpack.c.l.b16 %v2859
        %v2964 = vunpack.c.l.b16 %v2860
        %v2965 = vunpack.c.l.b16 %v2861
        %v2966 = vpack.c.b16 %v2963, %v2962
        %v2967 = vpack.c.b16 %v2965, %v2964
        %v2972 = vunpack.c.l.b16 %v2874
        %v2973 = vunpack.c.l.b16 %v2875
        %v2974 = vunpack.c.l.b16 %v2876
        %v2975 = vunpack.c.l.b16 %v2877
        %v2976 = vpack.c.b16 %v2973, %v2972
        %v2977 = vpack.c.b16 %v2975, %v2974
        %v2979 = vsel %vm2926, %v2966, 0
        %v2982 = vsel %vm2926, %v2967, 0
        %v2985 = vsel %vm2926, %v2976, 0
        %v2988 = vsel %vm2926, %v2977, 0
        %2990 = vmatpush.bf16.xpose.msra.mxu0 0
        %2991 = vmatpush.bf16.xpose.msra.mxu0 0
        %2992 = vmatpush.bf16.xpose.msra.mxu0 0
        %2993 = vmatpush.bf16.xpose.msra.mxu0 0
        %2994 = vmatpush.bf16.xpose.msra.mxu0 0
        %2995 = vmatpush.bf16.xpose.msra.mxu0 0
        %2996 = vmatpush.bf16.xpose.msra.mxu0 %v2988
        %2997 = vmatpush.bf16.xpose.msra.mxu0 %v2985
        %2998 = vmatmul.bf16.gmra.mxu0 %v2979
        %v2999 = vpop.f32.mrf.mxu0
        %v3000 = vadd.f32 %v2902, %v2999
        %v3001 = vpop.f32.mrf.mxu0
        %v3002 = vadd.f32 %v2903, %v3001
        %3003 = vmatmul.bf16.gmra.mxu0 %v2982
        %v3004 = vpop.f32.mrf.mxu0
        %v3005 = vadd.f32 %v2904, %v3004
        %v3006 = vpop.f32.mrf.mxu0
        %v3007 = vadd.f32 %v2905, %v3006
        %3008 = vdwg.mxu0
        %v3013 = vunpack.c.l.b16 %v2862
        %v3014 = vunpack.c.l.b16 %v2863
        %v3015 = vunpack.c.l.b16 %v2864
        %v3016 = vunpack.c.l.b16 %v2865
        %v3017 = vpack.c.b16 %v3014, %v3013
        %v3018 = vpack.c.b16 %v3016, %v3015
        %v3023 = vunpack.c.l.b16 %v2878
        %v3024 = vunpack.c.l.b16 %v2879
        %v3025 = vunpack.c.l.b16 %v2880
        %v3026 = vunpack.c.l.b16 %v2881
        %v3027 = vpack.c.b16 %v3024, %v3023
        %v3028 = vpack.c.b16 %v3026, %v3025
        %v3030 = vsel %vm2926, %v3017, 0
        %v3033 = vsel %vm2926, %v3018, 0
        %v3036 = vsel %vm2926, %v3027, 0
        %v3039 = vsel %vm2926, %v3028, 0
        %3041 = vmatpush.bf16.xpose.msra.mxu0 0
        %3042 = vmatpush.bf16.xpose.msra.mxu0 0
        %3043 = vmatpush.bf16.xpose.msra.mxu0 0
        %3044 = vmatpush.bf16.xpose.msra.mxu0 0
        %3045 = vmatpush.bf16.xpose.msra.mxu0 0
        %3046 = vmatpush.bf16.xpose.msra.mxu0 0
        %3047 = vmatpush.bf16.xpose.msra.mxu0 %v3039
        %3048 = vmatpush.bf16.xpose.msra.mxu0 %v3036
        %3049 = vmatmul.bf16.gmra.mxu0 %v3030
        %v3050 = vpop.f32.mrf.mxu0
        %v3051 = vadd.f32 %v2902, %v3050
        %v3052 = vpop.f32.mrf.mxu0
        %v3053 = vadd.f32 %v2903, %v3052
        %3054 = vmatmul.bf16.gmra.mxu0 %v3033
        %v3055 = vpop.f32.mrf.mxu0
        %v3056 = vadd.f32 %v2904, %v3055
        %v3057 = vpop.f32.mrf.mxu0
        %v3058 = vadd.f32 %v2905, %v3057
        %3059 = vdwg.mxu0
        %v3064 = vunpack.c.l.b16 %v2866
        %v3065 = vunpack.c.l.b16 %v2867
        %v3066 = vunpack.c.l.b16 %v2868
        %v3067 = vunpack.c.l.b16 %v2869
        %v3068 = vpack.c.b16 %v3065, %v3064
        %v3069 = vpack.c.b16 %v3067, %v3066
        %v3074 = vunpack.c.l.b16 %v2882
        %v3075 = vunpack.c.l.b16 %v2883
        %v3076 = vunpack.c.l.b16 %v2884
        %v3077 = vunpack.c.l.b16 %v2885
        %v3078 = vpack.c.b16 %v3075, %v3074
        %v3079 = vpack.c.b16 %v3077, %v3076
        %v3081 = vsel %vm2926, %v3068, 0
        %v3084 = vsel %vm2926, %v3069, 0
        %v3087 = vsel %vm2926, %v3078, 0
        %v3090 = vsel %vm2926, %v3079, 0
        %3092 = vmatpush.bf16.xpose.msra.mxu0 0
        %3093 = vmatpush.bf16.xpose.msra.mxu0 0
        %3094 = vmatpush.bf16.xpose.msra.mxu0 0
        %3095 = vmatpush.bf16.xpose.msra.mxu0 0
        %3096 = vmatpush.bf16.xpose.msra.mxu0 0
        %3097 = vmatpush.bf16.xpose.msra.mxu0 0
        %3098 = vmatpush.bf16.xpose.msra.mxu0 %v3090
        %3099 = vmatpush.bf16.xpose.msra.mxu0 %v3087
        %3100 = vmatmul.bf16.gmra.mxu0 %v3081
        %v3101 = vpop.f32.mrf.mxu0
        %v3102 = vadd.f32 %v2902, %v3101
        %v3103 = vpop.f32.mrf.mxu0
        %v3104 = vadd.f32 %v2903, %v3103
        %3105 = vmatmul.bf16.gmra.mxu0 %v3084
        %v3106 = vpop.f32.mrf.mxu0
        %v3107 = vadd.f32 %v2904, %v3106
        %v3108 = vpop.f32.mrf.mxu0
        %v3109 = vadd.f32 %v2905, %v3108
        %3110 = vdwg.mxu0
        %v3111 = vsel %vm2926, %v2949, -inf
        %3112 = vmax.xlane.f32.xlu0 %v3111
        %v3113 = vpop.xlane.xlu0 %3112
        %v3114 = vsel %vm2926, %v2951, -inf
        %3115 = vmax.xlane.f32.xlu0 %v3114
        %v3116 = vpop.xlane.xlu0 %3115
        %v3117 = vsel %vm2926, %v2954, -inf
        %3118 = vmax.xlane.f32.xlu0 %v3117
        %v3119 = vpop.xlane.xlu0 %3118
        %v3120 = vsel %vm2926, %v2956, -inf
        %3121 = vmax.xlane.f32.xlu0 %v3120
        %v3122 = vpop.xlane.xlu0 %3121
        %v3123 = vsel %vm2926, %v3000, -inf
        %3124 = vmax.xlane.f32.xlu0 %v3123
        %v3125 = vpop.xlane.xlu0 %3124
        %v3126 = vsel %vm2926, %v3002, -inf
        %3127 = vmax.xlane.f32.xlu0 %v3126
        %v3128 = vpop.xlane.xlu0 %3127
        %v3129 = vsel %vm2926, %v3005, -inf
        %3130 = vmax.xlane.f32.xlu0 %v3129
        %v3131 = vpop.xlane.xlu0 %3130
        %v3132 = vsel %vm2926, %v3007, -inf
        %3133 = vmax.xlane.f32.xlu0 %v3132
        %v3134 = vpop.xlane.xlu0 %3133
        %v3135 = vsel %vm2926, %v3051, -inf
        %3136 = vmax.xlane.f32.xlu0 %v3135
        %v3137 = vpop.xlane.xlu0 %3136
        %v3138 = vsel %vm2926, %v3053, -inf
        %3139 = vmax.xlane.f32.xlu0 %v3138
        %v3140 = vpop.xlane.xlu0 %3139
        %v3141 = vsel %vm2926, %v3056, -inf
        %3142 = vmax.xlane.f32.xlu0 %v3141
        %v3143 = vpop.xlane.xlu0 %3142
        %v3144 = vsel %vm2926, %v3058, -inf
        %3145 = vmax.xlane.f32.xlu0 %v3144
        %v3146 = vpop.xlane.xlu0 %3145
        %v3147 = vsel %vm2926, %v3102, -inf
        %3148 = vmax.xlane.f32.xlu0 %v3147
        %v3149 = vpop.xlane.xlu0 %3148
        %v3150 = vsel %vm2926, %v3104, -inf
        %3151 = vmax.xlane.f32.xlu0 %v3150
        %v3152 = vpop.xlane.xlu0 %3151
        %v3153 = vsel %vm2926, %v3107, -inf
        %3154 = vmax.xlane.f32.xlu0 %v3153
        %v3155 = vpop.xlane.xlu0 %3154
        %v3156 = vsel %vm2926, %v3109, -inf
        %3157 = vmax.xlane.f32.xlu0 %v3156
        %v3158 = vpop.xlane.xlu0 %3157
        %v3159 = vsub.f32 %v2949, %v3113
        %v3160 = vsub.f32 %v2951, %v3116
        %v3161 = vsub.f32 %v2954, %v3119
        %v3162 = vsub.f32 %v2956, %v3122
        %v3163 = vsub.f32 %v3000, %v3125
        %v3164 = vsub.f32 %v3002, %v3128
        %v3165 = vsub.f32 %v3005, %v3131
        %v3166 = vsub.f32 %v3007, %v3134
        %v3167 = vsub.f32 %v3051, %v3137
        %v3168 = vsub.f32 %v3053, %v3140
        %v3169 = vsub.f32 %v3056, %v3143
        %v3170 = vsub.f32 %v3058, %v3146
        %v3171 = vsub.f32 %v3102, %v3149
        %v3172 = vsub.f32 %v3104, %v3152
        %v3173 = vsub.f32 %v3107, %v3155
        %v3174 = vsub.f32 %v3109, %v3158
        %v3175 = vmul.f32 %v3159, 1.442695
        %v3176 = vpow.pop %v3175
        %v3177 = vmul.f32 %v3160, 1.442695
        %v3178 = vpow.pop %v3177
        %v3179 = vmul.f32 %v3161, 1.442695
        %v3180 = vpow.pop %v3179
        %v3181 = vmul.f32 %v3162, 1.442695
        %v3182 = vpow.pop %v3181
        %v3183 = vmul.f32 %v3163, 1.442695
        %v3184 = vpow.pop %v3183
        %v3185 = vmul.f32 %v3164, 1.442695
        %v3186 = vpow.pop %v3185
        %v3187 = vmul.f32 %v3165, 1.442695
        %v3188 = vpow.pop %v3187
        %v3189 = vmul.f32 %v3166, 1.442695
        %v3190 = vpow.pop %v3189
        %v3191 = vmul.f32 %v3167, 1.442695
        %v3192 = vpow.pop %v3191
        %v3193 = vmul.f32 %v3168, 1.442695
        %v3194 = vpow.pop %v3193
        %v3195 = vmul.f32 %v3169, 1.442695
        %v3196 = vpow.pop %v3195
        %v3197 = vmul.f32 %v3170, 1.442695
        %v3198 = vpow.pop %v3197
        %v3199 = vmul.f32 %v3171, 1.442695
        %v3200 = vpow.pop %v3199
        %v3201 = vmul.f32 %v3172, 1.442695
        %v3202 = vpow.pop %v3201
        %v3203 = vmul.f32 %v3173, 1.442695
        %v3204 = vpow.pop %v3203
        %v3205 = vmul.f32 %v3174, 1.442695
        %v3206 = vpow.pop %v3205
        %v3207 = vsel %vm2926, %v3176, 0.0
        %3208 = vadd.xlane.f32.xlu0 %v3207
        %v3209 = vpop.xlane.xlu0 %3208
        %v3210 = vsel %vm2926, %v3178, 0.0
        %3211 = vadd.xlane.f32.xlu0 %v3210
        %v3212 = vpop.xlane.xlu0 %3211
        %v3213 = vsel %vm2926, %v3180, 0.0
        %3214 = vadd.xlane.f32.xlu0 %v3213
        %v3215 = vpop.xlane.xlu0 %3214
        %v3216 = vsel %vm2926, %v3182, 0.0
        %3217 = vadd.xlane.f32.xlu0 %v3216
        %v3218 = vpop.xlane.xlu0 %3217
        %v3219 = vsel %vm2926, %v3184, 0.0
        %3220 = vadd.xlane.f32.xlu0 %v3219
        %v3221 = vpop.xlane.xlu0 %3220
        %v3222 = vsel %vm2926, %v3186, 0.0
        %3223 = vadd.xlane.f32.xlu0 %v3222
        %v3224 = vpop.xlane.xlu0 %3223
        %v3225 = vsel %vm2926, %v3188, 0.0
        %3226 = vadd.xlane.f32.xlu0 %v3225
        %v3227 = vpop.xlane.xlu0 %3226
        %v3228 = vsel %vm2926, %v3190, 0.0
        %3229 = vadd.xlane.f32.xlu0 %v3228
        %v3230 = vpop.xlane.xlu0 %3229
        %v3231 = vsel %vm2926, %v3192, 0.0
        %3232 = vadd.xlane.f32.xlu0 %v3231
        %v3233 = vpop.xlane.xlu0 %3232
        %v3234 = vsel %vm2926, %v3194, 0.0
        %3235 = vadd.xlane.f32.xlu0 %v3234
        %v3236 = vpop.xlane.xlu0 %3235
        %v3237 = vsel %vm2926, %v3196, 0.0
        %3238 = vadd.xlane.f32.xlu0 %v3237
        %v3239 = vpop.xlane.xlu0 %3238
        %v3240 = vsel %vm2926, %v3198, 0.0
        %3241 = vadd.xlane.f32.xlu0 %v3240
        %v3242 = vpop.xlane.xlu0 %3241
        %v3243 = vsel %vm2926, %v3200, 0.0
        %3244 = vadd.xlane.f32.xlu0 %v3243
        %v3245 = vpop.xlane.xlu0 %3244
        %v3246 = vsel %vm2926, %v3202, 0.0
        %3247 = vadd.xlane.f32.xlu0 %v3246
        %v3248 = vpop.xlane.xlu0 %3247
        %v3249 = vsel %vm2926, %v3204, 0.0
        %3250 = vadd.xlane.f32.xlu0 %v3249
        %v3251 = vpop.xlane.xlu0 %3250
        %v3252 = vsel %vm2926, %v3206, 0.0
        %3253 = vadd.xlane.f32.xlu0 %v3252
        %v3254 = vpop.xlane.xlu0 %3253
        %v3255 = vrcp.pop %v3209
        %v3256 = vrcp.pop %v3212
        %v3257 = vrcp.pop %v3215
        %v3258 = vrcp.pop %v3218
        %v3259 = vrcp.pop %v3221
        %v3260 = vrcp.pop %v3224
        %v3261 = vrcp.pop %v3227
        %v3262 = vrcp.pop %v3230
        %v3263 = vrcp.pop %v3233
        %v3264 = vrcp.pop %v3236
        %v3265 = vrcp.pop %v3239
        %v3266 = vrcp.pop %v3242
        %v3267 = vrcp.pop %v3245
        %v3268 = vrcp.pop %v3248
        %v3269 = vrcp.pop %v3251
        %v3270 = vrcp.pop %v3254
        %v3271 = vmul.f32 %v3176, %v3255
        %v3272 = vmul.f32 %v3178, %v3256
        %v3273 = vmul.f32 %v3180, %v3257
        %v3274 = vmul.f32 %v3182, %v3258
        %v3275 = vmul.f32 %v3184, %v3259
        %v3276 = vmul.f32 %v3186, %v3260
        %v3277 = vmul.f32 %v3188, %v3261
        %v3278 = vmul.f32 %v3190, %v3262
        %v3279 = vmul.f32 %v3192, %v3263
        %v3280 = vmul.f32 %v3194, %v3264
        %v3281 = vmul.f32 %v3196, %v3265
        %v3282 = vmul.f32 %v3198, %v3266
        %v3283 = vmul.f32 %v3200, %v3267
        %v3284 = vmul.f32 %v3202, %v3268
        %v3285 = vmul.f32 %v3204, %v3269
        %v3286 = vmul.f32 %v3206, %v3270
        %v3287 = vpack.c.bf16 %v3271, %v3271
        %v3288 = vpack.c.bf16 %v3272, %v3272
        %v3289 = vpack.c.bf16 %v3273, %v3273
        %v3290 = vpack.c.bf16 %v3274, %v3274
        %v3291 = vpack.c.bf16 %v3275, %v3275
        %v3292 = vpack.c.bf16 %v3276, %v3276
        %v3293 = vpack.c.bf16 %v3277, %v3277
        %v3294 = vpack.c.bf16 %v3278, %v3278
        %v3295 = vpack.c.bf16 %v3279, %v3279
        %v3296 = vpack.c.bf16 %v3280, %v3280
        %v3297 = vpack.c.bf16 %v3281, %v3281
        %v3298 = vpack.c.bf16 %v3282, %v3282
        %v3299 = vpack.c.bf16 %v3283, %v3283
        %v3300 = vpack.c.bf16 %v3284, %v3284
        %v3301 = vpack.c.bf16 %v3285, %v3285
        %v3302 = vpack.c.bf16 %v3286, %v3286
        %v3307 = vunpack.c.l.b16 %v3287
        %v3308 = vunpack.c.l.b16 %v3288
        %v3309 = vunpack.c.l.b16 %v3289
        %v3310 = vunpack.c.l.b16 %v3290
        %v3311 = vpack.c.b16 %v3308, %v3307
        %v3312 = vpack.c.b16 %v3310, %v3309
        %v3317 = vunpack.c.l.b16 %v2886
        %v3318 = vunpack.c.l.b16 %v2887
        %v3319 = vunpack.c.l.b16 %v2888
        %v3320 = vunpack.c.l.b16 %v2889
        %v3321 = vpack.c.b16 %v3318, %v3317
        %v3322 = vpack.c.b16 %v3320, %v3319
        %v3326 = vsel %vm2926, %v3311, 0
        %v3329 = vsel %vm2926, %v3312, 0
        %3331 = vmatpush.bf16.msra.mxu0 0
        %3332 = vmatpush.bf16.msra.mxu0 0
        %3333 = vmatpush.bf16.msra.mxu0 0
        %3334 = vmatpush.bf16.msra.mxu0 0
        %3335 = vmatpush.bf16.msra.mxu0 0
        %3336 = vmatpush.bf16.msra.mxu0 0
        %3337 = vmatpush.bf16.msra.mxu0 %v3322
        %3338 = vmatpush.bf16.msra.mxu0 %v3321
        %3339 = vmatmul.bf16.gmra.mxu0 %v3326
        %v3340 = vpop.f32.mrf.mxu0
        %v3341 = vadd.f32 0.0, %v3340
        %v3342 = vpop.f32.mrf.mxu0
        %v3343 = vadd.f32 0.0, %v3342
        %3344 = vmatmul.bf16.gmra.mxu0 %v3329
        %v3345 = vpop.f32.mrf.mxu0
        %v3346 = vadd.f32 0.0, %v3345
        %v3347 = vpop.f32.mrf.mxu0
        %v3348 = vadd.f32 0.0, %v3347
        %3349 = vdwg.mxu0
        %v3354 = vunpack.c.l.b16 %v3291
        %v3355 = vunpack.c.l.b16 %v3292
        %v3356 = vunpack.c.l.b16 %v3293
        %v3357 = vunpack.c.l.b16 %v3294
        %v3358 = vpack.c.b16 %v3355, %v3354
        %v3359 = vpack.c.b16 %v3357, %v3356
        %v3364 = vunpack.c.l.b16 %v2890
        %v3365 = vunpack.c.l.b16 %v2891
        %v3366 = vunpack.c.l.b16 %v2892
        %v3367 = vunpack.c.l.b16 %v2893
        %v3368 = vpack.c.b16 %v3365, %v3364
        %v3369 = vpack.c.b16 %v3367, %v3366
        %v3373 = vsel %vm2926, %v3358, 0
        %v3376 = vsel %vm2926, %v3359, 0
        %3378 = vmatpush.bf16.msra.mxu0 0
        %3379 = vmatpush.bf16.msra.mxu0 0
        %3380 = vmatpush.bf16.msra.mxu0 0
        %3381 = vmatpush.bf16.msra.mxu0 0
        %3382 = vmatpush.bf16.msra.mxu0 0
        %3383 = vmatpush.bf16.msra.mxu0 0
        %3384 = vmatpush.bf16.msra.mxu0 %v3369
        %3385 = vmatpush.bf16.msra.mxu0 %v3368
        %3386 = vmatmul.bf16.gmra.mxu0 %v3373
        %v3387 = vpop.f32.mrf.mxu0
        %v3388 = vadd.f32 0.0, %v3387
        %v3389 = vpop.f32.mrf.mxu0
        %v3390 = vadd.f32 0.0, %v3389
        %3391 = vmatmul.bf16.gmra.mxu0 %v3376
        %v3392 = vpop.f32.mrf.mxu0
        %v3393 = vadd.f32 0.0, %v3392
        %v3394 = vpop.f32.mrf.mxu0
        %v3395 = vadd.f32 0.0, %v3394
        %3396 = vdwg.mxu0
        %v3401 = vunpack.c.l.b16 %v3295
        %v3402 = vunpack.c.l.b16 %v3296
        %v3403 = vunpack.c.l.b16 %v3297
        %v3404 = vunpack.c.l.b16 %v3298
        %v3405 = vpack.c.b16 %v3402, %v3401
        %v3406 = vpack.c.b16 %v3404, %v3403
        %v3411 = vunpack.c.l.b16 %v2894
        %v3412 = vunpack.c.l.b16 %v2895
        %v3413 = vunpack.c.l.b16 %v2896
        %v3414 = vunpack.c.l.b16 %v2897
        %v3415 = vpack.c.b16 %v3412, %v3411
        %v3416 = vpack.c.b16 %v3414, %v3413
        %v3420 = vsel %vm2926, %v3405, 0
        %v3423 = vsel %vm2926, %v3406, 0
        %3425 = vmatpush.bf16.msra.mxu0 0
        %3426 = vmatpush.bf16.msra.mxu0 0
        %3427 = vmatpush.bf16.msra.mxu0 0
        %3428 = vmatpush.bf16.msra.mxu0 0
        %3429 = vmatpush.bf16.msra.mxu0 0
        %3430 = vmatpush.bf16.msra.mxu0 0
        %3431 = vmatpush.bf16.msra.mxu0 %v3416
        %3432 = vmatpush.bf16.msra.mxu0 %v3415
        %3433 = vmatmul.bf16.gmra.mxu0 %v3420
        %v3434 = vpop.f32.mrf.mxu0
        %v3435 = vadd.f32 0.0, %v3434
        %v3436 = vpop.f32.mrf.mxu0
        %v3437 = vadd.f32 0.0, %v3436
        %3438 = vmatmul.bf16.gmra.mxu0 %v3423
        %v3439 = vpop.f32.mrf.mxu0
        %v3440 = vadd.f32 0.0, %v3439
        %v3441 = vpop.f32.mrf.mxu0
        %v3442 = vadd.f32 0.0, %v3441
        %3443 = vdwg.mxu0
        %v3448 = vunpack.c.l.b16 %v3299
        %v3449 = vunpack.c.l.b16 %v3300
        %v3450 = vunpack.c.l.b16 %v3301
        %v3451 = vunpack.c.l.b16 %v3302
        %v3452 = vpack.c.b16 %v3449, %v3448
        %v3453 = vpack.c.b16 %v3451, %v3450
        %v3458 = vunpack.c.l.b16 %v2898
        %v3459 = vunpack.c.l.b16 %v2899
        %v3460 = vunpack.c.l.b16 %v2900
        %v3461 = vunpack.c.l.b16 %v2901
        %v3462 = vpack.c.b16 %v3459, %v3458
        %v3463 = vpack.c.b16 %v3461, %v3460
        %v3467 = vsel %vm2926, %v3452, 0
        %v3470 = vsel %vm2926, %v3453, 0
        %3472 = vmatpush.bf16.msra.mxu0 0
        %3473 = vmatpush.bf16.msra.mxu0 0
        %3474 = vmatpush.bf16.msra.mxu0 0
        %3475 = vmatpush.bf16.msra.mxu0 0
        %3476 = vmatpush.bf16.msra.mxu0 0
        %3477 = vmatpush.bf16.msra.mxu0 0
        %3478 = vmatpush.bf16.msra.mxu0 %v3463
        %3479 = vmatpush.bf16.msra.mxu0 %v3462
        %3480 = vmatmul.bf16.gmra.mxu0 %v3467
        %v3481 = vpop.f32.mrf.mxu0
        %v3482 = vadd.f32 0.0, %v3481
        %v3483 = vpop.f32.mrf.mxu0
        %v3484 = vadd.f32 0.0, %v3483
        %3485 = vmatmul.bf16.gmra.mxu0 %v3470
        %v3486 = vpop.f32.mrf.mxu0
        %v3487 = vadd.f32 0.0, %v3486
        %v3488 = vpop.f32.mrf.mxu0
        %v3489 = vadd.f32 0.0, %v3488
        %3490 = vdwg.mxu0
        %v3491 = vld [vmem:[%s842] sm:$0xf]
        %v3492 = vld [vmem:[%s842 + $0x4] sm:$0xf]
        %v3493 = vld [vmem:[%s842 + $0x8] sm:$0xf]
        %v3494 = vld [vmem:[%s842 + $0xc] sm:$0xf]
        %v3495 = vld [vmem:[%s842 + $0x10] sm:$0xf]
        %v3496 = vld [vmem:[%s842 + $0x14] sm:$0xf]
        %v3497 = vld [vmem:[%s842 + $0x18] sm:$0xf]
        %v3498 = vld [vmem:[%s842 + $0x1c] sm:$0xf]
        %v3499 = vld [vmem:[%s842 + $0x20] sm:$0xf]
        %v3500 = vld [vmem:[%s842 + $0x24] sm:$0xf]
        %v3501 = vld [vmem:[%s842 + $0x28] sm:$0xf]
        %v3502 = vld [vmem:[%s842 + $0x2c] sm:$0xf]
        %v3503 = vld [vmem:[%s842 + $0x30] sm:$0xf]
        %v3504 = vld [vmem:[%s842 + $0x34] sm:$0xf]
        %v3505 = vld [vmem:[%s842 + $0x38] sm:$0xf]
        %v3506 = vld [vmem:[%s842 + $0x3c] sm:$0xf]
        %v3507 = vpack.c.bf16 %v3343, %v3341
        %v3508 = vpack.c.bf16 %v3348, %v3346
        %v3509 = vpack.c.bf16 %v3390, %v3388
        %v3510 = vpack.c.bf16 %v3395, %v3393
        %v3515 = vunpack.c.l.b16 %v3495
        %v3516 = vunpack.c.l.b16 %v3496
        %v3517 = vunpack.c.l.b16 %v3497
        %v3518 = vunpack.c.l.b16 %v3498
        %v3519 = vpack.c.b16 %v3516, %v3515
        %v3520 = vpack.c.b16 %v3518, %v3517
        %v3524 = vsel %vm2926, %v3509, 0
        %v3527 = vsel %vm2926, %v3510, 0
        %3529 = vmatpush.bf16.msra.mxu0 0
        %3530 = vmatpush.bf16.msra.mxu0 0
        %3531 = vmatpush.bf16.msra.mxu0 0
        %3532 = vmatpush.bf16.msra.mxu0 0
        %3533 = vmatpush.bf16.msra.mxu0 0
        %3534 = vmatpush.bf16.msra.mxu0 0
        %3535 = vmatpush.bf16.msra.mxu0 %v3520
        %3536 = vmatpush.bf16.msra.mxu0 %v3519
        %3537 = vmatmul.bf16.gmra.mxu0 %v3524
        %v3538 = vpop.f32.mrf.mxu0
        %v3539 = vadd.f32 0.0, %v3538
        %v3540 = vpop.f32.mrf.mxu0
        %v3541 = vadd.f32 0.0, %v3540
        %3542 = vmatmul.bf16.gmra.mxu0 %v3527
        %v3543 = vpop.f32.mrf.mxu0
        %v3544 = vadd.f32 0.0, %v3543
        %v3545 = vpop.f32.mrf.mxu0
        %v3546 = vadd.f32 0.0, %v3545
        %3547 = vdwg.mxu0
        %v3552 = vunpack.c.l.b16 %v3491
        %v3553 = vunpack.c.l.b16 %v3492
        %v3554 = vunpack.c.l.b16 %v3493
        %v3555 = vunpack.c.l.b16 %v3494
        %v3556 = vpack.c.b16 %v3553, %v3552
        %v3557 = vpack.c.b16 %v3555, %v3554
        %v3561 = vsel %vm2926, %v3507, 0
        %v3564 = vsel %vm2926, %v3508, 0
        %3566 = vmatpush.bf16.msra.mxu0 0
        %3567 = vmatpush.bf16.msra.mxu0 0
        %3568 = vmatpush.bf16.msra.mxu0 0
        %3569 = vmatpush.bf16.msra.mxu0 0
        %3570 = vmatpush.bf16.msra.mxu0 0
        %3571 = vmatpush.bf16.msra.mxu0 0
        %3572 = vmatpush.bf16.msra.mxu0 %v3557
        %3573 = vmatpush.bf16.msra.mxu0 %v3556
        %3574 = vmatmul.bf16.gmra.mxu0 %v3561
        %v3575 = vpop.f32.mrf.mxu0
        %v3576 = vadd.f32 %v3539, %v3575
        %v3577 = vpop.f32.mrf.mxu0
        %v3578 = vadd.f32 %v3541, %v3577
        %3579 = vmatmul.bf16.gmra.mxu0 %v3564
        %v3580 = vpop.f32.mrf.mxu0
        %v3581 = vadd.f32 %v3544, %v3580
        %v3582 = vpop.f32.mrf.mxu0
        %v3583 = vadd.f32 %v3546, %v3582
        %3584 = vdwg.mxu0
        %v3585 = vpack.c.bf16 %v3437, %v3435
        %v3586 = vpack.c.bf16 %v3442, %v3440
        %v3591 = vunpack.c.l.b16 %v3499
        %v3592 = vunpack.c.l.b16 %v3500
        %v3593 = vunpack.c.l.b16 %v3501
        %v3594 = vunpack.c.l.b16 %v3502
        %v3595 = vpack.c.b16 %v3592, %v3591
        %v3596 = vpack.c.b16 %v3594, %v3593
        %v3600 = vsel %vm2926, %v3585, 0
        %v3603 = vsel %vm2926, %v3586, 0
        %3605 = vmatpush.bf16.msra.mxu0 0
        %3606 = vmatpush.bf16.msra.mxu0 0
        %3607 = vmatpush.bf16.msra.mxu0 0
        %3608 = vmatpush.bf16.msra.mxu0 0
        %3609 = vmatpush.bf16.msra.mxu0 0
        %3610 = vmatpush.bf16.msra.mxu0 0
        %3611 = vmatpush.bf16.msra.mxu0 %v3596
        %3612 = vmatpush.bf16.msra.mxu0 %v3595
        %3613 = vmatmul.bf16.gmra.mxu0 %v3600
        %v3614 = vpop.f32.mrf.mxu0
        %v3615 = vadd.f32 0.0, %v3614
        %v3616 = vpop.f32.mrf.mxu0
        %v3617 = vadd.f32 0.0, %v3616
        %3618 = vmatmul.bf16.gmra.mxu0 %v3603
        %v3619 = vpop.f32.mrf.mxu0
        %v3620 = vadd.f32 0.0, %v3619
        %v3621 = vpop.f32.mrf.mxu0
        %v3622 = vadd.f32 0.0, %v3621
        %3623 = vdwg.mxu0
        %v3624 = vadd.f32 %v3576, %v3615
        %v3625 = vadd.f32 %v3578, %v3617
        %v3626 = vadd.f32 %v3581, %v3620
        %v3627 = vadd.f32 %v3583, %v3622
        %v3628 = vpack.c.bf16 %v3484, %v3482
        %v3629 = vpack.c.bf16 %v3489, %v3487
        %v3634 = vunpack.c.l.b16 %v3503
        %v3635 = vunpack.c.l.b16 %v3504
        %v3636 = vunpack.c.l.b16 %v3505
        %v3637 = vunpack.c.l.b16 %v3506
        %v3638 = vpack.c.b16 %v3635, %v3634
        %v3639 = vpack.c.b16 %v3637, %v3636
        %v3643 = vsel %vm2926, %v3628, 0
        %v3646 = vsel %vm2926, %v3629, 0
        %3648 = vmatpush.bf16.msra.mxu0 0
        %3649 = vmatpush.bf16.msra.mxu0 0
        %3650 = vmatpush.bf16.msra.mxu0 0
        %3651 = vmatpush.bf16.msra.mxu0 0
        %3652 = vmatpush.bf16.msra.mxu0 0
        %3653 = vmatpush.bf16.msra.mxu0 0
        %3654 = vmatpush.bf16.msra.mxu0 %v3639
        %3655 = vmatpush.bf16.msra.mxu0 %v3638
        %3656 = vmatmul.bf16.gmra.mxu0 %v3643
        %v3657 = vpop.f32.mrf.mxu0
        %v3658 = vadd.f32 0.0, %v3657
        %v3659 = vpop.f32.mrf.mxu0
        %v3660 = vadd.f32 0.0, %v3659
        %3661 = vmatmul.bf16.gmra.mxu0 %v3646
        %v3662 = vpop.f32.mrf.mxu0
        %v3663 = vadd.f32 0.0, %v3662
        %v3664 = vpop.f32.mrf.mxu0
        %v3665 = vadd.f32 0.0, %v3664
        %3666 = vdwg.mxu0
        %v3667 = vadd.f32 %v3624, %v3658
        %v3668 = vadd.f32 %v3625, %v3660
        %v3669 = vadd.f32 %v3626, %v3663
        %v3670 = vadd.f32 %v3627, %v3665
        %v3671 = vld [vmem:[%s851] sm:$0x1]
        %v3673 = vperm.slane %v3671, 0
        %v3675 = vadd.f32 %v3667, %v3673
        %v3676 = vadd.f32 %v3668, %v3673
        %v3677 = vadd.f32 %v3669, %v3673
        %v3678 = vadd.f32 %v3670, %v3673
        %v3679 = vadd.f32 %v1150, %v3675
        %v3680 = vadd.f32 %v1151, %v3676
        %v3681 = vadd.f32 %v1152, %v3677
        %v3682 = vadd.f32 %v1153, %v3678
        %v3683 = vld [vmem:[%s860] sm:$0x1]
        %v3684 = vld [vmem:[%s869] sm:$0x1]
        %3685 = vadd.xlane.f32.xlu0 %v3679
        %v3686 = vpop.xlane.xlu0 %3685
        %3687 = vadd.xlane.f32.xlu0 %v3680
        %v3688 = vpop.xlane.xlu0 %3687
        %3689 = vadd.xlane.f32.xlu0 %v3681
        %v3690 = vpop.xlane.xlu0 %3689
        %3691 = vadd.xlane.f32.xlu0 %v3682
        %v3692 = vpop.xlane.xlu0 %3691
        %v3693 = vrcp.pop 128.0
        %v3694 = vmul.f32 128.0, %v3693
        %v3695 = vsub.f32 1.0, %v3694
        %v3696 = vmul.f32 %v3693, %v3695
        %v3697 = vadd.f32 %v3693, %v3696
        %vm3698 = vweird.f32 %v3693
        %v3699 = vsel %vm3698, %v3693, %v3697
        %v3700 = vmul.f32 %v3686, %v3699
        %v3701 = vmul.f32 %v3688, %v3699
        %v3702 = vmul.f32 %v3690, %v3699
        %v3703 = vmul.f32 %v3692, %v3699
        %v3704 = vmul.f32 %v3679, %v3679
        %v3705 = vmul.f32 %v3680, %v3680
        %v3706 = vmul.f32 %v3681, %v3681
        %v3707 = vmul.f32 %v3682, %v3682
        %3708 = vadd.xlane.f32.xlu0 %v3704
        %v3709 = vpop.xlane.xlu0 %3708
        %3710 = vadd.xlane.f32.xlu0 %v3705
        %v3711 = vpop.xlane.xlu0 %3710
        %3712 = vadd.xlane.f32.xlu0 %v3706
        %v3713 = vpop.xlane.xlu0 %3712
        %3714 = vadd.xlane.f32.xlu0 %v3707
        %v3715 = vpop.xlane.xlu0 %3714
        %v3716 = vmul.f32 %v3709, %v3699
        %v3717 = vmul.f32 %v3711, %v3699
        %v3718 = vmul.f32 %v3713, %v3699
        %v3719 = vmul.f32 %v3715, %v3699
        %v3720 = vmul.f32 %v3700, %v3700
        %v3721 = vmul.f32 %v3701, %v3701
        %v3722 = vmul.f32 %v3702, %v3702
        %v3723 = vmul.f32 %v3703, %v3703
        %v3724 = vsub.f32 %v3716, %v3720
        %v3725 = vsub.f32 %v3717, %v3721
        %v3726 = vsub.f32 %v3718, %v3722
        %v3727 = vsub.f32 %v3719, %v3723
        %v3728 = vmax.f32 %v3724, 0.0
        %v3729 = vmax.f32 %v3725, 0.0
        %v3730 = vmax.f32 %v3726, 0.0
        %v3731 = vmax.f32 %v3727, 0.0
        %v3732 = vsub.f32 %v3679, %v3700
        %v3733 = vsub.f32 %v3680, %v3701
        %v3734 = vsub.f32 %v3681, %v3702
        %v3735 = vsub.f32 %v3682, %v3703
        %v3736 = vadd.f32 %v3728, 1e-12
        %v3737 = vadd.f32 %v3729, 1e-12
        %v3738 = vadd.f32 %v3730, 1e-12
        %v3739 = vadd.f32 %v3731, 1e-12
        %v3740 = vrsqrt.pop %v3736
        %v3741 = vmul.f32 %v3740, %v3736
        %v3742 = vmul.f32 %v3741, %v3740
        %v3743 = vmul.f32 0.5, %v3742
        %v3744 = vsub.f32 1.5, %v3743
        %v3745 = vmul.f32 %v3740, %v3744
        %vm3746 = vweird.f32 %v3736
        %vm3747 = vweird.f32 %v3740
        %vm3748 = vmor %vm3746, %vm3747
        %v3749 = vsel %vm3748, %v3740, %v3745
        %v3750 = vrsqrt.pop %v3737
        %v3751 = vmul.f32 %v3750, %v3737
        %v3752 = vmul.f32 %v3751, %v3750
        %v3753 = vmul.f32 0.5, %v3752
        %v3754 = vsub.f32 1.5, %v3753
        %v3755 = vmul.f32 %v3750, %v3754
        %vm3756 = vweird.f32 %v3737
        %vm3757 = vweird.f32 %v3750
        %vm3758 = vmor %vm3756, %vm3757
        %v3759 = vsel %vm3758, %v3750, %v3755
        %v3760 = vrsqrt.pop %v3738
        %v3761 = vmul.f32 %v3760, %v3738
        %v3762 = vmul.f32 %v3761, %v3760
        %v3763 = vmul.f32 0.5, %v3762
        %v3764 = vsub.f32 1.5, %v3763
        %v3765 = vmul.f32 %v3760, %v3764
        %vm3766 = vweird.f32 %v3738
        %vm3767 = vweird.f32 %v3760
        %vm3768 = vmor %vm3766, %vm3767
        %v3769 = vsel %vm3768, %v3760, %v3765
        %v3770 = vrsqrt.pop %v3739
        %v3771 = vmul.f32 %v3770, %v3739
        %v3772 = vmul.f32 %v3771, %v3770
        %v3773 = vmul.f32 0.5, %v3772
        %v3774 = vsub.f32 1.5, %v3773
        %v3775 = vmul.f32 %v3770, %v3774
        %vm3776 = vweird.f32 %v3739
        %vm3777 = vweird.f32 %v3770
        %vm3778 = vmor %vm3776, %vm3777
        %v3779 = vsel %vm3778, %v3770, %v3775
        %v3780 = vmul.f32 %v3732, %v3749
        %v3781 = vmul.f32 %v3733, %v3759
        %v3782 = vmul.f32 %v3734, %v3769
        %v3783 = vmul.f32 %v3735, %v3779
        %v3785 = vperm.slane %v3683, 0
        %v3787 = vmul.f32 %v3780, %v3785
        %v3788 = vmul.f32 %v3781, %v3785
        %v3789 = vmul.f32 %v3782, %v3785
        %v3790 = vmul.f32 %v3783, %v3785
        %v3792 = vperm.slane %v3684, 0
        %v3794 = vadd.f32 %v3787, %v3792
        %v3795 = vadd.f32 %v3788, %v3792
        %v3796 = vadd.f32 %v3789, %v3792
        %v3797 = vadd.f32 %v3790, %v3792
        %v3798 = vpack.c.bf16 %v3795, %v3794
        %v3799 = vpack.c.bf16 %v3797, %v3796
        %v3800 = vld [vmem:[%s879] sm:$0xff]
        %v3801 = vld [vmem:[%s879 + $0x8] sm:$0xff]
        %v3802 = vld [vmem:[%s879 + $0x10] sm:$0xff]
        %v3803 = vld [vmem:[%s879 + $0x18] sm:$0xff]
        %v3804 = vld [vmem:[%s879 + $0x20] sm:$0xff]
        %v3805 = vld [vmem:[%s879 + $0x28] sm:$0xff]
        %v3806 = vld [vmem:[%s879 + $0x30] sm:$0xff]
        %v3807 = vld [vmem:[%s879 + $0x38] sm:$0xff]
        %v3808 = vld [vmem:[%s879 + $0x40] sm:$0xff]
        %v3809 = vld [vmem:[%s879 + $0x48] sm:$0xff]
        %v3810 = vld [vmem:[%s879 + $0x50] sm:$0xff]
        %v3811 = vld [vmem:[%s879 + $0x58] sm:$0xff]
        %v3812 = vld [vmem:[%s879 + $0x60] sm:$0xff]
        %v3813 = vld [vmem:[%s879 + $0x68] sm:$0xff]
        %v3814 = vld [vmem:[%s879 + $0x70] sm:$0xff]
        %v3815 = vld [vmem:[%s879 + $0x78] sm:$0xff]
        %v3816 = vld [vmem:[%s879 + $0x80] sm:$0xff]
        %v3817 = vld [vmem:[%s879 + $0x88] sm:$0xff]
        %v3818 = vld [vmem:[%s879 + $0x90] sm:$0xff]
        %v3819 = vld [vmem:[%s879 + $0x98] sm:$0xff]
        %v3820 = vld [vmem:[%s879 + $0xa0] sm:$0xff]
        %v3821 = vld [vmem:[%s879 + $0xa8] sm:$0xff]
        %v3822 = vld [vmem:[%s879 + $0xb0] sm:$0xff]
        %v3823 = vld [vmem:[%s879 + $0xb8] sm:$0xff]
        %v3824 = vld [vmem:[%s879 + $0xc0] sm:$0xff]
        %v3825 = vld [vmem:[%s879 + $0xc8] sm:$0xff]
        %v3826 = vld [vmem:[%s879 + $0xd0] sm:$0xff]
        %v3827 = vld [vmem:[%s879 + $0xd8] sm:$0xff]
        %v3828 = vld [vmem:[%s879 + $0xe0] sm:$0xff]
        %v3829 = vld [vmem:[%s879 + $0xe8] sm:$0xff]
        %v3830 = vld [vmem:[%s879 + $0xf0] sm:$0xff]
        %v3831 = vld [vmem:[%s879 + $0xf8] sm:$0xff]
        %v3832 = vld [vmem:[%s1021] sm:$0xf]
        %v3834 = vperm.slane %v3832, 0
        %v3835 = vperm.slane %v3832, 1
        %v3836 = vperm.slane %v3832, 2
        %v3837 = vperm.slane %v3832, 3
        %v3874 = vunpack.c.l.b16 %v3800
        %v3875 = vunpack.c.h.b16 %v3800
        %v3876 = vunpack.c.l.b16 %v3801
        %v3877 = vunpack.c.h.b16 %v3801
        %v3878 = vunpack.c.l.b16 %v3802
        %v3879 = vunpack.c.h.b16 %v3802
        %v3880 = vunpack.c.l.b16 %v3803
        %v3881 = vunpack.c.h.b16 %v3803
        %v3882 = vunpack.c.l.b16 %v3804
        %v3883 = vunpack.c.h.b16 %v3804
        %v3884 = vunpack.c.l.b16 %v3805
        %v3885 = vunpack.c.h.b16 %v3805
        %v3886 = vunpack.c.l.b16 %v3806
        %v3887 = vunpack.c.h.b16 %v3806
        %v3888 = vunpack.c.l.b16 %v3807
        %v3889 = vunpack.c.h.b16 %v3807
        %v3890 = vunpack.c.l.b16 %v3808
        %v3891 = vunpack.c.h.b16 %v3808
        %v3892 = vunpack.c.l.b16 %v3809
        %v3893 = vunpack.c.h.b16 %v3809
        %v3894 = vunpack.c.l.b16 %v3810
        %v3895 = vunpack.c.h.b16 %v3810
        %v3896 = vunpack.c.l.b16 %v3811
        %v3897 = vunpack.c.h.b16 %v3811
        %v3898 = vunpack.c.l.b16 %v3812
        %v3899 = vunpack.c.h.b16 %v3812
        %v3900 = vunpack.c.l.b16 %v3813
        %v3901 = vunpack.c.h.b16 %v3813
        %v3902 = vunpack.c.l.b16 %v3814
        %v3903 = vunpack.c.h.b16 %v3814
        %v3904 = vunpack.c.l.b16 %v3815
        %v3905 = vunpack.c.h.b16 %v3815
        %v3906 = vunpack.c.l.b16 %v3816
        %v3907 = vunpack.c.h.b16 %v3816
        %v3908 = vunpack.c.l.b16 %v3817
        %v3909 = vunpack.c.h.b16 %v3817
        %v3910 = vunpack.c.l.b16 %v3818
        %v3911 = vunpack.c.h.b16 %v3818
        %v3912 = vunpack.c.l.b16 %v3819
        %v3913 = vunpack.c.h.b16 %v3819
        %v3914 = vunpack.c.l.b16 %v3820
        %v3915 = vunpack.c.h.b16 %v3820
        %v3916 = vunpack.c.l.b16 %v3821
        %v3917 = vunpack.c.h.b16 %v3821
        %v3918 = vunpack.c.l.b16 %v3822
        %v3919 = vunpack.c.h.b16 %v3822
        %v3920 = vunpack.c.l.b16 %v3823
        %v3921 = vunpack.c.h.b16 %v3823
        %v3922 = vunpack.c.l.b16 %v3824
        %v3923 = vunpack.c.h.b16 %v3824
        %v3924 = vunpack.c.l.b16 %v3825
        %v3925 = vunpack.c.h.b16 %v3825
        %v3926 = vunpack.c.l.b16 %v3826
        %v3927 = vunpack.c.h.b16 %v3826
        %v3928 = vunpack.c.l.b16 %v3827
        %v3929 = vunpack.c.h.b16 %v3827
        %v3930 = vunpack.c.l.b16 %v3828
        %v3931 = vunpack.c.h.b16 %v3828
        %v3932 = vunpack.c.l.b16 %v3829
        %v3933 = vunpack.c.h.b16 %v3829
        %v3934 = vunpack.c.l.b16 %v3830
        %v3935 = vunpack.c.h.b16 %v3830
        %v3936 = vunpack.c.l.b16 %v3831
        %v3937 = vunpack.c.h.b16 %v3831
        %v3938 = vpack.c.b16 %v3878, %v3874
        %v3939 = vpack.c.b16 %v3879, %v3875
        %v3940 = vpack.c.b16 %v3880, %v3876
        %v3941 = vpack.c.b16 %v3881, %v3877
        %v3942 = vpack.c.b16 %v3886, %v3882
        %v3943 = vpack.c.b16 %v3887, %v3883
        %v3944 = vpack.c.b16 %v3888, %v3884
        %v3945 = vpack.c.b16 %v3889, %v3885
        %v3946 = vpack.c.b16 %v3894, %v3890
        %v3947 = vpack.c.b16 %v3895, %v3891
        %v3948 = vpack.c.b16 %v3896, %v3892
        %v3949 = vpack.c.b16 %v3897, %v3893
        %v3950 = vpack.c.b16 %v3902, %v3898
        %v3951 = vpack.c.b16 %v3903, %v3899
        %v3952 = vpack.c.b16 %v3904, %v3900
        %v3953 = vpack.c.b16 %v3905, %v3901
        %v3954 = vpack.c.b16 %v3910, %v3906
        %v3955 = vpack.c.b16 %v3911, %v3907
        %v3956 = vpack.c.b16 %v3912, %v3908
        %v3957 = vpack.c.b16 %v3913, %v3909
        %v3958 = vpack.c.b16 %v3918, %v3914
        %v3959 = vpack.c.b16 %v3919, %v3915
        %v3960 = vpack.c.b16 %v3920, %v3916
        %v3961 = vpack.c.b16 %v3921, %v3917
        %v3962 = vpack.c.b16 %v3926, %v3922
        %v3963 = vpack.c.b16 %v3927, %v3923
        %v3964 = vpack.c.b16 %v3928, %v3924
        %v3965 = vpack.c.b16 %v3929, %v3925
        %v3966 = vpack.c.b16 %v3934, %v3930
        %v3967 = vpack.c.b16 %v3935, %v3931
        %v3968 = vpack.c.b16 %v3936, %v3932
        %v3969 = vpack.c.b16 %v3937, %v3933
        %4002 = vmatpush.bf16.msra.mxu0 %v3966
        %4003 = vmatpush.bf16.msra.mxu0 %v3962
        %4004 = vmatpush.bf16.msra.mxu0 %v3958
        %4005 = vmatpush.bf16.msra.mxu0 %v3954
        %4006 = vmatpush.bf16.msra.mxu0 %v3950
        %4007 = vmatpush.bf16.msra.mxu0 %v3946
        %4008 = vmatpush.bf16.msra.mxu0 %v3942
        %4009 = vmatpush.bf16.msra.mxu0 %v3938
        %4010 = vmatmul.bf16.gmra.mxu0 %v3798
        %v4011 = vpop.f32.mrf.mxu0
        %v4012 = vadd.f32 %v3834, %v4011
        %v4013 = vpop.f32.mrf.mxu0
        %v4014 = vadd.f32 %v3834, %v4013
        %4015 = vmatmul.bf16.gmra.mxu0 %v3799
        %v4016 = vpop.f32.mrf.mxu0
        %v4017 = vadd.f32 %v3834, %v4016
        %v4018 = vpop.f32.mrf.mxu0
        %v4019 = vadd.f32 %v3834, %v4018
        %4020 = vdwg.mxu0
        %4021 = vmatpush.bf16.msra.mxu0 %v3967
        %4022 = vmatpush.bf16.msra.mxu0 %v3963
        %4023 = vmatpush.bf16.msra.mxu0 %v3959
        %4024 = vmatpush.bf16.msra.mxu0 %v3955
        %4025 = vmatpush.bf16.msra.mxu0 %v3951
        %4026 = vmatpush.bf16.msra.mxu0 %v3947
        %4027 = vmatpush.bf16.msra.mxu0 %v3943
        %4028 = vmatpush.bf16.msra.mxu0 %v3939
        %4029 = vmatmul.bf16.gmra.mxu0 %v3798
        %v4030 = vpop.f32.mrf.mxu0
        %v4031 = vadd.f32 %v3835, %v4030
        %v4032 = vpop.f32.mrf.mxu0
        %v4033 = vadd.f32 %v3835, %v4032
        %4034 = vmatmul.bf16.gmra.mxu0 %v3799
        %v4035 = vpop.f32.mrf.mxu0
        %v4036 = vadd.f32 %v3835, %v4035
        %v4037 = vpop.f32.mrf.mxu0
        %v4038 = vadd.f32 %v3835, %v4037
        %4039 = vdwg.mxu0
        %4040 = vmatpush.bf16.msra.mxu0 %v3968
        %4041 = vmatpush.bf16.msra.mxu0 %v3964
        %4042 = vmatpush.bf16.msra.mxu0 %v3960
        %4043 = vmatpush.bf16.msra.mxu0 %v3956
        %4044 = vmatpush.bf16.msra.mxu0 %v3952
        %4045 = vmatpush.bf16.msra.mxu0 %v3948
        %4046 = vmatpush.bf16.msra.mxu0 %v3944
        %4047 = vmatpush.bf16.msra.mxu0 %v3940
        %4048 = vmatmul.bf16.gmra.mxu0 %v3798
        %v4049 = vpop.f32.mrf.mxu0
        %v4050 = vadd.f32 %v3836, %v4049
        %v4051 = vpop.f32.mrf.mxu0
        %v4052 = vadd.f32 %v3836, %v4051
        %4053 = vmatmul.bf16.gmra.mxu0 %v3799
        %v4054 = vpop.f32.mrf.mxu0
        %v4055 = vadd.f32 %v3836, %v4054
        %v4056 = vpop.f32.mrf.mxu0
        %v4057 = vadd.f32 %v3836, %v4056
        %4058 = vdwg.mxu0
        %4059 = vmatpush.bf16.msra.mxu0 %v3969
        %4060 = vmatpush.bf16.msra.mxu0 %v3965
        %4061 = vmatpush.bf16.msra.mxu0 %v3961
        %4062 = vmatpush.bf16.msra.mxu0 %v3957
        %4063 = vmatpush.bf16.msra.mxu0 %v3953
        %4064 = vmatpush.bf16.msra.mxu0 %v3949
        %4065 = vmatpush.bf16.msra.mxu0 %v3945
        %4066 = vmatpush.bf16.msra.mxu0 %v3941
        %4067 = vmatmul.bf16.gmra.mxu0 %v3798
        %v4068 = vpop.f32.mrf.mxu0
        %v4069 = vadd.f32 %v3837, %v4068
        %v4070 = vpop.f32.mrf.mxu0
        %v4071 = vadd.f32 %v3837, %v4070
        %4072 = vmatmul.bf16.gmra.mxu0 %v3799
        %v4073 = vpop.f32.mrf.mxu0
        %v4074 = vadd.f32 %v3837, %v4073
        %v4075 = vpop.f32.mrf.mxu0
        %v4076 = vadd.f32 %v3837, %v4075
        %4077 = vdwg.mxu0
        %v4078 = vmul.f32 %v4012, 0.5
        %v4079 = vmul.f32 %v4031, 0.5
        %v4080 = vmul.f32 %v4050, 0.5
        %v4081 = vmul.f32 %v4069, 0.5
        %v4082 = vmul.f32 %v4014, 0.5
        %v4083 = vmul.f32 %v4033, 0.5
        %v4084 = vmul.f32 %v4052, 0.5
        %v4085 = vmul.f32 %v4071, 0.5
        %v4086 = vmul.f32 %v4017, 0.5
        %v4087 = vmul.f32 %v4036, 0.5
        %v4088 = vmul.f32 %v4055, 0.5
        %v4089 = vmul.f32 %v4074, 0.5
        %v4090 = vmul.f32 %v4019, 0.5
        %v4091 = vmul.f32 %v4038, 0.5
        %v4092 = vmul.f32 %v4057, 0.5
        %v4093 = vmul.f32 %v4076, 0.5
        %v4094 = vmul.f32 %v4012, 0.044715
        %v4095 = vmul.f32 %v4031, 0.044715
        %v4096 = vmul.f32 %v4050, 0.044715
        %v4097 = vmul.f32 %v4069, 0.044715
        %v4098 = vmul.f32 %v4014, 0.044715
        %v4099 = vmul.f32 %v4033, 0.044715
        %v4100 = vmul.f32 %v4052, 0.044715
        %v4101 = vmul.f32 %v4071, 0.044715
        %v4102 = vmul.f32 %v4017, 0.044715
        %v4103 = vmul.f32 %v4036, 0.044715
        %v4104 = vmul.f32 %v4055, 0.044715
        %v4105 = vmul.f32 %v4074, 0.044715
        %v4106 = vmul.f32 %v4019, 0.044715
        %v4107 = vmul.f32 %v4038, 0.044715
        %v4108 = vmul.f32 %v4057, 0.044715
        %v4109 = vmul.f32 %v4076, 0.044715
        %v4110 = vmul.f32 %v4094, %v4012
        %v4111 = vmul.f32 %v4095, %v4031
        %v4112 = vmul.f32 %v4096, %v4050
        %v4113 = vmul.f32 %v4097, %v4069
        %v4114 = vmul.f32 %v4098, %v4014
        %v4115 = vmul.f32 %v4099, %v4033
        %v4116 = vmul.f32 %v4100, %v4052
        %v4117 = vmul.f32 %v4101, %v4071
        %v4118 = vmul.f32 %v4102, %v4017
        %v4119 = vmul.f32 %v4103, %v4036
        %v4120 = vmul.f32 %v4104, %v4055
        %v4121 = vmul.f32 %v4105, %v4074
        %v4122 = vmul.f32 %v4106, %v4019
        %v4123 = vmul.f32 %v4107, %v4038
        %v4124 = vmul.f32 %v4108, %v4057
        %v4125 = vmul.f32 %v4109, %v4076
        %v4126 = vmul.f32 %v4110, %v4012
        %v4127 = vmul.f32 %v4111, %v4031
        %v4128 = vmul.f32 %v4112, %v4050
        %v4129 = vmul.f32 %v4113, %v4069
        %v4130 = vmul.f32 %v4114, %v4014
        %v4131 = vmul.f32 %v4115, %v4033
        %v4132 = vmul.f32 %v4116, %v4052
        %v4133 = vmul.f32 %v4117, %v4071
        %v4134 = vmul.f32 %v4118, %v4017
        %v4135 = vmul.f32 %v4119, %v4036
        %v4136 = vmul.f32 %v4120, %v4055
        %v4137 = vmul.f32 %v4121, %v4074
        %v4138 = vmul.f32 %v4122, %v4019
        %v4139 = vmul.f32 %v4123, %v4038
        %v4140 = vmul.f32 %v4124, %v4057
        %v4141 = vmul.f32 %v4125, %v4076
        %v4142 = vadd.f32 %v4012, %v4126
        %v4143 = vadd.f32 %v4031, %v4127
        %v4144 = vadd.f32 %v4050, %v4128
        %v4145 = vadd.f32 %v4069, %v4129
        %v4146 = vadd.f32 %v4014, %v4130
        %v4147 = vadd.f32 %v4033, %v4131
        %v4148 = vadd.f32 %v4052, %v4132
        %v4149 = vadd.f32 %v4071, %v4133
        %v4150 = vadd.f32 %v4017, %v4134
        %v4151 = vadd.f32 %v4036, %v4135
        %v4152 = vadd.f32 %v4055, %v4136
        %v4153 = vadd.f32 %v4074, %v4137
        %v4154 = vadd.f32 %v4019, %v4138
        %v4155 = vadd.f32 %v4038, %v4139
        %v4156 = vadd.f32 %v4057, %v4140
        %v4157 = vadd.f32 %v4076, %v4141
        %v4158 = vmul.f32 %v4142, 0.7978846
        %v4159 = vmul.f32 %v4143, 0.7978846
        %v4160 = vmul.f32 %v4144, 0.7978846
        %v4161 = vmul.f32 %v4145, 0.7978846
        %v4162 = vmul.f32 %v4146, 0.7978846
        %v4163 = vmul.f32 %v4147, 0.7978846
        %v4164 = vmul.f32 %v4148, 0.7978846
        %v4165 = vmul.f32 %v4149, 0.7978846
        %v4166 = vmul.f32 %v4150, 0.7978846
        %v4167 = vmul.f32 %v4151, 0.7978846
        %v4168 = vmul.f32 %v4152, 0.7978846
        %v4169 = vmul.f32 %v4153, 0.7978846
        %v4170 = vmul.f32 %v4154, 0.7978846
        %v4171 = vmul.f32 %v4155, 0.7978846
        %v4172 = vmul.f32 %v4156, 0.7978846
        %v4173 = vmul.f32 %v4157, 0.7978846
        %v4174 = vtanh.pop %v4158
        %v4175 = vtanh.pop %v4159
        %v4176 = vtanh.pop %v4160
        %v4177 = vtanh.pop %v4161
        %v4178 = vtanh.pop %v4162
        %v4179 = vtanh.pop %v4163
        %v4180 = vtanh.pop %v4164
        %v4181 = vtanh.pop %v4165
        %v4182 = vtanh.pop %v4166
        %v4183 = vtanh.pop %v4167
        %v4184 = vtanh.pop %v4168
        %v4185 = vtanh.pop %v4169
        %v4186 = vtanh.pop %v4170
        %v4187 = vtanh.pop %v4171
        %v4188 = vtanh.pop %v4172
        %v4189 = vtanh.pop %v4173
        %v4190 = vadd.f32 %v4174, 1.0
        %v4191 = vadd.f32 %v4175, 1.0
        %v4192 = vadd.f32 %v4176, 1.0
        %v4193 = vadd.f32 %v4177, 1.0
        %v4194 = vadd.f32 %v4178, 1.0
        %v4195 = vadd.f32 %v4179, 1.0
        %v4196 = vadd.f32 %v4180, 1.0
        %v4197 = vadd.f32 %v4181, 1.0
        %v4198 = vadd.f32 %v4182, 1.0
        %v4199 = vadd.f32 %v4183, 1.0
        %v4200 = vadd.f32 %v4184, 1.0
        %v4201 = vadd.f32 %v4185, 1.0
        %v4202 = vadd.f32 %v4186, 1.0
        %v4203 = vadd.f32 %v4187, 1.0
        %v4204 = vadd.f32 %v4188, 1.0
        %v4205 = vadd.f32 %v4189, 1.0
        %v4206 = vmul.f32 %v4078, %v4190
        %v4207 = vmul.f32 %v4079, %v4191
        %v4208 = vmul.f32 %v4080, %v4192
        %v4209 = vmul.f32 %v4081, %v4193
        %v4210 = vmul.f32 %v4082, %v4194
        %v4211 = vmul.f32 %v4083, %v4195
        %v4212 = vmul.f32 %v4084, %v4196
        %v4213 = vmul.f32 %v4085, %v4197
        %v4214 = vmul.f32 %v4086, %v4198
        %v4215 = vmul.f32 %v4087, %v4199
        %v4216 = vmul.f32 %v4088, %v4200
        %v4217 = vmul.f32 %v4089, %v4201
        %v4218 = vmul.f32 %v4090, %v4202
        %v4219 = vmul.f32 %v4091, %v4203
        %v4220 = vmul.f32 %v4092, %v4204
        %v4221 = vmul.f32 %v4093, %v4205
        %v4222 = vpack.c.bf16 %v4210, %v4206
        %v4223 = vpack.c.bf16 %v4211, %v4207
        %v4224 = vpack.c.bf16 %v4212, %v4208
        %v4225 = vpack.c.bf16 %v4213, %v4209
        %v4226 = vpack.c.bf16 %v4218, %v4214
        %v4227 = vpack.c.bf16 %v4219, %v4215
        %v4228 = vpack.c.bf16 %v4220, %v4216
        %v4229 = vpack.c.bf16 %v4221, %v4217
        %v4230 = vld [vmem:[%s889] sm:$0xf]
        %v4231 = vld [vmem:[%s889 + $0x4] sm:$0xf]
        %v4232 = vld [vmem:[%s889 + $0x8] sm:$0xf]
        %v4233 = vld [vmem:[%s889 + $0xc] sm:$0xf]
        %v4234 = vld [vmem:[%s889 + $0x10] sm:$0xf]
        %v4235 = vld [vmem:[%s889 + $0x14] sm:$0xf]
        %v4236 = vld [vmem:[%s889 + $0x18] sm:$0xf]
        %v4237 = vld [vmem:[%s889 + $0x1c] sm:$0xf]
        %v4238 = vld [vmem:[%s889 + $0x20] sm:$0xf]
        %v4239 = vld [vmem:[%s889 + $0x24] sm:$0xf]
        %v4240 = vld [vmem:[%s889 + $0x28] sm:$0xf]
        %v4241 = vld [vmem:[%s889 + $0x2c] sm:$0xf]
        %v4242 = vld [vmem:[%s889 + $0x30] sm:$0xf]
        %v4243 = vld [vmem:[%s889 + $0x34] sm:$0xf]
        %v4244 = vld [vmem:[%s889 + $0x38] sm:$0xf]
        %v4245 = vld [vmem:[%s889 + $0x3c] sm:$0xf]
        %v4246 = vld [vmem:[%s889 + $0x40] sm:$0xf]
        %v4247 = vld [vmem:[%s889 + $0x44] sm:$0xf]
        %v4248 = vld [vmem:[%s889 + $0x48] sm:$0xf]
        %v4249 = vld [vmem:[%s889 + $0x4c] sm:$0xf]
        %v4250 = vld [vmem:[%s889 + $0x50] sm:$0xf]
        %v4251 = vld [vmem:[%s889 + $0x54] sm:$0xf]
        %v4252 = vld [vmem:[%s889 + $0x58] sm:$0xf]
        %v4253 = vld [vmem:[%s889 + $0x5c] sm:$0xf]
        %v4254 = vld [vmem:[%s889 + $0x60] sm:$0xf]
        %v4255 = vld [vmem:[%s889 + $0x64] sm:$0xf]
        %v4256 = vld [vmem:[%s889 + $0x68] sm:$0xf]
        %v4257 = vld [vmem:[%s889 + $0x6c] sm:$0xf]
        %v4258 = vld [vmem:[%s889 + $0x70] sm:$0xf]
        %v4259 = vld [vmem:[%s889 + $0x74] sm:$0xf]
        %v4260 = vld [vmem:[%s889 + $0x78] sm:$0xf]
        %v4261 = vld [vmem:[%s889 + $0x7c] sm:$0xf]
        %v4262 = vld [vmem:[%s889 + $0x80] sm:$0xf]
        %v4263 = vld [vmem:[%s889 + $0x84] sm:$0xf]
        %v4264 = vld [vmem:[%s889 + $0x88] sm:$0xf]
        %v4265 = vld [vmem:[%s889 + $0x8c] sm:$0xf]
        %v4266 = vld [vmem:[%s889 + $0x90] sm:$0xf]
        %v4267 = vld [vmem:[%s889 + $0x94] sm:$0xf]
        %v4268 = vld [vmem:[%s889 + $0x98] sm:$0xf]
        %v4269 = vld [vmem:[%s889 + $0x9c] sm:$0xf]
        %v4270 = vld [vmem:[%s889 + $0xa0] sm:$0xf]
        %v4271 = vld [vmem:[%s889 + $0xa4] sm:$0xf]
        %v4272 = vld [vmem:[%s889 + $0xa8] sm:$0xf]
        %v4273 = vld [vmem:[%s889 + $0xac] sm:$0xf]
        %v4274 = vld [vmem:[%s889 + $0xb0] sm:$0xf]
        %v4275 = vld [vmem:[%s889 + $0xb4] sm:$0xf]
        %v4276 = vld [vmem:[%s889 + $0xb8] sm:$0xf]
        %v4277 = vld [vmem:[%s889 + $0xbc] sm:$0xf]
        %v4278 = vld [vmem:[%s889 + $0xc0] sm:$0xf]
        %v4279 = vld [vmem:[%s889 + $0xc4] sm:$0xf]
        %v4280 = vld [vmem:[%s889 + $0xc8] sm:$0xf]
        %v4281 = vld [vmem:[%s889 + $0xcc] sm:$0xf]
        %v4282 = vld [vmem:[%s889 + $0xd0] sm:$0xf]
        %v4283 = vld [vmem:[%s889 + $0xd4] sm:$0xf]
        %v4284 = vld [vmem:[%s889 + $0xd8] sm:$0xf]
        %v4285 = vld [vmem:[%s889 + $0xdc] sm:$0xf]
        %v4286 = vld [vmem:[%s889 + $0xe0] sm:$0xf]
        %v4287 = vld [vmem:[%s889 + $0xe4] sm:$0xf]
        %v4288 = vld [vmem:[%s889 + $0xe8] sm:$0xf]
        %v4289 = vld [vmem:[%s889 + $0xec] sm:$0xf]
        %v4290 = vld [vmem:[%s889 + $0xf0] sm:$0xf]
        %v4291 = vld [vmem:[%s889 + $0xf4] sm:$0xf]
        %v4292 = vld [vmem:[%s889 + $0xf8] sm:$0xf]
        %v4293 = vld [vmem:[%s889 + $0xfc] sm:$0xf]
        %v4294 = vld [vmem:[%s898] sm:$0x1]
        %v4296 = vperm.slane %v4294, 0
        %v4362 = vunpack.c.l.b16 %v4230
        %v4363 = vunpack.c.l.b16 %v4231
        %v4364 = vunpack.c.l.b16 %v4232
        %v4365 = vunpack.c.l.b16 %v4233
        %v4366 = vunpack.c.l.b16 %v4234
        %v4367 = vunpack.c.l.b16 %v4235
        %v4368 = vunpack.c.l.b16 %v4236
        %v4369 = vunpack.c.l.b16 %v4237
        %v4370 = vunpack.c.l.b16 %v4238
        %v4371 = vunpack.c.l.b16 %v4239
        %v4372 = vunpack.c.l.b16 %v4240
        %v4373 = vunpack.c.l.b16 %v4241
        %v4374 = vunpack.c.l.b16 %v4242
        %v4375 = vunpack.c.l.b16 %v4243
        %v4376 = vunpack.c.l.b16 %v4244
        %v4377 = vunpack.c.l.b16 %v4245
        %v4378 = vunpack.c.l.b16 %v4246
        %v4379 = vunpack.c.l.b16 %v4247
        %v4380 = vunpack.c.l.b16 %v4248
        %v4381 = vunpack.c.l.b16 %v4249
        %v4382 = vunpack.c.l.b16 %v4250
        %v4383 = vunpack.c.l.b16 %v4251
        %v4384 = vunpack.c.l.b16 %v4252
        %v4385 = vunpack.c.l.b16 %v4253
        %v4386 = vunpack.c.l.b16 %v4254
        %v4387 = vunpack.c.l.b16 %v4255
        %v4388 = vunpack.c.l.b16 %v4256
        %v4389 = vunpack.c.l.b16 %v4257
        %v4390 = vunpack.c.l.b16 %v4258
        %v4391 = vunpack.c.l.b16 %v4259
        %v4392 = vunpack.c.l.b16 %v4260
        %v4393 = vunpack.c.l.b16 %v4261
        %v4394 = vunpack.c.l.b16 %v4262
        %v4395 = vunpack.c.l.b16 %v4263
        %v4396 = vunpack.c.l.b16 %v4264
        %v4397 = vunpack.c.l.b16 %v4265
        %v4398 = vunpack.c.l.b16 %v4266
        %v4399 = vunpack.c.l.b16 %v4267
        %v4400 = vunpack.c.l.b16 %v4268
        %v4401 = vunpack.c.l.b16 %v4269
        %v4402 = vunpack.c.l.b16 %v4270
        %v4403 = vunpack.c.l.b16 %v4271
        %v4404 = vunpack.c.l.b16 %v4272
        %v4405 = vunpack.c.l.b16 %v4273
        %v4406 = vunpack.c.l.b16 %v4274
        %v4407 = vunpack.c.l.b16 %v4275
        %v4408 = vunpack.c.l.b16 %v4276
        %v4409 = vunpack.c.l.b16 %v4277
        %v4410 = vunpack.c.l.b16 %v4278
        %v4411 = vunpack.c.l.b16 %v4279
        %v4412 = vunpack.c.l.b16 %v4280
        %v4413 = vunpack.c.l.b16 %v4281
        %v4414 = vunpack.c.l.b16 %v4282
        %v4415 = vunpack.c.l.b16 %v4283
        %v4416 = vunpack.c.l.b16 %v4284
        %v4417 = vunpack.c.l.b16 %v4285
        %v4418 = vunpack.c.l.b16 %v4286
        %v4419 = vunpack.c.l.b16 %v4287
        %v4420 = vunpack.c.l.b16 %v4288
        %v4421 = vunpack.c.l.b16 %v4289
        %v4422 = vunpack.c.l.b16 %v4290
        %v4423 = vunpack.c.l.b16 %v4291
        %v4424 = vunpack.c.l.b16 %v4292
        %v4425 = vunpack.c.l.b16 %v4293
        %v4426 = vpack.c.b16 %v4363, %v4362
        %v4427 = vpack.c.b16 %v4365, %v4364
        %v4428 = vpack.c.b16 %v4367, %v4366
        %v4429 = vpack.c.b16 %v4369, %v4368
        %v4430 = vpack.c.b16 %v4371, %v4370
        %v4431 = vpack.c.b16 %v4373, %v4372
        %v4432 = vpack.c.b16 %v4375, %v4374
        %v4433 = vpack.c.b16 %v4377, %v4376
        %v4434 = vpack.c.b16 %v4379, %v4378
        %v4435 = vpack.c.b16 %v4381, %v4380
        %v4436 = vpack.c.b16 %v4383, %v4382
        %v4437 = vpack.c.b16 %v4385, %v4384
        %v4438 = vpack.c.b16 %v4387, %v4386
        %v4439 = vpack.c.b16 %v4389, %v4388
        %v4440 = vpack.c.b16 %v4391, %v4390
        %v4441 = vpack.c.b16 %v4393, %v4392
        %v4442 = vpack.c.b16 %v4395, %v4394
        %v4443 = vpack.c.b16 %v4397, %v4396
        %v4444 = vpack.c.b16 %v4399, %v4398
        %v4445 = vpack.c.b16 %v4401, %v4400
        %v4446 = vpack.c.b16 %v4403, %v4402
        %v4447 = vpack.c.b16 %v4405, %v4404
        %v4448 = vpack.c.b16 %v4407, %v4406
        %v4449 = vpack.c.b16 %v4409, %v4408
        %v4450 = vpack.c.b16 %v4411, %v4410
        %v4451 = vpack.c.b16 %v4413, %v4412
        %v4452 = vpack.c.b16 %v4415, %v4414
        %v4453 = vpack.c.b16 %v4417, %v4416
        %v4454 = vpack.c.b16 %v4419, %v4418
        %v4455 = vpack.c.b16 %v4421, %v4420
        %v4456 = vpack.c.b16 %v4423, %v4422
        %v4457 = vpack.c.b16 %v4425, %v4424
        %4490 = vmatpush.bf16.msra.mxu0 %v4433
        %4491 = vmatpush.bf16.msra.mxu0 %v4432
        %4492 = vmatpush.bf16.msra.mxu0 %v4431
        %4493 = vmatpush.bf16.msra.mxu0 %v4430
        %4494 = vmatpush.bf16.msra.mxu0 %v4429
        %4495 = vmatpush.bf16.msra.mxu0 %v4428
        %4496 = vmatpush.bf16.msra.mxu0 %v4427
        %4497 = vmatpush.bf16.msra.mxu0 %v4426
        %4498 = vmatmul.bf16.gmra.mxu0 %v4222
        %v4499 = vpop.f32.mrf.mxu0
        %v4500 = vadd.f32 %v4296, %v4499
        %v4501 = vpop.f32.mrf.mxu0
        %v4502 = vadd.f32 %v4296, %v4501
        %4503 = vmatmul.bf16.gmra.mxu0 %v4226
        %v4504 = vpop.f32.mrf.mxu0
        %v4505 = vadd.f32 %v4296, %v4504
        %v4506 = vpop.f32.mrf.mxu0
        %v4507 = vadd.f32 %v4296, %v4506
        %4508 = vdwg.mxu0
        %4509 = vmatpush.bf16.msra.mxu0 %v4441
        %4510 = vmatpush.bf16.msra.mxu0 %v4440
        %4511 = vmatpush.bf16.msra.mxu0 %v4439
        %4512 = vmatpush.bf16.msra.mxu0 %v4438
        %4513 = vmatpush.bf16.msra.mxu0 %v4437
        %4514 = vmatpush.bf16.msra.mxu0 %v4436
        %4515 = vmatpush.bf16.msra.mxu0 %v4435
        %4516 = vmatpush.bf16.msra.mxu0 %v4434
        %4517 = vmatmul.bf16.gmra.mxu0 %v4223
        %v4518 = vpop.f32.mrf.mxu0
        %v4519 = vadd.f32 %v4500, %v4518
        %v4520 = vpop.f32.mrf.mxu0
        %v4521 = vadd.f32 %v4502, %v4520
        %4522 = vmatmul.bf16.gmra.mxu0 %v4227
        %v4523 = vpop.f32.mrf.mxu0
        %v4524 = vadd.f32 %v4505, %v4523
        %v4525 = vpop.f32.mrf.mxu0
        %v4526 = vadd.f32 %v4507, %v4525
        %4527 = vdwg.mxu0
        %4528 = vmatpush.bf16.msra.mxu0 %v4449
        %4529 = vmatpush.bf16.msra.mxu0 %v4448
        %4530 = vmatpush.bf16.msra.mxu0 %v4447
        %4531 = vmatpush.bf16.msra.mxu0 %v4446
        %4532 = vmatpush.bf16.msra.mxu0 %v4445
        %4533 = vmatpush.bf16.msra.mxu0 %v4444
        %4534 = vmatpush.bf16.msra.mxu0 %v4443
        %4535 = vmatpush.bf16.msra.mxu0 %v4442
        %4536 = vmatmul.bf16.gmra.mxu0 %v4224
        %v4537 = vpop.f32.mrf.mxu0
        %v4538 = vadd.f32 %v4519, %v4537
        %v4539 = vpop.f32.mrf.mxu0
        %v4540 = vadd.f32 %v4521, %v4539
        %4541 = vmatmul.bf16.gmra.mxu0 %v4228
        %v4542 = vpop.f32.mrf.mxu0
        %v4543 = vadd.f32 %v4524, %v4542
        %v4544 = vpop.f32.mrf.mxu0
        %v4545 = vadd.f32 %v4526, %v4544
        %4546 = vdwg.mxu0
        %4547 = vmatpush.bf16.msra.mxu0 %v4457
        %4548 = vmatpush.bf16.msra.mxu0 %v4456
        %4549 = vmatpush.bf16.msra.mxu0 %v4455
        %4550 = vmatpush.bf16.msra.mxu0 %v4454
        %4551 = vmatpush.bf16.msra.mxu0 %v4453
        %4552 = vmatpush.bf16.msra.mxu0 %v4452
        %4553 = vmatpush.bf16.msra.mxu0 %v4451
        %4554 = vmatpush.bf16.msra.mxu0 %v4450
        %4555 = vmatmul.bf16.gmra.mxu0 %v4225
        %v4556 = vpop.f32.mrf.mxu0
        %v4557 = vadd.f32 %v4538, %v4556
        %v4558 = vpop.f32.mrf.mxu0
        %v4559 = vadd.f32 %v4540, %v4558
        %4560 = vmatmul.bf16.gmra.mxu0 %v4229
        %v4561 = vpop.f32.mrf.mxu0
        %v4562 = vadd.f32 %v4543, %v4561
        %v4563 = vpop.f32.mrf.mxu0
        %v4564 = vadd.f32 %v4545, %v4563
        %4565 = vdwg.mxu0
        %v4566 = vadd.f32 %v3794, %v4557
        %v4567 = vadd.f32 %v3795, %v4559
        %v4568 = vadd.f32 %v3796, %v4562
        %v4569 = vadd.f32 %v3797, %v4564
        %v4570 = vld [vmem:[%s907] sm:$0x1]
        %v4571 = vld [vmem:[%s916] sm:$0x1]
        %4572 = vadd.xlane.f32.xlu0 %v4566
        %v4573 = vpop.xlane.xlu0 %4572
        %4574 = vadd.xlane.f32.xlu0 %v4567
        %v4575 = vpop.xlane.xlu0 %4574
        %4576 = vadd.xlane.f32.xlu0 %v4568
        %v4577 = vpop.xlane.xlu0 %4576
        %4578 = vadd.xlane.f32.xlu0 %v4569
        %v4579 = vpop.xlane.xlu0 %4578
        %v4580 = vmul.f32 %v4573, %v3699
        %v4581 = vmul.f32 %v4575, %v3699
        %v4582 = vmul.f32 %v4577, %v3699
        %v4583 = vmul.f32 %v4579, %v3699
        %v4584 = vmul.f32 %v4566, %v4566
        %v4585 = vmul.f32 %v4567, %v4567
        %v4586 = vmul.f32 %v4568, %v4568
        %v4587 = vmul.f32 %v4569, %v4569
        %4588 = vadd.xlane.f32.xlu0 %v4584
        %v4589 = vpop.xlane.xlu0 %4588
        %4590 = vadd.xlane.f32.xlu0 %v4585
        %v4591 = vpop.xlane.xlu0 %4590
        %4592 = vadd.xlane.f32.xlu0 %v4586
        %v4593 = vpop.xlane.xlu0 %4592
        %4594 = vadd.xlane.f32.xlu0 %v4587
        %v4595 = vpop.xlane.xlu0 %4594
        %v4596 = vmul.f32 %v4589, %v3699
        %v4597 = vmul.f32 %v4591, %v3699
        %v4598 = vmul.f32 %v4593, %v3699
        %v4599 = vmul.f32 %v4595, %v3699
        %v4600 = vmul.f32 %v4580, %v4580
        %v4601 = vmul.f32 %v4581, %v4581
        %v4602 = vmul.f32 %v4582, %v4582
        %v4603 = vmul.f32 %v4583, %v4583
        %v4604 = vsub.f32 %v4596, %v4600
        %v4605 = vsub.f32 %v4597, %v4601
        %v4606 = vsub.f32 %v4598, %v4602
        %v4607 = vsub.f32 %v4599, %v4603
        %v4608 = vmax.f32 %v4604, 0.0
        %v4609 = vmax.f32 %v4605, 0.0
        %v4610 = vmax.f32 %v4606, 0.0
        %v4611 = vmax.f32 %v4607, 0.0
        %v4612 = vsub.f32 %v4566, %v4580
        %v4613 = vsub.f32 %v4567, %v4581
        %v4614 = vsub.f32 %v4568, %v4582
        %v4615 = vsub.f32 %v4569, %v4583
        %v4616 = vadd.f32 %v4608, 1e-12
        %v4617 = vadd.f32 %v4609, 1e-12
        %v4618 = vadd.f32 %v4610, 1e-12
        %v4619 = vadd.f32 %v4611, 1e-12
        %v4620 = vrsqrt.pop %v4616
        %v4621 = vmul.f32 %v4620, %v4616
        %v4622 = vmul.f32 %v4621, %v4620
        %v4623 = vmul.f32 0.5, %v4622
        %v4624 = vsub.f32 1.5, %v4623
        %v4625 = vmul.f32 %v4620, %v4624
        %vm4626 = vweird.f32 %v4616
        %vm4627 = vweird.f32 %v4620
        %vm4628 = vmor %vm4626, %vm4627
        %v4629 = vsel %vm4628, %v4620, %v4625
        %v4630 = vrsqrt.pop %v4617
        %v4631 = vmul.f32 %v4630, %v4617
        %v4632 = vmul.f32 %v4631, %v4630
        %v4633 = vmul.f32 0.5, %v4632
        %v4634 = vsub.f32 1.5, %v4633
        %v4635 = vmul.f32 %v4630, %v4634
        %vm4636 = vweird.f32 %v4617
        %vm4637 = vweird.f32 %v4630
        %vm4638 = vmor %vm4636, %vm4637
        %v4639 = vsel %vm4638, %v4630, %v4635
        %v4640 = vrsqrt.pop %v4618
        %v4641 = vmul.f32 %v4640, %v4618
        %v4642 = vmul.f32 %v4641, %v4640
        %v4643 = vmul.f32 0.5, %v4642
        %v4644 = vsub.f32 1.5, %v4643
        %v4645 = vmul.f32 %v4640, %v4644
        %vm4646 = vweird.f32 %v4618
        %vm4647 = vweird.f32 %v4640
        %vm4648 = vmor %vm4646, %vm4647
        %v4649 = vsel %vm4648, %v4640, %v4645
        %v4650 = vrsqrt.pop %v4619
        %v4651 = vmul.f32 %v4650, %v4619
        %v4652 = vmul.f32 %v4651, %v4650
        %v4653 = vmul.f32 0.5, %v4652
        %v4654 = vsub.f32 1.5, %v4653
        %v4655 = vmul.f32 %v4650, %v4654
        %vm4656 = vweird.f32 %v4619
        %vm4657 = vweird.f32 %v4650
        %vm4658 = vmor %vm4656, %vm4657
        %v4659 = vsel %vm4658, %v4650, %v4655
        %v4660 = vmul.f32 %v4612, %v4629
        %v4661 = vmul.f32 %v4613, %v4639
        %v4662 = vmul.f32 %v4614, %v4649
        %v4663 = vmul.f32 %v4615, %v4659
        %v4665 = vperm.slane %v4570, 0
        %v4667 = vmul.f32 %v4660, %v4665
        %v4668 = vmul.f32 %v4661, %v4665
        %v4669 = vmul.f32 %v4662, %v4665
        %v4670 = vmul.f32 %v4663, %v4665
        %v4672 = vperm.slane %v4571, 0
        %v4674 = vadd.f32 %v4667, %v4672
        %v4675 = vadd.f32 %v4668, %v4672
        %v4676 = vadd.f32 %v4669, %v4672
        %v4677 = vadd.f32 %v4670, %v4672
        %4678 = vst [vmem:[#allocation2] sm:$0xff] %v4674
        %4679 = vst [vmem:[#allocation2 + $0x8] sm:$0xff] %v4675
        %4680 = vst [vmem:[#allocation2 + $0x10] sm:$0xff] %v4676
        %4681 = vst [vmem:[#allocation2 + $0x18] sm:$0xff] %v4677
        %p4682 = scmp.eq.s32.totalorder %s33, 1
        // Predicated region
        $region161: #{tpu_custom_call.1} parent=91 // pred_check
          %p4683 = pneg %p4682
        $region162: #{tpu_custom_call.1} parent=91 // pred_check_branch
          %4685 = sbr.rel (%p4683) target = $region164
        $region163: #{tpu_custom_call.1} parent=91 // pred_region
          %s4686 = scalar_lea.vmem [#allocation2], 15
          %v4687 = vld [vmem:[%s4686] ss:$16 sm:$0x3]
          %v4688 = vpack.c.bf16 %v4687, %v4687
          %v4689 = vld [vmem:[#allocation22] sm:$0xff]
          %v4690 = vld [vmem:[#allocation22 + $0x8] sm:$0xff]
          %v4691 = vld [vmem:[#allocation22 + $0x10] sm:$0xff]
          %v4692 = vld [vmem:[#allocation22 + $0x18] sm:$0xff]
          %v4693 = vld [vmem:[#allocation22 + $0x20] sm:$0xff]
          %v4694 = vld [vmem:[#allocation22 + $0x28] sm:$0xff]
          %v4695 = vld [vmem:[#allocation22 + $0x30] sm:$0xff]
          %v4696 = vld [vmem:[#allocation22 + $0x38] sm:$0xff]
          %v4697 = vld [vmem:[#allocation22 + $0x40] sm:$0xff]
          %v4698 = vld [vmem:[#allocation22 + $0x48] sm:$0xff]
          %v4699 = vld [vmem:[#allocation22 + $0x50] sm:$0xff]
          %v4700 = vld [vmem:[#allocation22 + $0x58] sm:$0xff]
          %v4701 = vld [vmem:[#allocation22 + $0x60] sm:$0xff]
          %v4702 = vld [vmem:[#allocation22 + $0x68] sm:$0xff]
          %v4703 = vld [vmem:[#allocation22 + $0x70] sm:$0xff]
          %v4704 = vld [vmem:[#allocation22 + $0x78] sm:$0xff]
          %v4705 = vld [vmem:[#allocation22 + $0x80] sm:$0xff]
          %v4706 = vld [vmem:[#allocation22 + $0x88] sm:$0xff]
          %v4707 = vld [vmem:[#allocation22 + $0x90] sm:$0xff]
          %v4708 = vld [vmem:[#allocation22 + $0x98] sm:$0xff]
          %v4709 = vld [vmem:[#allocation22 + $0xa0] sm:$0xff]
          %v4710 = vld [vmem:[#allocation22 + $0xa8] sm:$0xff]
          %v4711 = vld [vmem:[#allocation22 + $0xb0] sm:$0xff]
          %v4712 = vld [vmem:[#allocation22 + $0xb8] sm:$0xff]
          %v4713 = vld [vmem:[#allocation22 + $0xc0] sm:$0xff]
          %v4714 = vld [vmem:[#allocation22 + $0xc8] sm:$0xff]
          %v4715 = vld [vmem:[#allocation22 + $0xd0] sm:$0xff]
          %v4716 = vld [vmem:[#allocation22 + $0xd8] sm:$0xff]
          %v4717 = vld [vmem:[#allocation22 + $0xe0] sm:$0xff]
          %v4718 = vld [vmem:[#allocation22 + $0xe8] sm:$0xff]
          %v4719 = vld [vmem:[#allocation22 + $0xf0] sm:$0xff]
          %v4720 = vld [vmem:[#allocation22 + $0xf8] sm:$0xff]
          %v4721 = vld [vmem:[#allocation22 + $0x100] sm:$0xff]
          %v4722 = vld [vmem:[#allocation22 + $0x108] sm:$0xff]
          %v4723 = vld [vmem:[#allocation22 + $0x110] sm:$0xff]
          %v4724 = vld [vmem:[#allocation22 + $0x118] sm:$0xff]
          %v4725 = vld [vmem:[#allocation22 + $0x120] sm:$0xff]
          %v4726 = vld [vmem:[#allocation22 + $0x128] sm:$0xff]
          %v4727 = vld [vmem:[#allocation22 + $0x130] sm:$0xff]
          %v4728 = vld [vmem:[#allocation22 + $0x138] sm:$0xff]
          %v4729 = vld [vmem:[#allocation22 + $0x140] sm:$0xff]
          %v4730 = vld [vmem:[#allocation22 + $0x148] sm:$0xff]
          %v4731 = vld [vmem:[#allocation22 + $0x150] sm:$0xff]
          %v4732 = vld [vmem:[#allocation22 + $0x158] sm:$0xff]
          %v4733 = vld [vmem:[#allocation22 + $0x160] sm:$0xff]
          %v4734 = vld [vmem:[#allocation22 + $0x168] sm:$0xff]
          %v4735 = vld [vmem:[#allocation22 + $0x170] sm:$0xff]
          %v4736 = vld [vmem:[#allocation22 + $0x178] sm:$0xff]
          %v4737 = vld [vmem:[#allocation22 + $0x180] sm:$0xff]
          %v4738 = vld [vmem:[#allocation22 + $0x188] sm:$0xff]
          %v4739 = vld [vmem:[#allocation22 + $0x190] sm:$0xff]
          %v4740 = vld [vmem:[#allocation22 + $0x198] sm:$0xff]
          %v4741 = vld [vmem:[#allocation22 + $0x1a0] sm:$0xff]
          %v4742 = vld [vmem:[#allocation22 + $0x1a8] sm:$0xff]
          %v4743 = vld [vmem:[#allocation22 + $0x1b0] sm:$0xff]
          %v4744 = vld [vmem:[#allocation22 + $0x1b8] sm:$0xff]
          %v4745 = vld [vmem:[#allocation22 + $0x1c0] sm:$0xff]
          %v4746 = vld [vmem:[#allocation22 + $0x1c8] sm:$0xff]
          %v4747 = vld [vmem:[#allocation22 + $0x1d0] sm:$0xff]
          %v4748 = vld [vmem:[#allocation22 + $0x1d8] sm:$0xff]
          %v4749 = vld [vmem:[#allocation22 + $0x1e0] sm:$0xff]
          %v4750 = vld [vmem:[#allocation22 + $0x1e8] sm:$0xff]
          %v4751 = vld [vmem:[#allocation22 + $0x1f0] sm:$0xff]
          %v4752 = vld [vmem:[#allocation22 + $0x1f8] sm:$0xff]
          %v4753 = vld [vmem:[%s17] sm:$0xff]
          %v4755 = vperm.slane %v4753, 0
          %v4756 = vperm.slane %v4753, 1
          %v4757 = vperm.slane %v4753, 2
          %v4758 = vperm.slane %v4753, 3
          %v4759 = vperm.slane %v4753, 4
          %v4760 = vperm.slane %v4753, 5
          %v4761 = vperm.slane %v4753, 6
          %v4762 = vperm.slane %v4753, 7
          %v4835 = vunpack.c.l.b16 %v4689
          %v4836 = vunpack.c.h.b16 %v4689
          %v4837 = vunpack.c.l.b16 %v4690
          %v4838 = vunpack.c.h.b16 %v4690
          %v4839 = vunpack.c.l.b16 %v4691
          %v4840 = vunpack.c.h.b16 %v4691
          %v4841 = vunpack.c.l.b16 %v4692
          %v4842 = vunpack.c.h.b16 %v4692
          %v4843 = vunpack.c.l.b16 %v4693
          %v4844 = vunpack.c.h.b16 %v4693
          %v4845 = vunpack.c.l.b16 %v4694
          %v4846 = vunpack.c.h.b16 %v4694
          %v4847 = vunpack.c.l.b16 %v4695
          %v4848 = vunpack.c.h.b16 %v4695
          %v4849 = vunpack.c.l.b16 %v4696
          %v4850 = vunpack.c.h.b16 %v4696
          %v4851 = vunpack.c.l.b16 %v4697
          %v4852 = vunpack.c.h.b16 %v4697
          %v4853 = vunpack.c.l.b16 %v4698
          %v4854 = vunpack.c.h.b16 %v4698
          %v4855 = vunpack.c.l.b16 %v4699
          %v4856 = vunpack.c.h.b16 %v4699
          %v4857 = vunpack.c.l.b16 %v4700
          %v4858 = vunpack.c.h.b16 %v4700
          %v4859 = vunpack.c.l.b16 %v4701
          %v4860 = vunpack.c.h.b16 %v4701
          %v4861 = vunpack.c.l.b16 %v4702
          %v4862 = vunpack.c.h.b16 %v4702
          %v4863 = vunpack.c.l.b16 %v4703
          %v4864 = vunpack.c.h.b16 %v4703
          %v4865 = vunpack.c.l.b16 %v4704
          %v4866 = vunpack.c.h.b16 %v4704
          %v4867 = vunpack.c.l.b16 %v4705
          %v4868 = vunpack.c.h.b16 %v4705
          %v4869 = vunpack.c.l.b16 %v4706
          %v4870 = vunpack.c.h.b16 %v4706
          %v4871 = vunpack.c.l.b16 %v4707
          %v4872 = vunpack.c.h.b16 %v4707
          %v4873 = vunpack.c.l.b16 %v4708
          %v4874 = vunpack.c.h.b16 %v4708
          %v4875 = vunpack.c.l.b16 %v4709
          %v4876 = vunpack.c.h.b16 %v4709
          %v4877 = vunpack.c.l.b16 %v4710
          %v4878 = vunpack.c.h.b16 %v4710
          %v4879 = vunpack.c.l.b16 %v4711
          %v4880 = vunpack.c.h.b16 %v4711
          %v4881 = vunpack.c.l.b16 %v4712
          %v4882 = vunpack.c.h.b16 %v4712
          %v4883 = vunpack.c.l.b16 %v4713
          %v4884 = vunpack.c.h.b16 %v4713
          %v4885 = vunpack.c.l.b16 %v4714
          %v4886 = vunpack.c.h.b16 %v4714
          %v4887 = vunpack.c.l.b16 %v4715
          %v4888 = vunpack.c.h.b16 %v4715
          %v4889 = vunpack.c.l.b16 %v4716
          %v4890 = vunpack.c.h.b16 %v4716
          %v4891 = vunpack.c.l.b16 %v4717
          %v4892 = vunpack.c.h.b16 %v4717
          %v4893 = vunpack.c.l.b16 %v4718
          %v4894 = vunpack.c.h.b16 %v4718
          %v4895 = vunpack.c.l.b16 %v4719
          %v4896 = vunpack.c.h.b16 %v4719
          %v4897 = vunpack.c.l.b16 %v4720
          %v4898 = vunpack.c.h.b16 %v4720
          %v4899 = vunpack.c.l.b16 %v4721
          %v4900 = vunpack.c.h.b16 %v4721
          %v4901 = vunpack.c.l.b16 %v4722
          %v4902 = vunpack.c.h.b16 %v4722
          %v4903 = vunpack.c.l.b16 %v4723
          %v4904 = vunpack.c.h.b16 %v4723
          %v4905 = vunpack.c.l.b16 %v4724
          %v4906 = vunpack.c.h.b16 %v4724
          %v4907 = vunpack.c.l.b16 %v4725
          %v4908 = vunpack.c.h.b16 %v4725
          %v4909 = vunpack.c.l.b16 %v4726
          %v4910 = vunpack.c.h.b16 %v4726
          %v4911 = vunpack.c.l.b16 %v4727
          %v4912 = vunpack.c.h.b16 %v4727
          %v4913 = vunpack.c.l.b16 %v4728
          %v4914 = vunpack.c.h.b16 %v4728
          %v4915 = vunpack.c.l.b16 %v4729
          %v4916 = vunpack.c.h.b16 %v4729
          %v4917 = vunpack.c.l.b16 %v4730
          %v4918 = vunpack.c.h.b16 %v4730
          %v4919 = vunpack.c.l.b16 %v4731
          %v4920 = vunpack.c.h.b16 %v4731
          %v4921 = vunpack.c.l.b16 %v4732
          %v4922 = vunpack.c.h.b16 %v4732
          %v4923 = vunpack.c.l.b16 %v4733
          %v4924 = vunpack.c.h.b16 %v4733
          %v4925 = vunpack.c.l.b16 %v4734
          %v4926 = vunpack.c.h.b16 %v4734
          %v4927 = vunpack.c.l.b16 %v4735
          %v4928 = vunpack.c.h.b16 %v4735
          %v4929 = vunpack.c.l.b16 %v4736
          %v4930 = vunpack.c.h.b16 %v4736
          %v4931 = vunpack.c.l.b16 %v4737
          %v4932 = vunpack.c.h.b16 %v4737
          %v4933 = vunpack.c.l.b16 %v4738
          %v4934 = vunpack.c.h.b16 %v4738
          %v4935 = vunpack.c.l.b16 %v4739
          %v4936 = vunpack.c.h.b16 %v4739
          %v4937 = vunpack.c.l.b16 %v4740
          %v4938 = vunpack.c.h.b16 %v4740
          %v4939 = vunpack.c.l.b16 %v4741
          %v4940 = vunpack.c.h.b16 %v4741
          %v4941 = vunpack.c.l.b16 %v4742
          %v4942 = vunpack.c.h.b16 %v4742
          %v4943 = vunpack.c.l.b16 %v4743
          %v4944 = vunpack.c.h.b16 %v4743
          %v4945 = vunpack.c.l.b16 %v4744
          %v4946 = vunpack.c.h.b16 %v4744
          %v4947 = vunpack.c.l.b16 %v4745
          %v4948 = vunpack.c.h.b16 %v4745
          %v4949 = vunpack.c.l.b16 %v4746
          %v4950 = vunpack.c.h.b16 %v4746
          %v4951 = vunpack.c.l.b16 %v4747
          %v4952 = vunpack.c.h.b16 %v4747
          %v4953 = vunpack.c.l.b16 %v4748
          %v4954 = vunpack.c.h.b16 %v4748
          %v4955 = vunpack.c.l.b16 %v4749
          %v4956 = vunpack.c.h.b16 %v4749
          %v4957 = vunpack.c.l.b16 %v4750
          %v4958 = vunpack.c.h.b16 %v4750
          %v4959 = vunpack.c.l.b16 %v4751
          %v4960 = vunpack.c.h.b16 %v4751
          %v4961 = vunpack.c.l.b16 %v4752
          %v4962 = vunpack.c.h.b16 %v4752
          %v4963 = vpack.c.b16 %v4843, %v4835
          %v4964 = vpack.c.b16 %v4844, %v4836
          %v4965 = vpack.c.b16 %v4845, %v4837
          %v4966 = vpack.c.b16 %v4846, %v4838
          %v4967 = vpack.c.b16 %v4847, %v4839
          %v4968 = vpack.c.b16 %v4848, %v4840
          %v4969 = vpack.c.b16 %v4849, %v4841
          %v4970 = vpack.c.b16 %v4850, %v4842
          %v4971 = vpack.c.b16 %v4859, %v4851
          %v4972 = vpack.c.b16 %v4860, %v4852
          %v4973 = vpack.c.b16 %v4861, %v4853
          %v4974 = vpack.c.b16 %v4862, %v4854
          %v4975 = vpack.c.b16 %v4863, %v4855
          %v4976 = vpack.c.b16 %v4864, %v4856
          %v4977 = vpack.c.b16 %v4865, %v4857
          %v4978 = vpack.c.b16 %v4866, %v4858
          %v4979 = vpack.c.b16 %v4875, %v4867
          %v4980 = vpack.c.b16 %v4876, %v4868
          %v4981 = vpack.c.b16 %v4877, %v4869
          %v4982 = vpack.c.b16 %v4878, %v4870
          %v4983 = vpack.c.b16 %v4879, %v4871
          %v4984 = vpack.c.b16 %v4880, %v4872
          %v4985 = vpack.c.b16 %v4881, %v4873
          %v4986 = vpack.c.b16 %v4882, %v4874
          %v4987 = vpack.c.b16 %v4891, %v4883
          %v4988 = vpack.c.b16 %v4892, %v4884
          %v4989 = vpack.c.b16 %v4893, %v4885
          %v4990 = vpack.c.b16 %v4894, %v4886
          %v4991 = vpack.c.b16 %v4895, %v4887
          %v4992 = vpack.c.b16 %v4896, %v4888
          %v4993 = vpack.c.b16 %v4897, %v4889
          %v4994 = vpack.c.b16 %v4898, %v4890
          %v4995 = vpack.c.b16 %v4907, %v4899
          %v4996 = vpack.c.b16 %v4908, %v4900
          %v4997 = vpack.c.b16 %v4909, %v4901
          %v4998 = vpack.c.b16 %v4910, %v4902
          %v4999 = vpack.c.b16 %v4911, %v4903
          %v5000 = vpack.c.b16 %v4912, %v4904
          %v5001 = vpack.c.b16 %v4913, %v4905
          %v5002 = vpack.c.b16 %v4914, %v4906
          %v5003 = vpack.c.b16 %v4923, %v4915
          %v5004 = vpack.c.b16 %v4924, %v4916
          %v5005 = vpack.c.b16 %v4925, %v4917
          %v5006 = vpack.c.b16 %v4926, %v4918
          %v5007 = vpack.c.b16 %v4927, %v4919
          %v5008 = vpack.c.b16 %v4928, %v4920
          %v5009 = vpack.c.b16 %v4929, %v4921
          %v5010 = vpack.c.b16 %v4930, %v4922
          %v5011 = vpack.c.b16 %v4939, %v4931
          %v5012 = vpack.c.b16 %v4940, %v4932
          %v5013 = vpack.c.b16 %v4941, %v4933
          %v5014 = vpack.c.b16 %v4942, %v4934
          %v5015 = vpack.c.b16 %v4943, %v4935
          %v5016 = vpack.c.b16 %v4944, %v4936
          %v5017 = vpack.c.b16 %v4945, %v4937
          %v5018 = vpack.c.b16 %v4946, %v4938
          %v5019 = vpack.c.b16 %v4955, %v4947
          %v5020 = vpack.c.b16 %v4956, %v4948
          %v5021 = vpack.c.b16 %v4957, %v4949
          %v5022 = vpack.c.b16 %v4958, %v4950
          %v5023 = vpack.c.b16 %v4959, %v4951
          %v5024 = vpack.c.b16 %v4960, %v4952
          %v5025 = vpack.c.b16 %v4961, %v4953
          %v5026 = vpack.c.b16 %v4962, %v4954
          %5091 = vmatpush.bf16.msra.mxu0 %v5019
          %5092 = vmatpush.bf16.msra.mxu0 %v5011
          %5093 = vmatpush.bf16.msra.mxu0 %v5003
          %5094 = vmatpush.bf16.msra.mxu0 %v4995
          %5095 = vmatpush.bf16.msra.mxu0 %v4987
          %5096 = vmatpush.bf16.msra.mxu0 %v4979
          %5097 = vmatpush.bf16.msra.mxu0 %v4971
          %5098 = vmatpush.bf16.msra.mxu0 %v4963
          %5099 = vmatmul.bf16.gmra.mxu0 %v4688
          %v5100 = vpop.f32.mrf.mxu0
          %v5101 = vadd.f32 %v4755, %v5100
          %v5102 = vpop.f32.mrf.mxu0
          %5103 = vdwg.mxu0
          %5104 = vmatpush.bf16.msra.mxu0 %v5020
          %5105 = vmatpush.bf16.msra.mxu0 %v5012
          %5106 = vmatpush.bf16.msra.mxu0 %v5004
          %5107 = vmatpush.bf16.msra.mxu0 %v4996
          %5108 = vmatpush.bf16.msra.mxu0 %v4988
          %5109 = vmatpush.bf16.msra.mxu0 %v4980
          %5110 = vmatpush.bf16.msra.mxu0 %v4972
          %5111 = vmatpush.bf16.msra.mxu0 %v4964
          %5112 = vmatmul.bf16.gmra.mxu0 %v4688
          %v5113 = vpop.f32.mrf.mxu0
          %v5114 = vadd.f32 %v4756, %v5113
          %v5115 = vpop.f32.mrf.mxu0
          %5116 = vdwg.mxu0
          %5117 = vmatpush.bf16.msra.mxu0 %v5021
          %5118 = vmatpush.bf16.msra.mxu0 %v5013
          %5119 = vmatpush.bf16.msra.mxu0 %v5005
          %5120 = vmatpush.bf16.msra.mxu0 %v4997
          %5121 = vmatpush.bf16.msra.mxu0 %v4989
          %5122 = vmatpush.bf16.msra.mxu0 %v4981
          %5123 = vmatpush.bf16.msra.mxu0 %v4973
          %5124 = vmatpush.bf16.msra.mxu0 %v4965
          %5125 = vmatmul.bf16.gmra.mxu0 %v4688
          %v5126 = vpop.f32.mrf.mxu0
          %v5127 = vadd.f32 %v4757, %v5126
          %v5128 = vpop.f32.mrf.mxu0
          %5129 = vdwg.mxu0
          %5130 = vmatpush.bf16.msra.mxu0 %v5022
          %5131 = vmatpush.bf16.msra.mxu0 %v5014
          %5132 = vmatpush.bf16.msra.mxu0 %v5006
          %5133 = vmatpush.bf16.msra.mxu0 %v4998
          %5134 = vmatpush.bf16.msra.mxu0 %v4990
          %5135 = vmatpush.bf16.msra.mxu0 %v4982
          %5136 = vmatpush.bf16.msra.mxu0 %v4974
          %5137 = vmatpush.bf16.msra.mxu0 %v4966
          %5138 = vmatmul.bf16.gmra.mxu0 %v4688
          %v5139 = vpop.f32.mrf.mxu0
          %v5140 = vadd.f32 %v4758, %v5139
          %v5141 = vpop.f32.mrf.mxu0
          %5142 = vdwg.mxu0
          %5143 = vmatpush.bf16.msra.mxu0 %v5023
          %5144 = vmatpush.bf16.msra.mxu0 %v5015
          %5145 = vmatpush.bf16.msra.mxu0 %v5007
          %5146 = vmatpush.bf16.msra.mxu0 %v4999
          %5147 = vmatpush.bf16.msra.mxu0 %v4991
          %5148 = vmatpush.bf16.msra.mxu0 %v4983
          %5149 = vmatpush.bf16.msra.mxu0 %v4975
          %5150 = vmatpush.bf16.msra.mxu0 %v4967
          %5151 = vmatmul.bf16.gmra.mxu0 %v4688
          %v5152 = vpop.f32.mrf.mxu0
          %v5153 = vadd.f32 %v4759, %v5152
          %v5154 = vpop.f32.mrf.mxu0
          %5155 = vdwg.mxu0
          %5156 = vmatpush.bf16.msra.mxu0 %v5024
          %5157 = vmatpush.bf16.msra.mxu0 %v5016
          %5158 = vmatpush.bf16.msra.mxu0 %v5008
          %5159 = vmatpush.bf16.msra.mxu0 %v5000
          %5160 = vmatpush.bf16.msra.mxu0 %v4992
          %5161 = vmatpush.bf16.msra.mxu0 %v4984
          %5162 = vmatpush.bf16.msra.mxu0 %v4976
          %5163 = vmatpush.bf16.msra.mxu0 %v4968
          %5164 = vmatmul.bf16.gmra.mxu0 %v4688
          %v5165 = vpop.f32.mrf.mxu0
          %v5166 = vadd.f32 %v4760, %v5165
          %v5167 = vpop.f32.mrf.mxu0
          %5168 = vdwg.mxu0
          %5169 = vmatpush.bf16.msra.mxu0 %v5025
          %5170 = vmatpush.bf16.msra.mxu0 %v5017
          %5171 = vmatpush.bf16.msra.mxu0 %v5009
          %5172 = vmatpush.bf16.msra.mxu0 %v5001
          %5173 = vmatpush.bf16.msra.mxu0 %v4993
          %5174 = vmatpush.bf16.msra.mxu0 %v4985
          %5175 = vmatpush.bf16.msra.mxu0 %v4977
          %5176 = vmatpush.bf16.msra.mxu0 %v4969
          %5177 = vmatmul.bf16.gmra.mxu0 %v4688
          %v5178 = vpop.f32.mrf.mxu0
          %v5179 = vadd.f32 %v4761, %v5178
          %v5180 = vpop.f32.mrf.mxu0
          %5181 = vdwg.mxu0
          %5182 = vmatpush.bf16.msra.mxu0 %v5026
          %5183 = vmatpush.bf16.msra.mxu0 %v5018
          %5184 = vmatpush.bf16.msra.mxu0 %v5010
          %5185 = vmatpush.bf16.msra.mxu0 %v5002
          %5186 = vmatpush.bf16.msra.mxu0 %v4994
          %5187 = vmatpush.bf16.msra.mxu0 %v4986
          %5188 = vmatpush.bf16.msra.mxu0 %v4978
          %5189 = vmatpush.bf16.msra.mxu0 %v4970
          %5190 = vmatmul.bf16.gmra.mxu0 %v4688
          %v5191 = vpop.f32.mrf.mxu0
          %v5192 = vadd.f32 %v4762, %v5191
          %v5193 = vpop.f32.mrf.mxu0
          %5194 = vdwg.mxu0
          %v5203 = vrot.slane %v5114, 6
          %v5204 = vrot.slane %v5127, 4
          %v5205 = vrot.slane %v5140, 2
          %v5206 = vrot.slane %v5166, 6
          %v5207 = vrot.slane %v5179, 4
          %v5208 = vrot.slane %v5192, 2
          %vm5209 = vcmask 1041408
          %v5210 = vsel %vm5209, %v5101, %v5203
          %vm5211 = vcmask 1045508
          %v5212 = vsel %vm5211, %v5204, %v5205
          %vm5213 = vcmask 1043456
          %v5214 = vsel %vm5213, %v5210, %v5212
          %v5215 = vsel %vm5209, %v5153, %v5206
          %v5216 = vsel %vm5211, %v5207, %v5208
          %v5217 = vsel %vm5213, %v5215, %v5216
          %5220 = vst [vmem:[#allocation23] sm:$0xff] %v5214
          %5221 = vst [vmem:[#allocation23 + $0x8] sm:$0xff] %v5217
        $region164: #{tpu_custom_call.1} parent=91 // pred_fallthru
          _
        // Predicated region
        $region165: #{tpu_custom_call.1} parent=91 // pred_check
          %p5222 = pneg %p484
        $region166: #{tpu_custom_call.1} parent=91 // pred_check_branch
          %5224 = sbr.rel (%p5222) target = $region168
        $region167: #{tpu_custom_call.1} parent=91 // pred_region
          %5226 = vsyncadd [#allocation5], 0
          %s5228 = sshll.u32 [#allocation23], 4
          %s5229 = int_to_ptr.vmem [resolvable:$true] %s5228
          %s5230 = sshll.u32 %s18, 4
          %s5231 = int_to_ptr.hbm [resolvable:$true] %s5230
          %5233 = dma.vmem_to_hbm [thread:$0]  %s5229, 256, %s5231, [#allocation5]
        $region168: #{tpu_custom_call.1} parent=91 // pred_fallthru
          _
        // Predicated region
        $region169: #{tpu_custom_call.1} parent=91 // pred_check
          %p5234 = pneg %p484
        $region170: #{tpu_custom_call.1} parent=91 // pred_check_branch
          %5236 = sbr.rel (%p5234) target = $region172
        $region171: #{tpu_custom_call.1} parent=91 // pred_region
          %5238 = dma.done [#allocation5], 256
        $region172: #{tpu_custom_call.1} parent=91 // pred_fallthru
          _
      $region92: #{tpu_custom_call.1} parent=5 // pred_fallthru
        _
      %p5239 = scmp.le.s32.totalorder 2, %s28
      // Predicated region
      $region173: #{tpu_custom_call.1} parent=5 // pred_check
        %p5240 = pneg %p5239
      $region174: #{tpu_custom_call.1} parent=5 // pred_check_branch
        %5242 = sbr.rel (%p5240) target = $region176
      $region175: #{tpu_custom_call.1} parent=5 // pred_region
        %s5243 = ssub.s32 %s28, 2
      $region176: #{tpu_custom_call.1} parent=5 // pred_fallthru
        _
    $region6: #{tpu_custom_call.1} parent=1 // loop_footer
      %s32 = sadd.s32 1, %s28
    $region7: #{tpu_custom_call.1} parent=1 // loop_footer_branch
      %27 = sbr.rel target = $region3
    $region8: #{tpu_custom_call.1} parent=1 // loop_exit
      _
    %5244 = vsyncpa [#allocation4], 1
    %s5245 = scalar_lea.sflag [#allocation4], 1
    %5246 = vsyncpa %s5245, 1
    %5247 = vsyncpa [#allocation7], 1
    %5248 = vsyncpa [#allocation10], 1
    %5249 = vsyncpa [#allocation5], 1
    %s5250 = scalar_lea.sflag [#allocation5], 1
    %5251 = vsyncpa %s5250, 1

</llo_original>
